<compile_context>
chip_gen: v5e
topology: v5e:2x2
jax: 0.10.0
libtpu: 0.0.40
codegen_flags: <defaults>
</compile_context>

<pallas_src>
import math
import numpy as np
import jax
import jax.numpy as jnp
from jax import lax
from jax.experimental import pallas as pl
from jax.experimental.pallas import tpu as pltpu

LN2 = math.log(2.0)


# ----------------------------------------------------------------------------
# small helpers (shared by the kernel and the pure-JAX reference)
# ----------------------------------------------------------------------------
def _round_up(x, m):
    return (x + m - 1) // m * m


def _ssp(x):
    """shifted softplus: max(x,0) + log1p(exp(-|x|)) - log(2)  (single exp)."""
    return jnp.maximum(x, 0.0) + jnp.log1p(jnp.exp(-jnp.abs(x))) - LN2


def gaussian_rbf(d, n_rbf, cutoff):
    delta = cutoff / (n_rbf - 1)
    offsets = jnp.arange(n_rbf, dtype=jnp.float32) * delta
    coeff = -0.5 / (delta * delta)
    diff = d[:, None] - offsets[None, :]
    return jnp.exp(coeff * diff * diff)


def cosine_cutoff(d, cutoff):
    c = 0.5 * (jnp.cos(d * (math.pi / cutoff)) + 1.0)
    return c * (d < cutoff).astype(jnp.float32)


def _choose_tp(p, n_pad):
    """Pair-tile size: big enough to amortise the ~0.35us/grid-step overhead,
    small enough that the two [TP, n_pad] bf16 one-hot temporaries (plus the
    double-buffered pair blocks) stay well inside v7x's 64 MiB VMEM (v5e/v6e
    have 128 MiB, i.e. ~2x the headroom)."""
    tp = 512 if p > 1024 else 128
    onehot_budget = 8 * 1024 * 1024          # bytes for the two bf16 one-hots
    while tp > 128 and 2 * tp * n_pad * 2 > onehot_budget:
        tp //= 2
    return tp


# ----------------------------------------------------------------------------
# fused Pallas kernel: all interaction layers + combine + output MLP + pooling
# ----------------------------------------------------------------------------
def _build_kernel(*, tp, n_pad, coeff):

    def kernel(pairf_ref, idxj_ref, idxi_ref, fconst_ref, mconst_ref,
               mmat_ref, x0_ref,
               w_in2f_ref, wf1_ref, bf1_ref, wf2_ref, bf2_ref,
               wo1_ref, bo1_ref, wo2_ref, bo2_ref, wcx_ref, wc_ref, bc_ref,
               w1_ref, b1_ref, w2_ref, b2_ref,
               out_ref, x_sc, xf_sc, agg_sc):
        li = pl.program_id(0)            # interaction layer
        kp = pl.program_id(1)            # pair tile (reduction axis)
        n_layers = pl.num_programs(0)
        kp_tiles = pl.num_programs(1)

        # ---- one-time init of the carried atom features -------------------
        @pl.when((li == 0) & (kp == 0))
        def _():
            x_sc[...] = x0_ref[...]

        # ---- per-layer prologue: in2f (both paths), reset accumulator -----
        @pl.when(kp == 0)
        def _():
            xf = jnp.dot(x_sc[...], w_in2f_ref[0],
                         preferred_element_type=jnp.float32)       # [N, 2F]
            xf_sc[...] = xf.astype(jnp.bfloat16)
            agg_sc[...] = jnp.zeros_like(agg_sc)

        # ---- per pair-tile continuous-filter convolution (both paths) ------
        pf = pairf_ref[...]                                  # [TP, 8] packed
        d_s, d_b = pf[:, 0:1], pf[:, 1:2]
        rc_s, rc_b = pf[:, 2:3], pf[:, 3:4]

        off2 = fconst_ref[0:1, :]        # [1, 2R] rbf offsets (tiled x2)
        dsel = fconst_ref[1:2, :]        # 1.0 on step lanes (< R)
        dselc = fconst_ref[2:3, :]       # 1.0 on bond-order lanes
        d2 = d_s * dsel + d_b * dselc                        # [TP, 2R]
        diff = d2 - off2
        f2 = jnp.exp(coeff * diff * diff)                    # Gaussian RBF

        # fused filter layer-1 (block-diagonal weight), layer-2, cutoff scale
        h = _ssp(jnp.dot(f2, wf1_ref[0], preferred_element_type=jnp.float32)
                 + bf1_ref[0])                               # [TP, 2F]
        wij = jnp.dot(h, wf2_ref[0], preferred_element_type=jnp.float32) + bf2_ref[0]
        fsel = mconst_ref[0:1, :]        # 1.0 on step lanes (< F)
        fselc = mconst_ref[1:2, :]
        wij = wij * (rc_s * fsel + rc_b * fselc)

        # gather x[idx_j]: in-register bf16 one-hot, MXU matmul (exact for 0/1)
        lane_n = lax.broadcasted_iota(jnp.int32, (tp, n_pad), 1)
        gj = (idxj_ref[...] == lane_n).astype(jnp.bfloat16)          # [TP, N]
        x_j = jnp.dot(gj, xf_sc[...], preferred_element_type=jnp.float32)
        x_ij = (x_j * wij).astype(jnp.bfloat16)

        # scatter-add over idx_i: transposed bf16 one-hot, f32 accumulation
        row_n = lax.broadcasted_iota(jnp.int32, (n_pad, tp), 0)
        gi_t = (row_n == idxi_ref[...]).astype(jnp.bfloat16)         # [N, TP]
        agg_sc[...] += jnp.dot(gi_t, x_ij, preferred_element_type=jnp.float32)

        # ---- per-layer epilogue: f2out (both paths) + combine Dense+ReLU ---
        @pl.when(kp == kp_tiles - 1)
        def _():
            h2 = _ssp(jnp.dot(agg_sc[...], wo1_ref[0],
                              preferred_element_type=jnp.float32) + bo1_ref[0])
            v = jnp.dot(h2, wo2_ref[0],
                        preferred_element_type=jnp.float32) + bo2_ref[0]    # [N, 2A]
            # relu(cat([x,x]) + cat([v,v_bo])) @ Wc == relu(x@(Wc_top+Wc_bot) + v@Wc)
            x_new = jnp.maximum(
                jnp.dot(x_sc[...], wcx_ref[0], preferred_element_type=jnp.float32)
                + jnp.dot(v, wc_ref[0], preferred_element_type=jnp.float32)
                + bc_ref[0], 0.0)
            x_sc[...] = x_new

            # ---- network epilogue: SubAtomwise MLP + per-molecule sum ------
            @pl.when(li == n_layers - 1)
            def _():
                hh = _ssp(jnp.dot(x_new, w1_ref[...],
                                  preferred_element_type=jnp.float32) + b1_ref[...])
                y_atom = jnp.dot(hh, w2_ref[...],
                                 preferred_element_type=jnp.float32) + b2_ref[...]
                out_ref[...] = jnp.dot(mmat_ref[...], y_atom,
                                       preferred_element_type=jnp.float32)

    return kernel


def subschnet_core_pallas(x0, bond_steps, bond_orders, idx_i, idx_j, idx_m,
                          packed, outnet, *, n_molecules, n_rbf, cutoff, tp=None):
    n, a = x0.shape
    l = packed["W_IN2F"].shape[0]
    two_f = packed["W_IN2F"].shape[2]
    f = two_f // 2
    two_r = packed["WF1"].shape[1]
    r = two_r // 2
    two_a = 2 * a
    w1, b1 = outnet["w1"], outnet["b1"]
    w2, b2 = outnet["w2"], outnet["b2"]
    hdim = w1.shape[1]
    n_out = w2.shape[1]
    bmol = n_molecules

    n_pad = _round_up(n, 16)    # multiple of 16 -> bf16 sublane-pack aligned
    p = idx_i.shape[0]
    if tp is None:
        tp = _choose_tp(p, n_pad)
    p_pad = _round_up(p, tp)
    kp_tiles = p_pad // tp

    delta = cutoff / (r - 1)
    coeff = -0.5 / (delta * delta)

    # ---- pair-side operands: O(P) bytes, only 3 pipelined streams ----------
    pairf = jnp.zeros((p_pad, 8), jnp.float32)
    pairf = pairf.at[:p, 0].set(bond_steps.astype(jnp.float32))
    pairf = pairf.at[:p, 1].set(bond_orders.astype(jnp.float32))
    pairf = pairf.at[:p, 2].set(cosine_cutoff(bond_steps, cutoff))
    pairf = pairf.at[:p, 3].set(cosine_cutoff(bond_orders, cutoff))

    def pad1(v, total, val):
        return jnp.pad(v, (0, total - v.shape[0]), constant_values=val)

    # sentinel n_pad never matches lanes 0..n_pad-1 -> padded pairs are inert
    idxj = pad1(idx_j.astype(jnp.int32), p_pad, n_pad).reshape(p_pad, 1)
    idxi = pad1(idx_i.astype(jnp.int32), p_pad, n_pad).reshape(1, p_pad)

    # ---- loop-invariant row constants (hoisted out of the kernel body) -----
    off2 = jnp.tile(jnp.arange(r, dtype=jnp.float32) * delta, 2)          # [2R]
    dsel = (jnp.arange(two_r) < r).astype(jnp.float32)
    fconst = jnp.stack([off2, dsel, 1.0 - dsel], axis=0)                  # [3, 2R]
    fsel = (jnp.arange(two_f) < f).astype(jnp.float32)
    mconst = jnp.stack([fsel, 1.0 - fsel], axis=0)                        # [2, 2F]

    x0p = jnp.pad(x0.astype(jnp.float32), ((0, n_pad - n), (0, 0)))
    mmat = (jnp.arange(bmol, dtype=jnp.int32)[:, None]
            == idx_m[None, :].astype(jnp.int32)).astype(jnp.float32)      # [B, N]
    mmat = jnp.pad(mmat, ((0, 0), (0, n_pad - n)))

    operands = (pairf, idxj, idxi, fconst, mconst, mmat, x0p,
                packed["W_IN2F"], packed["WF1"], packed["BF1"],
                packed["WF2"], packed["BF2"], packed["WO1"], packed["BO1"],
                packed["WO2"], packed["BO2"], packed["WCX"], packed["WC"],
                packed["BC"], w1, b1, w2, b2)

    def const_spec(shape):
        return pl.BlockSpec(shape, lambda li, kp: (0,) * len(shape))

    def layer_spec(rows, cols):
        return pl.BlockSpec((1, rows, cols), lambda li, kp: (li, 0, 0))

    in_specs = [
        pl.BlockSpec((tp, 8), lambda li, kp: (kp, 0)),   # packed pair scalars
        pl.BlockSpec((tp, 1), lambda li, kp: (kp, 0)),   # idx_j column
        pl.BlockSpec((1, tp), lambda li, kp: (0, kp)),   # idx_i row
        const_spec((3, two_r)), const_spec((2, two_f)),  # hoisted constants
        const_spec((bmol, n_pad)),                       # molecule pooling matrix
        const_spec((n_pad, a)),                          # initial atom features
        layer_spec(a, two_f),                            # W_IN2F
        layer_spec(two_r, two_f), layer_spec(1, two_f),  # WF1 (fused blockdiag), BF1
        layer_spec(two_f, two_f), layer_spec(1, two_f),  # WF2, BF2
        layer_spec(two_f, two_a), layer_spec(1, two_a),  # WO1, BO1
        layer_spec(two_a, two_a), layer_spec(1, two_a),  # WO2, BO2
        layer_spec(a, a), layer_spec(two_a, a), layer_spec(1, a),   # WCX, WC, BC
        const_spec((a, hdim)), const_spec((1, hdim)),               # outnet dense1
        const_spec((hdim, n_out)), const_spec((1, n_out)),          # outnet dense2
    ]
    out_spec = pl.BlockSpec((bmol, n_out), lambda li, kp: (0, 0))

    kernel = _build_kernel(tp=tp, n_pad=n_pad, coeff=coeff)

    bytes_accessed = int(sum(int(np.prod(o.shape)) * o.dtype.itemsize for o in operands)
                         + bmol * n_out * 4)
    flops = int(2 * l * p_pad * (two_r * two_f + two_f * two_f + 2 * n_pad * two_f)
                + 2 * l * n_pad * (a * two_f + two_f * two_a + two_a * two_a
                                   + a * a + two_a * a)
                + 2 * n_pad * (a * hdim + hdim * n_out) + 2 * bmol * n_pad * n_out)
    transcendentals = int(l * p_pad * (two_r + two_f) + l * n_pad * two_a + n_pad * hdim)

    return pl.pallas_call(
        kernel,
        out_shape=jax.ShapeDtypeStruct((bmol, n_out), jnp.float32),
        grid_spec=pltpu.PrefetchScalarGridSpec(
            num_scalar_prefetch=0,
            grid=(l, kp_tiles),
            in_specs=in_specs,
            out_specs=out_spec,
            scratch_shapes=[pltpu.VMEM((n_pad, a), jnp.float32),       # carried x
                            pltpu.VMEM((n_pad, two_f), jnp.bfloat16),  # in2f output
                            pltpu.VMEM((n_pad, two_f), jnp.float32)]), # scatter acc
        compiler_params=pltpu.CompilerParams(
            dimension_semantics=("arbitrary", "arbitrary"),
            # 32 MiB fits every generation at these sizes; for large N/P
            # re-budget per generation (v7x: 64 MiB physical, v5e/v6e: 128 MiB).
            vmem_limit_bytes=32 * 1024 * 1024),
        cost_estimate=pl.CostEstimate(flops=flops,
                                      transcendentals=transcendentals,
                                      bytes_accessed=bytes_accessed),
    )(*operands)


# ----------------------------------------------------------------------------
# parameter construction + packing for the fused kernel
# ----------------------------------------------------------------------------
def make_params(key, n_atom_basis, n_filters, n_rbf, n_out, n_interactions, max_z):
    keys = list(jax.random.split(key, 256))
    it = iter(keys)

    def dense(fi, fo, bias=True):
        w = jax.random.normal(next(it), (fi, fo), jnp.float32) / math.sqrt(fi)
        b = (jax.random.normal(next(it), (1, fo), jnp.float32) * 0.05) if bias else None
        return w, b

    def interaction_block():
        w_in2f, _ = dense(n_atom_basis, n_filters, bias=False)
        wf1, bf1 = dense(n_rbf, n_filters)
        wf2, bf2 = dense(n_filters, n_filters)
        wo1, bo1 = dense(n_filters, n_atom_basis)
        wo2, bo2 = dense(n_atom_basis, n_atom_basis)
        return dict(w_in2f=w_in2f, wf1=wf1, bf1=bf1, wf2=wf2, bf2=bf2,
                    wo1=wo1, bo1=bo1, wo2=wo2, bo2=bo2)

    binding = jax.random.normal(next(it), (2, n_atom_basis), jnp.float32) * 0.1
    binding = binding.at[0].set(0.0)   # padding_idx=0

    return dict(
        embedding=jax.random.normal(next(it), (max_z, n_atom_basis), jnp.float32) * 0.1,
        binding_embed=binding,
        interactions=[interaction_block() for _ in range(n_interactions)],
        interactions_bo=[interaction_block() for _ in range(n_interactions)],
        interactions_out=[dense(2 * n_atom_basis, n_atom_basis)
                          for _ in range(n_interactions)],
        outnet1=dense(n_atom_basis, n_atom_basis // 2),
        outnet2=dense(n_atom_basis // 2, n_out),
    )


def pack_params(params):
    """Pack step/bond-order paths along the feature axis (lane-dense, 2F/2A wide);
    the filter layer-1 weights of both paths are fused block-diagonally ([2R,2F])
    so the kernel issues one matmul instead of two on the per-pair hot path."""
    a = params["embedding"].shape[1]
    l = len(params["interactions"])

    def blockdiag(m1, m2):
        z12 = jnp.zeros((m1.shape[0], m2.shape[1]), jnp.float32)
        z21 = jnp.zeros((m2.shape[0], m1.shape[1]), jnp.float32)
        return jnp.concatenate(
            [jnp.concatenate([m1, z12], axis=1),
             jnp.concatenate([z21, m2], axis=1)], axis=0)

    keys = ["W_IN2F", "WF1", "BF1", "WF2", "BF2",
            "WO1", "BO1", "WO2", "BO2", "WCX", "WC", "BC"]
    acc = {k: [] for k in keys}
    for li in range(l):
        ps = params["interactions"][li]
        pb = params["interactions_bo"][li]
        wc, bc = params["interactions_out"][li]
        acc["W_IN2F"].append(jnp.concatenate([ps["w_in2f"], pb["w_in2f"]], axis=1))
        acc["WF1"].append(blockdiag(ps["wf1"], pb["wf1"]))        # [2R, 2F]
        acc["BF1"].append(jnp.concatenate([ps["bf1"], pb["bf1"]], axis=1))
        acc["WF2"].append(blockdiag(ps["wf2"], pb["wf2"]))
        acc["BF2"].append(jnp.concatenate([ps["bf2"], pb["bf2"]], axis=1))
        acc["WO1"].append(blockdiag(ps["wo1"], pb["wo1"]))
        acc["BO1"].append(jnp.concatenate([ps["bo1"], pb["bo1"]], axis=1))
        acc["WO2"].append(blockdiag(ps["wo2"], pb["wo2"]))
        acc["BO2"].append(jnp.concatenate([ps["bo2"], pb["bo2"]], axis=1))
        acc["WCX"].append(wc[:a] + wc[a:])      # cat([x,x]) folded: Wc_top + Wc_bot
        acc["WC"].append(wc)
        acc["BC"].append(bc)
    return {k: jnp.stack(v, axis=0) for k, v in acc.items()}


# ----------------------------------------------------------------------------
# pure-JAX reference (precision-matched: same bf16 rounding points as the kernel)
# ----------------------------------------------------------------------------
def interaction_ref(x, f, rcut, idx_i, idx_j, p):
    xf = (x @ p["w_in2f"]).astype(jnp.bfloat16).astype(jnp.float32)
    h = _ssp(f @ p["wf1"] + p["bf1"])
    wij = (h @ p["wf2"] + p["bf2"]) * rcut
    x_j = xf[idx_j]
    x_ij = (x_j * wij).astype(jnp.bfloat16).astype(jnp.float32)
    agg = jax.ops.segment_sum(x_ij, idx_i, num_segments=x.shape[0])
    h2 = _ssp(agg @ p["wo1"] + p["bo1"])
    return h2 @ p["wo2"] + p["bo2"]


# ----------------------------------------------------------------------------
# full SubSchNet_bs forward (use_pallas toggles kernel vs. pure-JAX reference)
# ----------------------------------------------------------------------------
def subschnet_bs_forward(params, inputs, batch_size, *, n_rbf, cutoff, use_pallas=True):
    Z = inputs["Z"]
    bond_steps = inputs["bond_step"]
    bond_orders = inputs["bond_order"]
    ligand_bonds = inputs["LB"]            # host numpy, static
    binding_sides = inputs["LMBP"]
    idx_i = inputs["idx_i"]
    idx_j = inputs["idx_j"]
    idx_m = inputs["idx_m"]
    n_atoms = inputs["n_atoms"]

    B = n_atoms.shape[0]
    n_out = params["outnet2"][0].shape[1]

    # TODO(synk): external `ran` / `embedding` modules are modelled as identity /
    # plain table lookup (use_ran=False path); SubAtomwise assumed to be
    # Dense(A, A//2, ssp) -> Dense(A//2, n_out) with 'sum' aggregation.
    x0 = params["embedding"][Z] + params["binding_embed"][binding_sides]

    if use_pallas:
        packed = pack_params(params)
        outnet = dict(w1=params["outnet1"][0], b1=params["outnet1"][1],
                      w2=params["outnet2"][0], b2=params["outnet2"][1])
        y = subschnet_core_pallas(x0, bond_steps, bond_orders, idx_i, idx_j, idx_m,
                                  packed, outnet, n_molecules=B,
                                  n_rbf=n_rbf, cutoff=cutoff)
    else:
        f_ij = gaussian_rbf(bond_steps, n_rbf, cutoff)
        f_bo_ij = gaussian_rbf(bond_orders, n_rbf, cutoff)
        rcut_step = cosine_cutoff(bond_steps, cutoff)[:, None]
        rcut_bo = cosine_cutoff(bond_orders, cutoff)[:, None]
        x = x0
        for li in range(len(params["interactions"])):
            p_s = params["interactions"][li]
            p_b = params["interactions_bo"][li]
            wc, bc = params["interactions_out"][li]
            v = interaction_ref(x, f_ij, rcut_step, idx_i, idx_j, p_s)
            v_bo = interaction_ref(x, f_bo_ij, rcut_bo, idx_i, idx_j, p_b)
            xcat = jnp.concatenate([x, x], axis=1) + jnp.concatenate([v, v_bo], axis=1)
            x = jax.nn.relu(xcat @ wc + bc)
        w1, b1 = params["outnet1"]
        w2, b2 = params["outnet2"]
        h = _ssp(x @ w1 + b1)
        y = jax.ops.segment_sum(h @ w2 + b2, idx_m, num_segments=B)

    # x[x == 0] = 1e-8
    y = jnp.where(y == 0.0, jnp.float32(1e-8), y)

    # ligand-bond expansion:  tmp[i, m] = y[m] if ligand_bonds[m] >= i else 0
    max_lb = int(np.max(ligand_bonds)) + 1
    lb = jnp.asarray(ligand_bonds)
    mask = jnp.arange(max_lb)[:, None] <= lb[None, :]       # [max_lb, B]
    out = jnp.where(mask[:, :, None], y[None, :, :], 0.0)   # [max_lb, B, n_out]
    if B != batch_size:
        pad = jnp.zeros((max_lb, batch_size - B, n_out), out.dtype)
        out = jnp.concatenate([out, pad], axis=1)
    return out


# ----------------------------------------------------------------------------
# main
# ----------------------------------------------------------------------------
if __name__ == "__main__":
    # small synthetic problem
    n_atom_basis = 32
    n_filters = 32
    n_rbf = 16
    n_out = 8
    n_interactions = 2
    max_z = 100
    cutoff = 5.0

    B = 3                      # molecules
    atoms_per_mol = 8
    N = B * atoms_per_mol      # 24 atoms total
    batch_size = 4             # > B to exercise the padding branch

    key = jax.random.PRNGKey(0)
    kp_, kz, kb, ks, ko = jax.random.split(key, 5)

    params = make_params(kp_, n_atom_basis, n_filters, n_rbf, n_out,
                         n_interactions, max_z)

    # fully-connected (i != j) neighbor lists per molecule
    ii, jj = [], []
    for m in range(B):
        off = m * atoms_per_mol
        for i in range(atoms_per_mol):
            for j in range(atoms_per_mol):
                if i != j:
                    ii.append(off + i)
                    jj.append(off + j)
    idx_i = jnp.asarray(ii, dtype=jnp.int32)
    idx_j = jnp.asarray(jj, dtype=jnp.int32)
    P = idx_i.shape[0]         # 168 pairs

    inputs = dict(
        Z=jax.random.randint(kz, (N,), 1, max_z, dtype=jnp.int32),
        LMBP=jax.random.randint(kb, (N,), 0, 2, dtype=jnp.int32),
        bond_step=jax.random.uniform(ks, (P,), jnp.float32, 0.8, 4.5),
        bond_order=jax.random.uniform(ko, (P,), jnp.float32, 0.5, 3.0),
        idx_i=idx_i,
        idx_j=idx_j,
        idx_m=jnp.repeat(jnp.arange(B, dtype=jnp.int32), atoms_per_mol),
        n_atoms=jnp.full((B,), atoms_per_mol, dtype=jnp.int32),
        LB=np.array([1, 0, 2], dtype=np.int32),   # ligand_bonds (static/host)
    )

    out = subschnet_bs_forward(params, inputs, batch_size,
                               n_rbf=n_rbf, cutoff=cutoff, use_pallas=True)
    out = jax.block_until_ready(out)

    ref = subschnet_bs_forward(params, inputs, batch_size,
                               n_rbf=n_rbf, cutoff=cutoff, use_pallas=False)
    ref = jax.block_until_ready(ref)

    assert out.shape == (int(np.max(inputs["LB"])) + 1, batch_size, n_out), out.shape
    np.testing.assert_allclose(np.asarray(out), np.asarray(ref),
                               rtol=1e-2, atol=1e-3)
    print("KERNEL_OK")
</pallas_src>

<mosaic_0001>
module attributes {stable_mosaic.version = 11 : i64} {
  func.func @kernel(%arg0: i32, %arg1: i32, %arg2: memref<128x8xf32, #tpu.memory_space<vmem>>, %arg3: memref<128x1xi32, #tpu.memory_space<vmem>>, %arg4: memref<1x128xi32, #tpu.memory_space<vmem>>, %arg5: memref<3x32xf32, #tpu.memory_space<vmem>>, %arg6: memref<2x64xf32, #tpu.memory_space<vmem>>, %arg7: memref<3x32xf32, #tpu.memory_space<vmem>>, %arg8: memref<32x32xf32, #tpu.memory_space<vmem>>, %arg9: memref<1x32x64xf32, #tpu.memory_space<vmem>>, %arg10: memref<1x32x64xf32, #tpu.memory_space<vmem>>, %arg11: memref<1x1x64xf32, #tpu.memory_space<vmem>>, %arg12: memref<1x64x64xf32, #tpu.memory_space<vmem>>, %arg13: memref<1x1x64xf32, #tpu.memory_space<vmem>>, %arg14: memref<1x64x64xf32, #tpu.memory_space<vmem>>, %arg15: memref<1x1x64xf32, #tpu.memory_space<vmem>>, %arg16: memref<1x64x64xf32, #tpu.memory_space<vmem>>, %arg17: memref<1x1x64xf32, #tpu.memory_space<vmem>>, %arg18: memref<1x32x32xf32, #tpu.memory_space<vmem>>, %arg19: memref<1x64x32xf32, #tpu.memory_space<vmem>>, %arg20: memref<1x1x32xf32, #tpu.memory_space<vmem>>, %arg21: memref<32x16xf32, #tpu.memory_space<vmem>>, %arg22: memref<1x16xf32, #tpu.memory_space<vmem>>, %arg23: memref<16x8xf32, #tpu.memory_space<vmem>>, %arg24: memref<1x8xf32, #tpu.memory_space<vmem>>, %arg25: memref<3x8xf32, #tpu.memory_space<vmem>>, %arg26: memref<32x32xf32, #tpu.memory_space<vmem>>, %arg27: memref<32x64xbf16, #tpu.memory_space<vmem>>, %arg28: memref<32x64xf32, #tpu.memory_space<vmem>>) attributes {dimension_semantics = [#tpu.dimension_semantics<arbitrary>, #tpu.dimension_semantics<arbitrary>], iteration_bounds = array<i64: 2, 2>, scalar_prefetch = 0 : i64, scratch_operands = 3 : i64, tpu.core_type = #tpu.core_type<tc>, window_params = [{transform_indices = @transform_0, window_bounds = array<i64: 128, 8>}, {transform_indices = @transform_1, window_bounds = array<i64: 128, 1>}, {transform_indices = @transform_2, window_bounds = array<i64: 1, 128>}, {pipeline_mode = #tpu.pipeline_mode<synchronous>, transform_indices = @transform_3, window_bounds = array<i64: 3, 32>}, {pipeline_mode = #tpu.pipeline_mode<synchronous>, transform_indices = @transform_4, window_bounds = array<i64: 2, 64>}, {pipeline_mode = #tpu.pipeline_mode<synchronous>, transform_indices = @transform_5, window_bounds = array<i64: 3, 32>}, {pipeline_mode = #tpu.pipeline_mode<synchronous>, transform_indices = @transform_6, window_bounds = array<i64: 32, 32>}, {transform_indices = @transform_7, window_bounds = array<i64: 1, 32, 64>}, {transform_indices = @transform_8, window_bounds = array<i64: 1, 32, 64>}, {transform_indices = @transform_9, window_bounds = array<i64: 1, 1, 64>}, {transform_indices = @transform_10, window_bounds = array<i64: 1, 64, 64>}, {transform_indices = @transform_11, window_bounds = array<i64: 1, 1, 64>}, {transform_indices = @transform_12, window_bounds = array<i64: 1, 64, 64>}, {transform_indices = @transform_13, window_bounds = array<i64: 1, 1, 64>}, {transform_indices = @transform_14, window_bounds = array<i64: 1, 64, 64>}, {transform_indices = @transform_15, window_bounds = array<i64: 1, 1, 64>}, {transform_indices = @transform_16, window_bounds = array<i64: 1, 32, 32>}, {transform_indices = @transform_17, window_bounds = array<i64: 1, 64, 32>}, {transform_indices = @transform_18, window_bounds = array<i64: 1, 1, 32>}, {pipeline_mode = #tpu.pipeline_mode<synchronous>, transform_indices = @transform_19, window_bounds = array<i64: 32, 16>}, {pipeline_mode = #tpu.pipeline_mode<synchronous>, transform_indices = @transform_20, window_bounds = array<i64: 1, 16>}, {pipeline_mode = #tpu.pipeline_mode<synchronous>, transform_indices = @transform_21, window_bounds = array<i64: 16, 8>}, {pipeline_mode = #tpu.pipeline_mode<synchronous>, transform_indices = @transform_22, window_bounds = array<i64: 1, 8>}, {pipeline_mode = #tpu.pipeline_mode<synchronous>, transform_indices = @transform_23, window_bounds = array<i64: 3, 8>}]} {
    %c0_i32 = arith.constant 0 : i32
    %0 = arith.cmpi eq, %arg0, %c0_i32 : i32
    %c0_i32_0 = arith.constant 0 : i32
    %1 = arith.cmpi eq, %arg1, %c0_i32_0 : i32
    %2 = arith.andi %0, %1 : i1
    %3 = arith.extui %2 : i1 to i32
    %c0_i32_1 = arith.constant 0 : i32
    %4 = arith.cmpi ne, %3, %c0_i32_1 : i32
    scf.if %4 {
      %c0_43 = arith.constant 0 : index
      %c0_44 = arith.constant 0 : index
      %88 = vector.load %arg8[%c0_43, %c0_44] : memref<32x32xf32, #tpu.memory_space<vmem>>, vector<32x32xf32>
      %c0_45 = arith.constant 0 : index
      %c0_46 = arith.constant 0 : index
      %89 = vector.load %arg26[%c0_45, %c0_46] : memref<32x32xf32, #tpu.memory_space<vmem>>, vector<32x32xf32>
      tpu.vector_store %arg26[%c0_45, %c0_46], %88 {strides = array<i32>} : memref<32x32xf32, #tpu.memory_space<vmem>>, vector<32x32xf32>,
    } else {
    }
    %c0_i32_2 = arith.constant 0 : i32
    %5 = arith.cmpi eq, %arg1, %c0_i32_2 : i32
    %6 = arith.extui %5 : i1 to i32
    %c0_i32_3 = arith.constant 0 : i32
    %7 = arith.cmpi ne, %6, %c0_i32_3 : i32
    scf.if %7 {
      %c0_43 = arith.constant 0 : index
      %c0_44 = arith.constant 0 : index
      %88 = vector.load %arg26[%c0_43, %c0_44] : memref<32x32xf32, #tpu.memory_space<vmem>>, vector<32x32xf32>
      %c0_45 = arith.constant 0 : index
      %c0_46 = arith.constant 0 : index
      %c0_47 = arith.constant 0 : index
      %89 = vector.load %arg9[%c0_45, %c0_46, %c0_47] : memref<1x32x64xf32, #tpu.memory_space<vmem>>, vector<1x32x64xf32>
      %90 = vector.shape_cast %89 : vector<1x32x64xf32> to vector<32x64xf32>
      %cst_48 = arith.constant dense<0.000000e+00> : vector<32x64xf32>
      %91 = tpu.matmul %88, %90, %cst_48 {dimension_numbers = #tpu.dot_dimension_numbers<[1], [0], [0], [1], [0, 0, 1, 1], [], []>} : vector<32x32xf32>, vector<32x64xf32>, vector<32x64xf32> -> vector<32x64xf32>
      %92 = arith.truncf %91 : vector<32x64xf32> to vector<32x64xbf16>
      %c0_49 = arith.constant 0 : index
      %c0_50 = arith.constant 0 : index
      %93 = vector.load %arg27[%c0_49, %c0_50] : memref<32x64xbf16, #tpu.memory_space<vmem>>, vector<32x64xbf16>
      tpu.vector_store %arg27[%c0_49, %c0_50], %92 {strides = array<i32>} : memref<32x64xbf16, #tpu.memory_space<vmem>>, vector<32x64xbf16>,
      %cst_51 = arith.constant 0.000000e+00 : f32
      %94 = vector.broadcast %cst_51 : f32 to vector<32x64xf32>
      %c0_52 = arith.constant 0 : index
      %c0_53 = arith.constant 0 : index
      %95 = vector.load %arg28[%c0_52, %c0_53] : memref<32x64xf32, #tpu.memory_space<vmem>>, vector<32x64xf32>
      tpu.vector_store %arg28[%c0_52, %c0_53], %94 {strides = array<i32>} : memref<32x64xf32, #tpu.memory_space<vmem>>, vector<32x64xf32>,
    } else {
    }
    %c0 = arith.constant 0 : index
    %c0_4 = arith.constant 0 : index
    %8 = vector.load %arg2[%c0, %c0_4] : memref<128x8xf32, #tpu.memory_space<vmem>>, vector<128x8xf32>
    %9 = vector.extract_strided_slice %8 {offsets = [0, 0], sizes = [128, 1], strides = [1, 1]} : vector<128x8xf32> to vector<128x1xf32>
    %10 = vector.extract_strided_slice %8 {offsets = [0, 1], sizes = [128, 1], strides = [1, 1]} : vector<128x8xf32> to vector<128x1xf32>
    %11 = vector.extract_strided_slice %8 {offsets = [0, 2], sizes = [128, 1], strides = [1, 1]} : vector<128x8xf32> to vector<128x1xf32>
    %12 = vector.extract_strided_slice %8 {offsets = [0, 3], sizes = [128, 1], strides = [1, 1]} : vector<128x8xf32> to vector<128x1xf32>
    %c0_5 = arith.constant 0 : index
    %c0_6 = arith.constant 0 : index
    %13 = vector.load %arg5[%c0_5, %c0_6] : memref<3x32xf32, #tpu.memory_space<vmem>>, vector<1x32xf32>
    %c1 = arith.constant 1 : index
    %c0_7 = arith.constant 0 : index
    %14 = vector.load %arg5[%c1, %c0_7] : memref<3x32xf32, #tpu.memory_space<vmem>>, vector<1x32xf32>
    %c2 = arith.constant 2 : index
    %c0_8 = arith.constant 0 : index
    %15 = vector.load %arg5[%c2, %c0_8] : memref<3x32xf32, #tpu.memory_space<vmem>>, vector<1x32xf32>
    %16 = vector.broadcast %9 : vector<128x1xf32> to vector<128x32xf32>
    %17 = vector.broadcast %14 : vector<1x32xf32> to vector<128x32xf32>
    %18 = arith.mulf %16, %17 : vector<128x32xf32>
    %19 = vector.broadcast %10 : vector<128x1xf32> to vector<128x32xf32>
    %20 = vector.broadcast %15 : vector<1x32xf32> to vector<128x32xf32>
    %21 = arith.mulf %19, %20 : vector<128x32xf32>
    %22 = arith.addf %18, %21 : vector<128x32xf32>
    %23 = vector.broadcast %13 : vector<1x32xf32> to vector<128x32xf32>
    %24 = arith.subf %22, %23 : vector<128x32xf32>
    %cst = arith.constant -4.500000e+00 : f32
    %25 = vector.broadcast %cst : f32 to vector<128x32xf32>
    %26 = arith.mulf %25, %24 : vector<128x32xf32>
    %27 = arith.mulf %26, %24 : vector<128x32xf32>
    %28 = math.exp %27 : vector<128x32xf32>
    %c0_9 = arith.constant 0 : index
    %c0_10 = arith.constant 0 : index
    %c0_11 = arith.constant 0 : index
    %29 = vector.load %arg10[%c0_9, %c0_10, %c0_11] : memref<1x32x64xf32, #tpu.memory_space<vmem>>, vector<1x32x64xf32>
    %30 = vector.shape_cast %29 : vector<1x32x64xf32> to vector<32x64xf32>
    %cst_12 = arith.constant dense<0.000000e+00> : vector<128x64xf32>
    %31 = tpu.matmul %28, %30, %cst_12 {dimension_numbers = #tpu.dot_dimension_numbers<[1], [0], [0], [1], [0, 0, 1, 1], [], []>} : vector<128x32xf32>, vector<32x64xf32>, vector<128x64xf32> -> vector<128x64xf32>
    %c0_13 = arith.constant 0 : index
    %c0_14 = arith.constant 0 : index
    %c0_15 = arith.constant 0 : index
    %32 = vector.load %arg11[%c0_13, %c0_14, %c0_15] : memref<1x1x64xf32, #tpu.memory_space<vmem>>, vector<1x1x64xf32>
    %33 = vector.shape_cast %32 : vector<1x1x64xf32> to vector<1x64xf32>
    %34 = vector.broadcast %33 : vector<1x64xf32> to vector<128x64xf32>
    %35 = arith.addf %31, %34 : vector<128x64xf32>
    %cst_16 = arith.constant 0.000000e+00 : f32
    %36 = vector.broadcast %cst_16 : f32 to vector<128x64xf32>
    %37 = arith.maximumf %35, %36 : vector<128x64xf32>
    %38 = math.absf %35 : vector<128x64xf32>
    %cst_17 = arith.constant 0.000000e+00 : f32
    %39 = vector.broadcast %cst_17 : f32 to vector<128x64xf32>
    %40 = arith.subf %39, %38 : vector<128x64xf32>
    %41 = math.exp %40 : vector<128x64xf32>
    %42 = math.log1p %41 : vector<128x64xf32>
    %43 = arith.addf %37, %42 : vector<128x64xf32>
    %cst_18 = arith.constant 0.693147182 : f32
    %44 = vector.broadcast %cst_18 : f32 to vector<128x64xf32>
    %45 = arith.subf %43, %44 : vector<128x64xf32>
    %c0_19 = arith.constant 0 : index
    %c0_20 = arith.constant 0 : index
    %c0_21 = arith.constant 0 : index
    %46 = vector.load %arg12[%c0_19, %c0_20, %c0_21] : memref<1x64x64xf32, #tpu.memory_space<vmem>>, vector<1x64x64xf32>
    %47 = vector.shape_cast %46 : vector<1x64x64xf32> to vector<64x64xf32>
    %cst_22 = arith.constant dense<0.000000e+00> : vector<128x64xf32>
    %48 = tpu.matmul %45, %47, %cst_22 {dimension_numbers = #tpu.dot_dimension_numbers<[1], [0], [0], [1], [0, 0, 1, 1], [], []>} : vector<128x64xf32>, vector<64x64xf32>, vector<128x64xf32> -> vector<128x64xf32>
    %c0_23 = arith.constant 0 : index
    %c0_24 = arith.constant 0 : index
    %c0_25 = arith.constant 0 : index
    %49 = vector.load %arg13[%c0_23, %c0_24, %c0_25] : memref<1x1x64xf32, #tpu.memory_space<vmem>>, vector<1x1x64xf32>
    %50 = vector.shape_cast %49 : vector<1x1x64xf32> to vector<1x64xf32>
    %51 = vector.broadcast %50 : vector<1x64xf32> to vector<128x64xf32>
    %52 = arith.addf %48, %51 : vector<128x64xf32>
    %c0_26 = arith.constant 0 : index
    %c0_27 = arith.constant 0 : index
    %53 = vector.load %arg6[%c0_26, %c0_27] : memref<2x64xf32, #tpu.memory_space<vmem>>, vector<1x64xf32>
    %c1_28 = arith.constant 1 : index
    %c0_29 = arith.constant 0 : index
    %54 = vector.load %arg6[%c1_28, %c0_29] : memref<2x64xf32, #tpu.memory_space<vmem>>, vector<1x64xf32>
    %55 = vector.broadcast %11 : vector<128x1xf32> to vector<128x64xf32>
    %56 = vector.broadcast %53 : vector<1x64xf32> to vector<128x64xf32>
    %57 = arith.mulf %55, %56 : vector<128x64xf32>
    %58 = vector.broadcast %12 : vector<128x1xf32> to vector<128x64xf32>
    %59 = vector.broadcast %54 : vector<1x64xf32> to vector<128x64xf32>
    %60 = arith.mulf %58, %59 : vector<128x64xf32>
    %61 = arith.addf %57, %60 : vector<128x64xf32>
    %62 = arith.mulf %52, %61 : vector<128x64xf32>
    %63 = tpu.iota {dimensions = array<i32: 1>} : vector<128x32xi32>
    %c0_30 = arith.constant 0 : index
    %c0_31 = arith.constant 0 : index
    %64 = vector.load %arg3[%c0_30, %c0_31] : memref<128x1xi32, #tpu.memory_space<vmem>>, vector<128x1xi32>
    %65 = vector.broadcast %64 : vector<128x1xi32> to vector<128x32xi32>
    %66 = arith.cmpi eq, %65, %63 : vector<128x32xi32>
    %67 = arith.extui %66 : vector<128x32xi1> to vector<128x32xi32>
    %68 = arith.sitofp %67 : vector<128x32xi32> to vector<128x32xf32>
    %69 = arith.truncf %68 : vector<128x32xf32> to vector<128x32xbf16>
    %c0_32 = arith.constant 0 : index
    %c0_33 = arith.constant 0 : index
    %70 = vector.load %arg27[%c0_32, %c0_33] : memref<32x64xbf16, #tpu.memory_space<vmem>>, vector<32x64xbf16>
    %cst_34 = arith.constant dense<0.000000e+00> : vector<128x64xf32>
    %71 = tpu.matmul %69, %70, %cst_34 {dimension_numbers = #tpu.dot_dimension_numbers<[1], [0], [0], [1], [0, 0, 1, 1], [], []>} : vector<128x32xbf16>, vector<32x64xbf16>, vector<128x64xf32> -> vector<128x64xf32>
    %72 = arith.mulf %71, %62 : vector<128x64xf32>
    %73 = arith.truncf %72 : vector<128x64xf32> to vector<128x64xbf16>
    %74 = tpu.iota {dimensions = array<i32: 0>} : vector<32x128xi32>
    %c0_35 = arith.constant 0 : index
    %c0_36 = arith.constant 0 : index
    %75 = vector.load %arg4[%c0_35, %c0_36] : memref<1x128xi32, #tpu.memory_space<vmem>>, vector<1x128xi32>
    %76 = vector.broadcast %75 : vector<1x128xi32> to vector<32x128xi32>
    %77 = arith.cmpi eq, %74, %76 : vector<32x128xi32>
    %78 = arith.extui %77 : vector<32x128xi1> to vector<32x128xi32>
    %79 = arith.sitofp %78 : vector<32x128xi32> to vector<32x128xf32>
    %80 = arith.truncf %79 : vector<32x128xf32> to vector<32x128xbf16>
    %c0_37 = arith.constant 0 : index
    %c0_38 = arith.constant 0 : index
    %81 = vector.load %arg28[%c0_37, %c0_38] : memref<32x64xf32, #tpu.memory_space<vmem>>, vector<32x64xf32>
    %cst_39 = arith.constant dense<0.000000e+00> : vector<32x64xf32>
    %82 = tpu.matmul %80, %73, %cst_39 {dimension_numbers = #tpu.dot_dimension_numbers<[1], [0], [0], [1], [0, 0, 1, 1], [], []>} : vector<32x128xbf16>, vector<128x64xbf16>, vector<32x64xf32> -> vector<32x64xf32>
    %83 = arith.addf %81, %82 : vector<32x64xf32>
    %c0_40 = arith.constant 0 : index
    %c0_41 = arith.constant 0 : index
    %84 = vector.load %arg28[%c0_40, %c0_41] : memref<32x64xf32, #tpu.memory_space<vmem>>, vector<32x64xf32>
    tpu.vector_store %arg28[%c0_40, %c0_41], %83 {strides = array<i32>} : memref<32x64xf32, #tpu.memory_space<vmem>>, vector<32x64xf32>,
    %c1_i32 = arith.constant 1 : i32
    %85 = arith.cmpi eq, %arg1, %c1_i32 : i32
    %86 = arith.extui %85 : i1 to i32
    %c0_i32_42 = arith.constant 0 : i32
    %87 = arith.cmpi ne, %86, %c0_i32_42 : i32
    scf.if %87 {
      %c0_43 = arith.constant 0 : index
      %c0_44 = arith.constant 0 : index
      %88 = vector.load %arg28[%c0_43, %c0_44] : memref<32x64xf32, #tpu.memory_space<vmem>>, vector<32x64xf32>
      %c0_45 = arith.constant 0 : index
      %c0_46 = arith.constant 0 : index
      %c0_47 = arith.constant 0 : index
      %89 = vector.load %arg14[%c0_45, %c0_46, %c0_47] : memref<1x64x64xf32, #tpu.memory_space<vmem>>, vector<1x64x64xf32>
      %90 = vector.shape_cast %89 : vector<1x64x64xf32> to vector<64x64xf32>
      %cst_48 = arith.constant dense<0.000000e+00> : vector<32x64xf32>
      %91 = tpu.matmul %88, %90, %cst_48 {dimension_numbers = #tpu.dot_dimension_numbers<[1], [0], [0], [1], [0, 0, 1, 1], [], []>} : vector<32x64xf32>, vector<64x64xf32>, vector<32x64xf32> -> vector<32x64xf32>
      %c0_49 = arith.constant 0 : index
      %c0_50 = arith.constant 0 : index
      %c0_51 = arith.constant 0 : index
      %92 = vector.load %arg15[%c0_49, %c0_50, %c0_51] : memref<1x1x64xf32, #tpu.memory_space<vmem>>, vector<1x1x64xf32>
      %93 = vector.shape_cast %92 : vector<1x1x64xf32> to vector<1x64xf32>
      %94 = vector.broadcast %93 : vector<1x64xf32> to vector<32x64xf32>
      %95 = arith.addf %91, %94 : vector<32x64xf32>
      %cst_52 = arith.constant 0.000000e+00 : f32
      %96 = vector.broadcast %cst_52 : f32 to vector<32x64xf32>
      %97 = arith.maximumf %95, %96 : vector<32x64xf32>
      %98 = math.absf %95 : vector<32x64xf32>
      %cst_53 = arith.constant 0.000000e+00 : f32
      %99 = vector.broadcast %cst_53 : f32 to vector<32x64xf32>
      %100 = arith.subf %99, %98 : vector<32x64xf32>
      %101 = math.exp %100 : vector<32x64xf32>
      %102 = math.log1p %101 : vector<32x64xf32>
      %103 = arith.addf %97, %102 : vector<32x64xf32>
      %cst_54 = arith.constant 0.693147182 : f32
      %104 = vector.broadcast %cst_54 : f32 to vector<32x64xf32>
      %105 = arith.subf %103, %104 : vector<32x64xf32>
      %c0_55 = arith.constant 0 : index
      %c0_56 = arith.constant 0 : index
      %c0_57 = arith.constant 0 : index
      %106 = vector.load %arg16[%c0_55, %c0_56, %c0_57] : memref<1x64x64xf32, #tpu.memory_space<vmem>>, vector<1x64x64xf32>
      %107 = vector.shape_cast %106 : vector<1x64x64xf32> to vector<64x64xf32>
      %cst_58 = arith.constant dense<0.000000e+00> : vector<32x64xf32>
      %108 = tpu.matmul %105, %107, %cst_58 {dimension_numbers = #tpu.dot_dimension_numbers<[1], [0], [0], [1], [0, 0, 1, 1], [], []>} : vector<32x64xf32>, vector<64x64xf32>, vector<32x64xf32> -> vector<32x64xf32>
      %c0_59 = arith.constant 0 : index
      %c0_60 = arith.constant 0 : index
      %c0_61 = arith.constant 0 : index
      %109 = vector.load %arg17[%c0_59, %c0_60, %c0_61] : memref<1x1x64xf32, #tpu.memory_space<vmem>>, vector<1x1x64xf32>
      %110 = vector.shape_cast %109 : vector<1x1x64xf32> to vector<1x64xf32>
      %111 = vector.broadcast %110 : vector<1x64xf32> to vector<32x64xf32>
      %112 = arith.addf %108, %111 : vector<32x64xf32>
      %c0_62 = arith.constant 0 : index
      %c0_63 = arith.constant 0 : index
      %113 = vector.load %arg26[%c0_62, %c0_63] : memref<32x32xf32, #tpu.memory_space<vmem>>, vector<32x32xf32>
      %c0_64 = arith.constant 0 : index
      %c0_65 = arith.constant 0 : index
      %c0_66 = arith.constant 0 : index
      %114 = vector.load %arg18[%c0_64, %c0_65, %c0_66] : memref<1x32x32xf32, #tpu.memory_space<vmem>>, vector<1x32x32xf32>
      %115 = vector.shape_cast %114 : vector<1x32x32xf32> to vector<32x32xf32>
      %cst_67 = arith.constant dense<0.000000e+00> : vector<32x32xf32>
      %116 = tpu.matmul %113, %115, %cst_67 {dimension_numbers = #tpu.dot_dimension_numbers<[1], [0], [0], [1], [0, 0, 1, 1], [], []>} : vector<32x32xf32>, vector<32x32xf32>, vector<32x32xf32> -> vector<32x32xf32>
      %c0_68 = arith.constant 0 : index
      %c0_69 = arith.constant 0 : index
      %c0_70 = arith.constant 0 : index
      %117 = vector.load %arg19[%c0_68, %c0_69, %c0_70] : memref<1x64x32xf32, #tpu.memory_space<vmem>>, vector<1x64x32xf32>
      %118 = vector.shape_cast %117 : vector<1x64x32xf32> to vector<64x32xf32>
      %cst_71 = arith.constant dense<0.000000e+00> : vector<32x32xf32>
      %119 = tpu.matmul %112, %118, %cst_71 {dimension_numbers = #tpu.dot_dimension_numbers<[1], [0], [0], [1], [0, 0, 1, 1], [], []>} : vector<32x64xf32>, vector<64x32xf32>, vector<32x32xf32> -> vector<32x32xf32>
      %120 = arith.addf %116, %119 : vector<32x32xf32>
      %c0_72 = arith.constant 0 : index
      %c0_73 = arith.constant 0 : index
      %c0_74 = arith.constant 0 : index
      %121 = vector.load %arg20[%c0_72, %c0_73, %c0_74] : memref<1x1x32xf32, #tpu.memory_space<vmem>>, vector<1x1x32xf32>
      %122 = vector.shape_cast %121 : vector<1x1x32xf32> to vector<1x32xf32>
      %123 = vector.broadcast %122 : vector<1x32xf32> to vector<32x32xf32>
      %124 = arith.addf %120, %123 : vector<32x32xf32>
      %cst_75 = arith.constant 0.000000e+00 : f32
      %125 = vector.broadcast %cst_75 : f32 to vector<32x32xf32>
      %126 = arith.maximumf %124, %125 : vector<32x32xf32>
      %c0_76 = arith.constant 0 : index
      %c0_77 = arith.constant 0 : index
      %127 = vector.load %arg26[%c0_76, %c0_77] : memref<32x32xf32, #tpu.memory_space<vmem>>, vector<32x32xf32>
      tpu.vector_store %arg26[%c0_76, %c0_77], %126 {strides = array<i32>} : memref<32x32xf32, #tpu.memory_space<vmem>>, vector<32x32xf32>,
      %c1_i32_78 = arith.constant 1 : i32
      %128 = arith.cmpi eq, %arg0, %c1_i32_78 : i32
      %129 = arith.extui %128 : i1 to i32
      %c0_i32_79 = arith.constant 0 : i32
      %130 = arith.cmpi ne, %129, %c0_i32_79 : i32
      scf.if %130 {
        %c0_80 = arith.constant 0 : index
        %c0_81 = arith.constant 0 : index
        %131 = vector.load %arg21[%c0_80, %c0_81] : memref<32x16xf32, #tpu.memory_space<vmem>>, vector<32x16xf32>
        %cst_82 = arith.constant dense<0.000000e+00> : vector<32x16xf32>
        %132 = tpu.matmul %126, %131, %cst_82 {dimension_numbers = #tpu.dot_dimension_numbers<[1], [0], [0], [1], [0, 0, 1, 1], [], []>} : vector<32x32xf32>, vector<32x16xf32>, vector<32x16xf32> -> vector<32x16xf32>
        %c0_83 = arith.constant 0 : index
        %c0_84 = arith.constant 0 : index
        %133 = vector.load %arg22[%c0_83, %c0_84] : memref<1x16xf32, #tpu.memory_space<vmem>>, vector<1x16xf32>
        %134 = vector.broadcast %133 : vector<1x16xf32> to vector<32x16xf32>
        %135 = arith.addf %132, %134 : vector<32x16xf32>
        %cst_85 = arith.constant 0.000000e+00 : f32
        %136 = vector.broadcast %cst_85 : f32 to vector<32x16xf32>
        %137 = arith.maximumf %135, %136 : vector<32x16xf32>
        %138 = math.absf %135 : vector<32x16xf32>
        %cst_86 = arith.constant 0.000000e+00 : f32
        %139 = vector.broadcast %cst_86 : f32 to vector<32x16xf32>
        %140 = arith.subf %139, %138 : vector<32x16xf32>
        %141 = math.exp %140 : vector<32x16xf32>
        %142 = math.log1p %141 : vector<32x16xf32>
        %143 = arith.addf %137, %142 : vector<32x16xf32>
        %cst_87 = arith.constant 0.693147182 : f32
        %144 = vector.broadcast %cst_87 : f32 to vector<32x16xf32>
        %145 = arith.subf %143, %144 : vector<32x16xf32>
        %c0_88 = arith.constant 0 : index
        %c0_89 = arith.constant 0 : index
        %146 = vector.load %arg23[%c0_88, %c0_89] : memref<16x8xf32, #tpu.memory_space<vmem>>, vector<16x8xf32>
        %cst_90 = arith.constant dense<0.000000e+00> : vector<32x8xf32>
        %147 = tpu.matmul %145, %146, %cst_90 {dimension_numbers = #tpu.dot_dimension_numbers<[1], [0], [0], [1], [0, 0, 1, 1], [], []>} : vector<32x16xf32>, vector<16x8xf32>, vector<32x8xf32> -> vector<32x8xf32>
        %c0_91 = arith.constant 0 : index
        %c0_92 = arith.constant 0 : index
        %148 = vector.load %arg24[%c0_91, %c0_92] : memref<1x8xf32, #tpu.memory_space<vmem>>, vector<1x8xf32>
        %149 = vector.broadcast %148 : vector<1x8xf32> to vector<32x8xf32>
        %150 = arith.addf %147, %149 : vector<32x8xf32>
        %c0_93 = arith.constant 0 : index
        %c0_94 = arith.constant 0 : index
        %151 = vector.load %arg7[%c0_93, %c0_94] : memref<3x32xf32, #tpu.memory_space<vmem>>, vector<3x32xf32>
        %cst_95 = arith.constant dense<0.000000e+00> : vector<3x8xf32>
        %152 = tpu.matmul %151, %150, %cst_95 {dimension_numbers = #tpu.dot_dimension_numbers<[1], [0], [0], [1], [0, 0, 1, 1], [], []>} : vector<3x32xf32>, vector<32x8xf32>, vector<3x8xf32> -> vector<3x8xf32>
        %c0_96 = arith.constant 0 : index
        %c0_97 = arith.constant 0 : index
        %153 = vector.load %arg25[%c0_96, %c0_97] : memref<3x8xf32, #tpu.memory_space<vmem>>, vector<3x8xf32>
        tpu.vector_store %arg25[%c0_96, %c0_97], %152 {strides = array<i32>} : memref<3x8xf32, #tpu.memory_space<vmem>>, vector<3x8xf32>,
      } else {
      }
    } else {
    }
    return
  }
  func.func @transform_0(%arg0: i32, %arg1: i32) -> (i32, i32) {
    %c0_i32 = arith.constant 0 : i32
    %c0_i32_0 = arith.constant 0 : i32
    return %arg1, %c0_i32 : i32, i32
  }
  func.func @transform_1(%arg0: i32, %arg1: i32) -> (i32, i32) {
    %c0_i32 = arith.constant 0 : i32
    %c0_i32_0 = arith.constant 0 : i32
    return %arg1, %c0_i32 : i32, i32
  }
  func.func @transform_2(%arg0: i32, %arg1: i32) -> (i32, i32) {
    %c0_i32 = arith.constant 0 : i32
    %c0_i32_0 = arith.constant 0 : i32
    return %c0_i32, %arg1 : i32, i32
  }
  func.func @transform_3(%arg0: i32, %arg1: i32) -> (i32, i32) {
    %c0_i32 = arith.constant 0 : i32
    %c0_i32_0 = arith.constant 0 : i32
    %c0_i32_1 = arith.constant 0 : i32
    return %c0_i32, %c0_i32_0 : i32, i32
  }
  func.func @transform_4(%arg0: i32, %arg1: i32) -> (i32, i32) {
    %c0_i32 = arith.constant 0 : i32
    %c0_i32_0 = arith.constant 0 : i32
    %c0_i32_1 = arith.constant 0 : i32
    return %c0_i32, %c0_i32_0 : i32, i32
  }
  func.func @transform_5(%arg0: i32, %arg1: i32) -> (i32, i32) {
    %c0_i32 = arith.constant 0 : i32
    %c0_i32_0 = arith.constant 0 : i32
    %c0_i32_1 = arith.constant 0 : i32
    return %c0_i32, %c0_i32_0 : i32, i32
  }
  func.func @transform_6(%arg0: i32, %arg1: i32) -> (i32, i32) {
    %c0_i32 = arith.constant 0 : i32
    %c0_i32_0 = arith.constant 0 : i32
    %c0_i32_1 = arith.constant 0 : i32
    return %c0_i32, %c0_i32_0 : i32, i32
  }
  func.func @transform_7(%arg0: i32, %arg1: i32) -> (i32, i32, i32) {
    %c0_i32 = arith.constant 0 : i32
    %c0_i32_0 = arith.constant 0 : i32
    %c0_i32_1 = arith.constant 0 : i32
    return %arg0, %c0_i32, %c0_i32_0 : i32, i32, i32
  }
  func.func @transform_8(%arg0: i32, %arg1: i32) -> (i32, i32, i32) {
    %c0_i32 = arith.constant 0 : i32
    %c0_i32_0 = arith.constant 0 : i32
    %c0_i32_1 = arith.constant 0 : i32
    return %arg0, %c0_i32, %c0_i32_0 : i32, i32, i32
  }
  func.func @transform_9(%arg0: i32, %arg1: i32) -> (i32, i32, i32) {
    %c0_i32 = arith.constant 0 : i32
    %c0_i32_0 = arith.constant 0 : i32
    %c0_i32_1 = arith.constant 0 : i32
    return %arg0, %c0_i32, %c0_i32_0 : i32, i32, i32
  }
  func.func @transform_10(%arg0: i32, %arg1: i32) -> (i32, i32, i32) {
    %c0_i32 = arith.constant 0 : i32
    %c0_i32_0 = arith.constant 0 : i32
    %c0_i32_1 = arith.constant 0 : i32
    return %arg0, %c0_i32, %c0_i32_0 : i32, i32, i32
  }
  func.func @transform_11(%arg0: i32, %arg1: i32) -> (i32, i32, i32) {
    %c0_i32 = arith.constant 0 : i32
    %c0_i32_0 = arith.constant 0 : i32
    %c0_i32_1 = arith.constant 0 : i32
    return %arg0, %c0_i32, %c0_i32_0 : i32, i32, i32
  }
  func.func @transform_12(%arg0: i32, %arg1: i32) -> (i32, i32, i32) {
    %c0_i32 = arith.constant 0 : i32
    %c0_i32_0 = arith.constant 0 : i32
    %c0_i32_1 = arith.constant 0 : i32
    return %arg0, %c0_i32, %c0_i32_0 : i32, i32, i32
  }
  func.func @transform_13(%arg0: i32, %arg1: i32) -> (i32, i32, i32) {
    %c0_i32 = arith.constant 0 : i32
    %c0_i32_0 = arith.constant 0 : i32
    %c0_i32_1 = arith.constant 0 : i32
    return %arg0, %c0_i32, %c0_i32_0 : i32, i32, i32
  }
  func.func @transform_14(%arg0: i32, %arg1: i32) -> (i32, i32, i32) {
    %c0_i32 = arith.constant 0 : i32
    %c0_i32_0 = arith.constant 0 : i32
    %c0_i32_1 = arith.constant 0 : i32
    return %arg0, %c0_i32, %c0_i32_0 : i32, i32, i32
  }
  func.func @transform_15(%arg0: i32, %arg1: i32) -> (i32, i32, i32) {
    %c0_i32 = arith.constant 0 : i32
    %c0_i32_0 = arith.constant 0 : i32
    %c0_i32_1 = arith.constant 0 : i32
    return %arg0, %c0_i32, %c0_i32_0 : i32, i32, i32
  }
  func.func @transform_16(%arg0: i32, %arg1: i32) -> (i32, i32, i32) {
    %c0_i32 = arith.constant 0 : i32
    %c0_i32_0 = arith.constant 0 : i32
    %c0_i32_1 = arith.constant 0 : i32
    return %arg0, %c0_i32, %c0_i32_0 : i32, i32, i32
  }
  func.func @transform_17(%arg0: i32, %arg1: i32) -> (i32, i32, i32) {
    %c0_i32 = arith.constant 0 : i32
    %c0_i32_0 = arith.constant 0 : i32
    %c0_i32_1 = arith.constant 0 : i32
    return %arg0, %c0_i32, %c0_i32_0 : i32, i32, i32
  }
  func.func @transform_18(%arg0: i32, %arg1: i32) -> (i32, i32, i32) {
    %c0_i32 = arith.constant 0 : i32
    %c0_i32_0 = arith.constant 0 : i32
    %c0_i32_1 = arith.constant 0 : i32
    return %arg0, %c0_i32, %c0_i32_0 : i32, i32, i32
  }
  func.func @transform_19(%arg0: i32, %arg1: i32) -> (i32, i32) {
    %c0_i32 = arith.constant 0 : i32
    %c0_i32_0 = arith.constant 0 : i32
    %c0_i32_1 = arith.constant 0 : i32
    return %c0_i32, %c0_i32_0 : i32, i32
  }
  func.func @transform_20(%arg0: i32, %arg1: i32) -> (i32, i32) {
    %c0_i32 = arith.constant 0 : i32
    %c0_i32_0 = arith.constant 0 : i32
    %c0_i32_1 = arith.constant 0 : i32
    return %c0_i32, %c0_i32_0 : i32, i32
  }
  func.func @transform_21(%arg0: i32, %arg1: i32) -> (i32, i32) {
    %c0_i32 = arith.constant 0 : i32
    %c0_i32_0 = arith.constant 0 : i32
    %c0_i32_1 = arith.constant 0 : i32
    return %c0_i32, %c0_i32_0 : i32, i32
  }
  func.func @transform_22(%arg0: i32, %arg1: i32) -> (i32, i32) {
    %c0_i32 = arith.constant 0 : i32
    %c0_i32_0 = arith.constant 0 : i32
    %c0_i32_1 = arith.constant 0 : i32
    return %c0_i32, %c0_i32_0 : i32, i32
  }
  func.func @transform_23(%arg0: i32, %arg1: i32) -> (i32, i32) {
    %c0_i32 = arith.constant 0 : i32
    %c0_i32_0 = arith.constant 0 : i32
    %c0_i32_1 = arith.constant 0 : i32
    return %c0_i32, %c0_i32_0 : i32, i32
  }
}

</mosaic_0001>

<llo_original>
// kernel: tpu_custom_call.1
$region0: #{tpu_custom_call.1}
  #allocation0 [shape = 'u32[]', space=smem, size = 0x4, offset = 0x4, fixed_abs, tag = 'smem constant byte address 0x4 - core index']
  #allocation1 [shape = 'u32[72,128]{1,0:T(1,128)}', space=vmem, size = 0x9000, scoped, tag = 'internal scratch']
  #allocation2 [shape = 'f32[32,32]{1,0:T(8,128)}', space=vmem, size = 0x4000, scoped, tag = 'scratch operand']
  #allocation3 [shape = 'bf16[32,64]{1,0:T(8,128)(2,1)}', space=vmem, size = 0x2000, scoped, tag = 'scratch operand']
  #allocation4 [shape = 'f32[32,64]{1,0:T(8,128)}', space=vmem, size = 0x4000, scoped, tag = 'scratch operand']
  %s0 = inlined_call_operand.vmem [shape: f32[256,8], index: 0, kind: input, shape index: {}]
  %s1 = inlined_call_operand.vmem [shape: s32[256,1], index: 1, kind: input, shape index: {}]
  %s2 = inlined_call_operand.vmem [shape: s32[1,256], index: 2, kind: input, shape index: {}]
  %s3 = inlined_call_operand.vmem [shape: f32[3,32], index: 3, kind: input, shape index: {}]
  %s4 = inlined_call_operand.vmem [shape: f32[2,64], index: 4, kind: input, shape index: {}]
  %s5 = inlined_call_operand.vmem [shape: f32[3,32], index: 5, kind: input, shape index: {}]
  %s6 = inlined_call_operand.vmem [shape: f32[32,32], index: 6, kind: input, shape index: {}]
  %s7 = inlined_call_operand.vmem [shape: f32[2,32,64], index: 7, kind: input, shape index: {}]
  %s8 = inlined_call_operand.vmem [shape: f32[2,32,64], index: 8, kind: input, shape index: {}]
  %s9 = inlined_call_operand.vmem [shape: f32[2,1,64], index: 9, kind: input, shape index: {}]
  %s10 = inlined_call_operand.vmem [shape: f32[2,64,64], index: 10, kind: input, shape index: {}]
  %s11 = inlined_call_operand.vmem [shape: f32[2,1,64], index: 11, kind: input, shape index: {}]
  %s12 = inlined_call_operand.vmem [shape: f32[2,64,64], index: 12, kind: input, shape index: {}]
  %s13 = inlined_call_operand.vmem [shape: f32[2,1,64], index: 13, kind: input, shape index: {}]
  %s14 = inlined_call_operand.vmem [shape: f32[2,64,64], index: 14, kind: input, shape index: {}]
  %s15 = inlined_call_operand.vmem [shape: f32[2,1,64], index: 15, kind: input, shape index: {}]
  %s16 = inlined_call_operand.vmem [shape: f32[2,32,32], index: 16, kind: input, shape index: {}]
  %s17 = inlined_call_operand.vmem [shape: f32[2,64,32], index: 17, kind: input, shape index: {}]
  %s18 = inlined_call_operand.vmem [shape: f32[2,1,32], index: 18, kind: input, shape index: {}]
  %s19 = inlined_call_operand.vmem [shape: f32[32,16], index: 19, kind: input, shape index: {}]
  %s20 = inlined_call_operand.vmem [shape: f32[1,16], index: 20, kind: input, shape index: {}]
  %s21 = inlined_call_operand.vmem [shape: f32[16,8], index: 21, kind: input, shape index: {}]
  %s22 = inlined_call_operand.vmem [shape: f32[1,8], index: 22, kind: input, shape index: {}]
  %s23 = inlined_call_operand.hbm [shape: f32[3,8], index: 23, kind: output, shape index: {}]
  %s24 = sld [smem:[#allocation0]]
  $region141: #{tpu_custom_call.1} parent=0
    _
  %s26 = ssub.s32 1, %s24
  %s27 = scalar_select 0, %s26, %s24
  $region1: #{tpu_custom_call.1} parent=0
    #allocation5 [shape = 'u8[2048]{0}', space=vmem, size = 0x800, scoped, tag = 'output window, operand 0, single buffered']
    #allocation6 [shape = 's32[2]{0}', space=sflag, size = 0x8, scoped, tag = 'scoped memory for tpu_custom_call.1']
    %28 = vsyncpa [#allocation6], 0
    loop: start=0, step=1, limit=6
    $region2: #{tpu_custom_call.1} parent=1 // loop_pre_header
      _
    $region3: #{tpu_custom_call.1} parent=1 // loop_header
      %s30 = sphi 0, %s34
      %p31 = scmp.ge.s32.totalorder %s30, 6
      %s37 = sphi 0, %s49
      %s38 = sphi 0, %s45
      %s39 = sphi 0, %s37
      %s40 = sphi 0, %s38
      %s41 = sphi 0, %s39
      %s42 = sphi 0, %s40
      %s52 = sphi 0, %s54
      %s55 = sphi 0, %s52
      %s56 = sphi 0, %s55
      %s72 = sphi 0, %s56
      %s78 = sphi 0, %s80
      %s81 = sphi 0, %s78
      %s82 = sphi 0, %s81
      %s98 = sphi 0, %s82
      %s104 = sphi 0, %s106
      %s107 = sphi 0, %s104
      %s108 = sphi 0, %s107
      %s124 = sphi 0, %s108
      %s128 = sphi 0, %s128
      %s130 = sphi 0, %s128
      %s131 = sphi 0, %s130
      %s145 = sphi 0, %s131
      %s149 = sphi 0, %s149
      %s151 = sphi 0, %s149
      %s152 = sphi 0, %s151
      %s166 = sphi 0, %s152
      %s170 = sphi 0, %s170
      %s172 = sphi 0, %s170
      %s173 = sphi 0, %s172
      %s187 = sphi 0, %s173
      %s191 = sphi 0, %s191
      %s193 = sphi 0, %s191
      %s194 = sphi 0, %s193
      %s208 = sphi 0, %s194
      %s214 = sphi 0, %s216
      %s217 = sphi 0, %s214
      %s218 = sphi 0, %s217
      %s234 = sphi 0, %s218
      %s240 = sphi 0, %s242
      %s243 = sphi 0, %s240
      %s244 = sphi 0, %s243
      %s260 = sphi 0, %s244
      %s266 = sphi 0, %s268
      %s269 = sphi 0, %s266
      %s270 = sphi 0, %s269
      %s286 = sphi 0, %s270
      %s292 = sphi 0, %s294
      %s295 = sphi 0, %s292
      %s296 = sphi 0, %s295
      %s312 = sphi 0, %s296
      %s318 = sphi 0, %s320
      %s321 = sphi 0, %s318
      %s322 = sphi 0, %s321
      %s338 = sphi 0, %s322
      %s344 = sphi 0, %s346
      %s347 = sphi 0, %s344
      %s348 = sphi 0, %s347
      %s364 = sphi 0, %s348
      %s370 = sphi 0, %s372
      %s373 = sphi 0, %s370
      %s374 = sphi 0, %s373
      %s390 = sphi 0, %s374
      %s396 = sphi 0, %s398
      %s399 = sphi 0, %s396
      %s400 = sphi 0, %s399
      %s416 = sphi 0, %s400
      %s422 = sphi 0, %s424
      %s425 = sphi 0, %s422
      %s426 = sphi 0, %s425
      %s442 = sphi 0, %s426
      %s448 = sphi 0, %s450
      %s451 = sphi 0, %s448
      %s452 = sphi 0, %s451
      %s468 = sphi 0, %s452
      %s474 = sphi 0, %s476
      %s477 = sphi 0, %s474
      %s478 = sphi 0, %s477
      %s494 = sphi 0, %s478
      %s500 = sphi 0, %s502
      %s503 = sphi 0, %s500
      %s504 = sphi 0, %s503
      %s520 = sphi 0, %s504
      %s524 = sphi 0, %s524
      %s526 = sphi 0, %s524
      %s527 = sphi 0, %s526
      %s541 = sphi 0, %s527
      %s545 = sphi 0, %s545
      %s547 = sphi 0, %s545
      %s548 = sphi 0, %s547
      %s562 = sphi 0, %s548
      %s566 = sphi 0, %s566
      %s568 = sphi 0, %s566
      %s569 = sphi 0, %s568
      %s583 = sphi 0, %s569
      %s587 = sphi 0, %s587
      %s589 = sphi 0, %s587
      %s590 = sphi 0, %s589
      %s604 = sphi 0, %s590
      %s608 = sphi 0, %s608
      %s610 = sphi 0, %s608
      %s611 = sphi 0, %s610
      %s625 = sphi 0, %s611
    $region4: #{tpu_custom_call.1} parent=1 // loop_header_branch
      %33 = sbr.rel (%p31) target = $region8
    $region5: #{tpu_custom_call.1} parent=1 // loop_body
      %s35 = ssub.s32 %s30, 1
      %s36 = ssub.s32 %s30, 2
      %s43 = sadd.s32 1, %s38
      %p44 = scmp.ge.s32.totalorder %s43, 2
      %s45 = scalar_select %p44, 0, %s43
      %s46 = sadd.s32 1, %s37
      %s47 = scalar_select %p44, %s46, %s37
      %p48 = scmp.ge.s32.totalorder %s47, 2
      %s49 = scalar_select %p48, 0, %s47
      %s50 = ssub.s32 %s38, %s45
      %p51 = scmp.eq.s32.totalorder %s50, 0
      %s53 = sadd.s32 %s52, 1
      %s54 = scalar_select %p51, %s52, %s53
      %p57 = pneg %p51
      %p58 = scmp.eq.s32.totalorder %s30, 3
      %p59 = por %p57, %p58
      %p60 = scmp.ne.s32.totalorder %s52, %s55
      %p61 = scmp.eq.s32.totalorder %s30, 0
      %p62 = por %p60, %p61
      %p63 = scmp.ne.s32.totalorder %s52, %s55
      %p64 = scmp.eq.s32.totalorder %s35, 3
      %p65 = por %p63, %p64
      %p66 = scmp.ne.s32.totalorder %s55, %s56
      %p67 = scmp.eq.s32.totalorder %s35, 0
      %p68 = por %p66, %p67
      %p69 = scmp.ne.s32.totalorder %s55, %s56
      %p70 = scmp.eq.s32.totalorder %s36, 3
      %p71 = por %p69, %p70
      %p73 = scmp.ne.s32.totalorder %s56, %s72
      %p74 = scmp.eq.s32.totalorder %s36, 0
      %p75 = por %p73, %p74
      %s76 = ssub.s32 %s38, %s45
      %p77 = scmp.eq.s32.totalorder %s76, 0
      %s79 = sadd.s32 %s78, 1
      %s80 = scalar_select %p77, %s78, %s79
      %p83 = pneg %p77
      %p84 = scmp.eq.s32.totalorder %s30, 3
      %p85 = por %p83, %p84
      %p86 = scmp.ne.s32.totalorder %s78, %s81
      %p87 = scmp.eq.s32.totalorder %s30, 0
      %p88 = por %p86, %p87
      %p89 = scmp.ne.s32.totalorder %s78, %s81
      %p90 = scmp.eq.s32.totalorder %s35, 3
      %p91 = por %p89, %p90
      %p92 = scmp.ne.s32.totalorder %s81, %s82
      %p93 = scmp.eq.s32.totalorder %s35, 0
      %p94 = por %p92, %p93
      %p95 = scmp.ne.s32.totalorder %s81, %s82
      %p96 = scmp.eq.s32.totalorder %s36, 3
      %p97 = por %p95, %p96
      %p99 = scmp.ne.s32.totalorder %s82, %s98
      %p100 = scmp.eq.s32.totalorder %s36, 0
      %p101 = por %p99, %p100
      %s102 = ssub.s32 %s38, %s45
      %p103 = scmp.eq.s32.totalorder %s102, 0
      %s105 = sadd.s32 %s104, 1
      %s106 = scalar_select %p103, %s104, %s105
      %p109 = pneg %p103
      %p110 = scmp.eq.s32.totalorder %s30, 3
      %p111 = por %p109, %p110
      %p112 = scmp.ne.s32.totalorder %s104, %s107
      %p113 = scmp.eq.s32.totalorder %s30, 0
      %p114 = por %p112, %p113
      %p115 = scmp.ne.s32.totalorder %s104, %s107
      %p116 = scmp.eq.s32.totalorder %s35, 3
      %p117 = por %p115, %p116
      %p118 = scmp.ne.s32.totalorder %s107, %s108
      %p119 = scmp.eq.s32.totalorder %s35, 0
      %p120 = por %p118, %p119
      %p121 = scmp.ne.s32.totalorder %s107, %s108
      %p122 = scmp.eq.s32.totalorder %s36, 3
      %p123 = por %p121, %p122
      %p125 = scmp.ne.s32.totalorder %s108, %s124
      %p126 = scmp.eq.s32.totalorder %s36, 0
      %p127 = por %p125, %p126
      %s129 = sadd.s32 %s128, 1
      %p132 = scmp.eq.s32.totalorder %s30, 3
      %p133 = scmp.ne.s32.totalorder %s128, %s130
      %p134 = scmp.eq.s32.totalorder %s30, 0
      %p135 = por %p133, %p134
      %p136 = scmp.ne.s32.totalorder %s128, %s130
      %p137 = scmp.eq.s32.totalorder %s35, 3
      %p138 = por %p136, %p137
      %p139 = scmp.ne.s32.totalorder %s130, %s131
      %p140 = scmp.eq.s32.totalorder %s35, 0
      %p141 = por %p139, %p140
      %p142 = scmp.ne.s32.totalorder %s130, %s131
      %p143 = scmp.eq.s32.totalorder %s36, 3
      %p144 = por %p142, %p143
      %p146 = scmp.ne.s32.totalorder %s131, %s145
      %p147 = scmp.eq.s32.totalorder %s36, 0
      %p148 = por %p146, %p147
      %s150 = sadd.s32 %s149, 1
      %p153 = scmp.eq.s32.totalorder %s30, 3
      %p154 = scmp.ne.s32.totalorder %s149, %s151
      %p155 = scmp.eq.s32.totalorder %s30, 0
      %p156 = por %p154, %p155
      %p157 = scmp.ne.s32.totalorder %s149, %s151
      %p158 = scmp.eq.s32.totalorder %s35, 3
      %p159 = por %p157, %p158
      %p160 = scmp.ne.s32.totalorder %s151, %s152
      %p161 = scmp.eq.s32.totalorder %s35, 0
      %p162 = por %p160, %p161
      %p163 = scmp.ne.s32.totalorder %s151, %s152
      %p164 = scmp.eq.s32.totalorder %s36, 3
      %p165 = por %p163, %p164
      %p167 = scmp.ne.s32.totalorder %s152, %s166
      %p168 = scmp.eq.s32.totalorder %s36, 0
      %p169 = por %p167, %p168
      %s171 = sadd.s32 %s170, 1
      %p174 = scmp.eq.s32.totalorder %s30, 3
      %p175 = scmp.ne.s32.totalorder %s170, %s172
      %p176 = scmp.eq.s32.totalorder %s30, 0
      %p177 = por %p175, %p176
      %p178 = scmp.ne.s32.totalorder %s170, %s172
      %p179 = scmp.eq.s32.totalorder %s35, 3
      %p180 = por %p178, %p179
      %p181 = scmp.ne.s32.totalorder %s172, %s173
      %p182 = scmp.eq.s32.totalorder %s35, 0
      %p183 = por %p181, %p182
      %p184 = scmp.ne.s32.totalorder %s172, %s173
      %p185 = scmp.eq.s32.totalorder %s36, 3
      %p186 = por %p184, %p185
      %p188 = scmp.ne.s32.totalorder %s173, %s187
      %p189 = scmp.eq.s32.totalorder %s36, 0
      %p190 = por %p188, %p189
      %s192 = sadd.s32 %s191, 1
      %p195 = scmp.eq.s32.totalorder %s30, 3
      %p196 = scmp.ne.s32.totalorder %s191, %s193
      %p197 = scmp.eq.s32.totalorder %s30, 0
      %p198 = por %p196, %p197
      %p199 = scmp.ne.s32.totalorder %s191, %s193
      %p200 = scmp.eq.s32.totalorder %s35, 3
      %p201 = por %p199, %p200
      %p202 = scmp.ne.s32.totalorder %s193, %s194
      %p203 = scmp.eq.s32.totalorder %s35, 0
      %p204 = por %p202, %p203
      %p205 = scmp.ne.s32.totalorder %s193, %s194
      %p206 = scmp.eq.s32.totalorder %s36, 3
      %p207 = por %p205, %p206
      %p209 = scmp.ne.s32.totalorder %s194, %s208
      %p210 = scmp.eq.s32.totalorder %s36, 0
      %p211 = por %p209, %p210
      %s212 = ssub.s32 %s37, %s49
      %p213 = scmp.eq.s32.totalorder %s212, 0
      %s215 = sadd.s32 %s214, 1
      %s216 = scalar_select %p213, %s214, %s215
      %p219 = pneg %p213
      %p220 = scmp.eq.s32.totalorder %s30, 3
      %p221 = por %p219, %p220
      %p222 = scmp.ne.s32.totalorder %s214, %s217
      %p223 = scmp.eq.s32.totalorder %s30, 0
      %p224 = por %p222, %p223
      %p225 = scmp.ne.s32.totalorder %s214, %s217
      %p226 = scmp.eq.s32.totalorder %s35, 3
      %p227 = por %p225, %p226
      %p228 = scmp.ne.s32.totalorder %s217, %s218
      %p229 = scmp.eq.s32.totalorder %s35, 0
      %p230 = por %p228, %p229
      %p231 = scmp.ne.s32.totalorder %s217, %s218
      %p232 = scmp.eq.s32.totalorder %s36, 3
      %p233 = por %p231, %p232
      %p235 = scmp.ne.s32.totalorder %s218, %s234
      %p236 = scmp.eq.s32.totalorder %s36, 0
      %p237 = por %p235, %p236
      %s238 = ssub.s32 %s37, %s49
      %p239 = scmp.eq.s32.totalorder %s238, 0
      %s241 = sadd.s32 %s240, 1
      %s242 = scalar_select %p239, %s240, %s241
      %p245 = pneg %p239
      %p246 = scmp.eq.s32.totalorder %s30, 3
      %p247 = por %p245, %p246
      %p248 = scmp.ne.s32.totalorder %s240, %s243
      %p249 = scmp.eq.s32.totalorder %s30, 0
      %p250 = por %p248, %p249
      %p251 = scmp.ne.s32.totalorder %s240, %s243
      %p252 = scmp.eq.s32.totalorder %s35, 3
      %p253 = por %p251, %p252
      %p254 = scmp.ne.s32.totalorder %s243, %s244
      %p255 = scmp.eq.s32.totalorder %s35, 0
      %p256 = por %p254, %p255
      %p257 = scmp.ne.s32.totalorder %s243, %s244
      %p258 = scmp.eq.s32.totalorder %s36, 3
      %p259 = por %p257, %p258
      %p261 = scmp.ne.s32.totalorder %s244, %s260
      %p262 = scmp.eq.s32.totalorder %s36, 0
      %p263 = por %p261, %p262
      %s264 = ssub.s32 %s37, %s49
      %p265 = scmp.eq.s32.totalorder %s264, 0
      %s267 = sadd.s32 %s266, 1
      %s268 = scalar_select %p265, %s266, %s267
      %p271 = pneg %p265
      %p272 = scmp.eq.s32.totalorder %s30, 3
      %p273 = por %p271, %p272
      %p274 = scmp.ne.s32.totalorder %s266, %s269
      %p275 = scmp.eq.s32.totalorder %s30, 0
      %p276 = por %p274, %p275
      %p277 = scmp.ne.s32.totalorder %s266, %s269
      %p278 = scmp.eq.s32.totalorder %s35, 3
      %p279 = por %p277, %p278
      %p280 = scmp.ne.s32.totalorder %s269, %s270
      %p281 = scmp.eq.s32.totalorder %s35, 0
      %p282 = por %p280, %p281
      %p283 = scmp.ne.s32.totalorder %s269, %s270
      %p284 = scmp.eq.s32.totalorder %s36, 3
      %p285 = por %p283, %p284
      %p287 = scmp.ne.s32.totalorder %s270, %s286
      %p288 = scmp.eq.s32.totalorder %s36, 0
      %p289 = por %p287, %p288
      %s290 = ssub.s32 %s37, %s49
      %p291 = scmp.eq.s32.totalorder %s290, 0
      %s293 = sadd.s32 %s292, 1
      %s294 = scalar_select %p291, %s292, %s293
      %p297 = pneg %p291
      %p298 = scmp.eq.s32.totalorder %s30, 3
      %p299 = por %p297, %p298
      %p300 = scmp.ne.s32.totalorder %s292, %s295
      %p301 = scmp.eq.s32.totalorder %s30, 0
      %p302 = por %p300, %p301
      %p303 = scmp.ne.s32.totalorder %s292, %s295
      %p304 = scmp.eq.s32.totalorder %s35, 3
      %p305 = por %p303, %p304
      %p306 = scmp.ne.s32.totalorder %s295, %s296
      %p307 = scmp.eq.s32.totalorder %s35, 0
      %p308 = por %p306, %p307
      %p309 = scmp.ne.s32.totalorder %s295, %s296
      %p310 = scmp.eq.s32.totalorder %s36, 3
      %p311 = por %p309, %p310
      %p313 = scmp.ne.s32.totalorder %s296, %s312
      %p314 = scmp.eq.s32.totalorder %s36, 0
      %p315 = por %p313, %p314
      %s316 = ssub.s32 %s37, %s49
      %p317 = scmp.eq.s32.totalorder %s316, 0
      %s319 = sadd.s32 %s318, 1
      %s320 = scalar_select %p317, %s318, %s319
      %p323 = pneg %p317
      %p324 = scmp.eq.s32.totalorder %s30, 3
      %p325 = por %p323, %p324
      %p326 = scmp.ne.s32.totalorder %s318, %s321
      %p327 = scmp.eq.s32.totalorder %s30, 0
      %p328 = por %p326, %p327
      %p329 = scmp.ne.s32.totalorder %s318, %s321
      %p330 = scmp.eq.s32.totalorder %s35, 3
      %p331 = por %p329, %p330
      %p332 = scmp.ne.s32.totalorder %s321, %s322
      %p333 = scmp.eq.s32.totalorder %s35, 0
      %p334 = por %p332, %p333
      %p335 = scmp.ne.s32.totalorder %s321, %s322
      %p336 = scmp.eq.s32.totalorder %s36, 3
      %p337 = por %p335, %p336
      %p339 = scmp.ne.s32.totalorder %s322, %s338
      %p340 = scmp.eq.s32.totalorder %s36, 0
      %p341 = por %p339, %p340
      %s342 = ssub.s32 %s37, %s49
      %p343 = scmp.eq.s32.totalorder %s342, 0
      %s345 = sadd.s32 %s344, 1
      %s346 = scalar_select %p343, %s344, %s345
      %p349 = pneg %p343
      %p350 = scmp.eq.s32.totalorder %s30, 3
      %p351 = por %p349, %p350
      %p352 = scmp.ne.s32.totalorder %s344, %s347
      %p353 = scmp.eq.s32.totalorder %s30, 0
      %p354 = por %p352, %p353
      %p355 = scmp.ne.s32.totalorder %s344, %s347
      %p356 = scmp.eq.s32.totalorder %s35, 3
      %p357 = por %p355, %p356
      %p358 = scmp.ne.s32.totalorder %s347, %s348
      %p359 = scmp.eq.s32.totalorder %s35, 0
      %p360 = por %p358, %p359
      %p361 = scmp.ne.s32.totalorder %s347, %s348
      %p362 = scmp.eq.s32.totalorder %s36, 3
      %p363 = por %p361, %p362
      %p365 = scmp.ne.s32.totalorder %s348, %s364
      %p366 = scmp.eq.s32.totalorder %s36, 0
      %p367 = por %p365, %p366
      %s368 = ssub.s32 %s37, %s49
      %p369 = scmp.eq.s32.totalorder %s368, 0
      %s371 = sadd.s32 %s370, 1
      %s372 = scalar_select %p369, %s370, %s371
      %p375 = pneg %p369
      %p376 = scmp.eq.s32.totalorder %s30, 3
      %p377 = por %p375, %p376
      %p378 = scmp.ne.s32.totalorder %s370, %s373
      %p379 = scmp.eq.s32.totalorder %s30, 0
      %p380 = por %p378, %p379
      %p381 = scmp.ne.s32.totalorder %s370, %s373
      %p382 = scmp.eq.s32.totalorder %s35, 3
      %p383 = por %p381, %p382
      %p384 = scmp.ne.s32.totalorder %s373, %s374
      %p385 = scmp.eq.s32.totalorder %s35, 0
      %p386 = por %p384, %p385
      %p387 = scmp.ne.s32.totalorder %s373, %s374
      %p388 = scmp.eq.s32.totalorder %s36, 3
      %p389 = por %p387, %p388
      %p391 = scmp.ne.s32.totalorder %s374, %s390
      %p392 = scmp.eq.s32.totalorder %s36, 0
      %p393 = por %p391, %p392
      %s394 = ssub.s32 %s37, %s49
      %p395 = scmp.eq.s32.totalorder %s394, 0
      %s397 = sadd.s32 %s396, 1
      %s398 = scalar_select %p395, %s396, %s397
      %p401 = pneg %p395
      %p402 = scmp.eq.s32.totalorder %s30, 3
      %p403 = por %p401, %p402
      %p404 = scmp.ne.s32.totalorder %s396, %s399
      %p405 = scmp.eq.s32.totalorder %s30, 0
      %p406 = por %p404, %p405
      %p407 = scmp.ne.s32.totalorder %s396, %s399
      %p408 = scmp.eq.s32.totalorder %s35, 3
      %p409 = por %p407, %p408
      %p410 = scmp.ne.s32.totalorder %s399, %s400
      %p411 = scmp.eq.s32.totalorder %s35, 0
      %p412 = por %p410, %p411
      %p413 = scmp.ne.s32.totalorder %s399, %s400
      %p414 = scmp.eq.s32.totalorder %s36, 3
      %p415 = por %p413, %p414
      %p417 = scmp.ne.s32.totalorder %s400, %s416
      %p418 = scmp.eq.s32.totalorder %s36, 0
      %p419 = por %p417, %p418
      %s420 = ssub.s32 %s37, %s49
      %p421 = scmp.eq.s32.totalorder %s420, 0
      %s423 = sadd.s32 %s422, 1
      %s424 = scalar_select %p421, %s422, %s423
      %p427 = pneg %p421
      %p428 = scmp.eq.s32.totalorder %s30, 3
      %p429 = por %p427, %p428
      %p430 = scmp.ne.s32.totalorder %s422, %s425
      %p431 = scmp.eq.s32.totalorder %s30, 0
      %p432 = por %p430, %p431
      %p433 = scmp.ne.s32.totalorder %s422, %s425
      %p434 = scmp.eq.s32.totalorder %s35, 3
      %p435 = por %p433, %p434
      %p436 = scmp.ne.s32.totalorder %s425, %s426
      %p437 = scmp.eq.s32.totalorder %s35, 0
      %p438 = por %p436, %p437
      %p439 = scmp.ne.s32.totalorder %s425, %s426
      %p440 = scmp.eq.s32.totalorder %s36, 3
      %p441 = por %p439, %p440
      %p443 = scmp.ne.s32.totalorder %s426, %s442
      %p444 = scmp.eq.s32.totalorder %s36, 0
      %p445 = por %p443, %p444
      %s446 = ssub.s32 %s37, %s49
      %p447 = scmp.eq.s32.totalorder %s446, 0
      %s449 = sadd.s32 %s448, 1
      %s450 = scalar_select %p447, %s448, %s449
      %p453 = pneg %p447
      %p454 = scmp.eq.s32.totalorder %s30, 3
      %p455 = por %p453, %p454
      %p456 = scmp.ne.s32.totalorder %s448, %s451
      %p457 = scmp.eq.s32.totalorder %s30, 0
      %p458 = por %p456, %p457
      %p459 = scmp.ne.s32.totalorder %s448, %s451
      %p460 = scmp.eq.s32.totalorder %s35, 3
      %p461 = por %p459, %p460
      %p462 = scmp.ne.s32.totalorder %s451, %s452
      %p463 = scmp.eq.s32.totalorder %s35, 0
      %p464 = por %p462, %p463
      %p465 = scmp.ne.s32.totalorder %s451, %s452
      %p466 = scmp.eq.s32.totalorder %s36, 3
      %p467 = por %p465, %p466
      %p469 = scmp.ne.s32.totalorder %s452, %s468
      %p470 = scmp.eq.s32.totalorder %s36, 0
      %p471 = por %p469, %p470
      %s472 = ssub.s32 %s37, %s49
      %p473 = scmp.eq.s32.totalorder %s472, 0
      %s475 = sadd.s32 %s474, 1
      %s476 = scalar_select %p473, %s474, %s475
      %p479 = pneg %p473
      %p480 = scmp.eq.s32.totalorder %s30, 3
      %p481 = por %p479, %p480
      %p482 = scmp.ne.s32.totalorder %s474, %s477
      %p483 = scmp.eq.s32.totalorder %s30, 0
      %p484 = por %p482, %p483
      %p485 = scmp.ne.s32.totalorder %s474, %s477
      %p486 = scmp.eq.s32.totalorder %s35, 3
      %p487 = por %p485, %p486
      %p488 = scmp.ne.s32.totalorder %s477, %s478
      %p489 = scmp.eq.s32.totalorder %s35, 0
      %p490 = por %p488, %p489
      %p491 = scmp.ne.s32.totalorder %s477, %s478
      %p492 = scmp.eq.s32.totalorder %s36, 3
      %p493 = por %p491, %p492
      %p495 = scmp.ne.s32.totalorder %s478, %s494
      %p496 = scmp.eq.s32.totalorder %s36, 0
      %p497 = por %p495, %p496
      %s498 = ssub.s32 %s37, %s49
      %p499 = scmp.eq.s32.totalorder %s498, 0
      %s501 = sadd.s32 %s500, 1
      %s502 = scalar_select %p499, %s500, %s501
      %p505 = pneg %p499
      %p506 = scmp.eq.s32.totalorder %s30, 3
      %p507 = por %p505, %p506
      %p508 = scmp.ne.s32.totalorder %s500, %s503
      %p509 = scmp.eq.s32.totalorder %s30, 0
      %p510 = por %p508, %p509
      %p511 = scmp.ne.s32.totalorder %s500, %s503
      %p512 = scmp.eq.s32.totalorder %s35, 3
      %p513 = por %p511, %p512
      %p514 = scmp.ne.s32.totalorder %s503, %s504
      %p515 = scmp.eq.s32.totalorder %s35, 0
      %p516 = por %p514, %p515
      %p517 = scmp.ne.s32.totalorder %s503, %s504
      %p518 = scmp.eq.s32.totalorder %s36, 3
      %p519 = por %p517, %p518
      %p521 = scmp.ne.s32.totalorder %s504, %s520
      %p522 = scmp.eq.s32.totalorder %s36, 0
      %p523 = por %p521, %p522
      %s525 = sadd.s32 %s524, 1
      %p528 = scmp.eq.s32.totalorder %s30, 3
      %p529 = scmp.ne.s32.totalorder %s524, %s526
      %p530 = scmp.eq.s32.totalorder %s30, 0
      %p531 = por %p529, %p530
      %p532 = scmp.ne.s32.totalorder %s524, %s526
      %p533 = scmp.eq.s32.totalorder %s35, 3
      %p534 = por %p532, %p533
      %p535 = scmp.ne.s32.totalorder %s526, %s527
      %p536 = scmp.eq.s32.totalorder %s35, 0
      %p537 = por %p535, %p536
      %p538 = scmp.ne.s32.totalorder %s526, %s527
      %p539 = scmp.eq.s32.totalorder %s36, 3
      %p540 = por %p538, %p539
      %p542 = scmp.ne.s32.totalorder %s527, %s541
      %p543 = scmp.eq.s32.totalorder %s36, 0
      %p544 = por %p542, %p543
      %s546 = sadd.s32 %s545, 1
      %p549 = scmp.eq.s32.totalorder %s30, 3
      %p550 = scmp.ne.s32.totalorder %s545, %s547
      %p551 = scmp.eq.s32.totalorder %s30, 0
      %p552 = por %p550, %p551
      %p553 = scmp.ne.s32.totalorder %s545, %s547
      %p554 = scmp.eq.s32.totalorder %s35, 3
      %p555 = por %p553, %p554
      %p556 = scmp.ne.s32.totalorder %s547, %s548
      %p557 = scmp.eq.s32.totalorder %s35, 0
      %p558 = por %p556, %p557
      %p559 = scmp.ne.s32.totalorder %s547, %s548
      %p560 = scmp.eq.s32.totalorder %s36, 3
      %p561 = por %p559, %p560
      %p563 = scmp.ne.s32.totalorder %s548, %s562
      %p564 = scmp.eq.s32.totalorder %s36, 0
      %p565 = por %p563, %p564
      %s567 = sadd.s32 %s566, 1
      %p570 = scmp.eq.s32.totalorder %s30, 3
      %p571 = scmp.ne.s32.totalorder %s566, %s568
      %p572 = scmp.eq.s32.totalorder %s30, 0
      %p573 = por %p571, %p572
      %p574 = scmp.ne.s32.totalorder %s566, %s568
      %p575 = scmp.eq.s32.totalorder %s35, 3
      %p576 = por %p574, %p575
      %p577 = scmp.ne.s32.totalorder %s568, %s569
      %p578 = scmp.eq.s32.totalorder %s35, 0
      %p579 = por %p577, %p578
      %p580 = scmp.ne.s32.totalorder %s568, %s569
      %p581 = scmp.eq.s32.totalorder %s36, 3
      %p582 = por %p580, %p581
      %p584 = scmp.ne.s32.totalorder %s569, %s583
      %p585 = scmp.eq.s32.totalorder %s36, 0
      %p586 = por %p584, %p585
      %s588 = sadd.s32 %s587, 1
      %p591 = scmp.eq.s32.totalorder %s30, 3
      %p592 = scmp.ne.s32.totalorder %s587, %s589
      %p593 = scmp.eq.s32.totalorder %s30, 0
      %p594 = por %p592, %p593
      %p595 = scmp.ne.s32.totalorder %s587, %s589
      %p596 = scmp.eq.s32.totalorder %s35, 3
      %p597 = por %p595, %p596
      %p598 = scmp.ne.s32.totalorder %s589, %s590
      %p599 = scmp.eq.s32.totalorder %s35, 0
      %p600 = por %p598, %p599
      %p601 = scmp.ne.s32.totalorder %s589, %s590
      %p602 = scmp.eq.s32.totalorder %s36, 3
      %p603 = por %p601, %p602
      %p605 = scmp.ne.s32.totalorder %s590, %s604
      %p606 = scmp.eq.s32.totalorder %s36, 0
      %p607 = por %p605, %p606
      %s609 = sadd.s32 %s608, 1
      %p612 = scmp.eq.s32.totalorder %s30, 3
      %p613 = scmp.ne.s32.totalorder %s608, %s610
      %p614 = scmp.eq.s32.totalorder %s30, 0
      %p615 = por %p613, %p614
      %p616 = scmp.ne.s32.totalorder %s608, %s610
      %p617 = scmp.eq.s32.totalorder %s35, 3
      %p618 = por %p616, %p617
      %p619 = scmp.ne.s32.totalorder %s610, %s611
      %p620 = scmp.eq.s32.totalorder %s35, 0
      %p621 = por %p619, %p620
      %p622 = scmp.ne.s32.totalorder %s610, %s611
      %p623 = scmp.eq.s32.totalorder %s36, 3
      %p624 = por %p622, %p623
      %p626 = scmp.ne.s32.totalorder %s611, %s625
      %p627 = scmp.eq.s32.totalorder %s36, 0
      %p628 = por %p626, %p627
      %p629 = scmp.le.s32.totalorder 1, %s30
      %p630 = scmp.lt.s32.totalorder %s30, 5
      %p631 = pnand %p629, %p630
      %p632 = pneg %p631
      // Predicated region
      $region9: #{tpu_custom_call.1} parent=5 // pred_check
        _
      $region10: #{tpu_custom_call.1} parent=5 // pred_check_branch
        %634 = sbr.rel (%p631) target = $region12
      $region11: #{tpu_custom_call.1} parent=5 // pred_region
        %s635 = ssub.s32 %s30, 1
        // Predicated region
        $region13: #{tpu_custom_call.1} parent=11 // pred_check
          %p636 = pneg %p141
        $region14: #{tpu_custom_call.1} parent=11 // pred_check_branch
          %638 = sbr.rel (%p636) target = $region16
        $region15: #{tpu_custom_call.1} parent=11 // pred_region
          _
        $region16: #{tpu_custom_call.1} parent=11 // pred_fallthru
          _
        // Predicated region
        $region17: #{tpu_custom_call.1} parent=11 // pred_check
          %p639 = pneg %p162
        $region18: #{tpu_custom_call.1} parent=11 // pred_check_branch
          %641 = sbr.rel (%p639) target = $region20
        $region19: #{tpu_custom_call.1} parent=11 // pred_region
          _
        $region20: #{tpu_custom_call.1} parent=11 // pred_fallthru
          _
        // Predicated region
        $region21: #{tpu_custom_call.1} parent=11 // pred_check
          %p642 = pneg %p183
        $region22: #{tpu_custom_call.1} parent=11 // pred_check_branch
          %644 = sbr.rel (%p642) target = $region24
        $region23: #{tpu_custom_call.1} parent=11 // pred_region
          _
        $region24: #{tpu_custom_call.1} parent=11 // pred_fallthru
          _
        // Predicated region
        $region25: #{tpu_custom_call.1} parent=11 // pred_check
          %p645 = pneg %p204
        $region26: #{tpu_custom_call.1} parent=11 // pred_check_branch
          %647 = sbr.rel (%p645) target = $region28
        $region27: #{tpu_custom_call.1} parent=11 // pred_region
          _
        $region28: #{tpu_custom_call.1} parent=11 // pred_fallthru
          _
        // Predicated region
        $region29: #{tpu_custom_call.1} parent=11 // pred_check
          %p648 = pneg %p537
        $region30: #{tpu_custom_call.1} parent=11 // pred_check_branch
          %650 = sbr.rel (%p648) target = $region32
        $region31: #{tpu_custom_call.1} parent=11 // pred_region
          _
        $region32: #{tpu_custom_call.1} parent=11 // pred_fallthru
          _
        // Predicated region
        $region33: #{tpu_custom_call.1} parent=11 // pred_check
          %p651 = pneg %p558
        $region34: #{tpu_custom_call.1} parent=11 // pred_check_branch
          %653 = sbr.rel (%p651) target = $region36
        $region35: #{tpu_custom_call.1} parent=11 // pred_region
          _
        $region36: #{tpu_custom_call.1} parent=11 // pred_fallthru
          _
        // Predicated region
        $region37: #{tpu_custom_call.1} parent=11 // pred_check
          %p654 = pneg %p579
        $region38: #{tpu_custom_call.1} parent=11 // pred_check_branch
          %656 = sbr.rel (%p654) target = $region40
        $region39: #{tpu_custom_call.1} parent=11 // pred_region
          _
        $region40: #{tpu_custom_call.1} parent=11 // pred_fallthru
          _
        // Predicated region
        $region41: #{tpu_custom_call.1} parent=11 // pred_check
          %p657 = pneg %p600
        $region42: #{tpu_custom_call.1} parent=11 // pred_check_branch
          %659 = sbr.rel (%p657) target = $region44
        $region43: #{tpu_custom_call.1} parent=11 // pred_region
          _
        $region44: #{tpu_custom_call.1} parent=11 // pred_fallthru
          _
      $region12: #{tpu_custom_call.1} parent=5 // pred_fallthru
        _
      %p660 = scmp.lt.s32.totalorder %s30, 4
      // Predicated region
      $region45: #{tpu_custom_call.1} parent=5 // pred_check
        %p661 = pneg %p660
      $region46: #{tpu_custom_call.1} parent=5 // pred_check_branch
        %663 = sbr.rel (%p661) target = $region48
      $region47: #{tpu_custom_call.1} parent=5 // pred_region
        // Predicated region
        $region49: #{tpu_custom_call.1} parent=47 // pred_check
          %p664 = pneg %p62
        $region50: #{tpu_custom_call.1} parent=47 // pred_check_branch
          %666 = sbr.rel (%p664) target = $region52
        $region51: #{tpu_custom_call.1} parent=47 // pred_region
          %s667 = smul.u32 16, %s38
          %p668 = scmp.lt.s32.totalorder %s667, 31
          %s669 = scalar_select %p668, %s667, 31
          %s670 = smul.addr %s669, 8
          %s671 = scalar_lea.vmem %s0, %s670
          %s672 = smul.u32 16, %s38
        $region52: #{tpu_custom_call.1} parent=47 // pred_fallthru
          _
        // Predicated region
        $region53: #{tpu_custom_call.1} parent=47 // pred_check
          %p673 = pneg %p88
        $region54: #{tpu_custom_call.1} parent=47 // pred_check_branch
          %675 = sbr.rel (%p673) target = $region56
        $region55: #{tpu_custom_call.1} parent=47 // pred_region
          %s676 = smul.u32 16, %s38
          %p677 = scmp.lt.s32.totalorder %s676, 31
          %s678 = scalar_select %p677, %s676, 31
          %s679 = smul.addr %s678, 8
          %s680 = scalar_lea.vmem %s1, %s679
          %s681 = smul.u32 16, %s38
        $region56: #{tpu_custom_call.1} parent=47 // pred_fallthru
          _
        // Predicated region
        $region57: #{tpu_custom_call.1} parent=47 // pred_check
          %p682 = pneg %p114
        $region58: #{tpu_custom_call.1} parent=47 // pred_check_branch
          %684 = sbr.rel (%p682) target = $region60
        $region59: #{tpu_custom_call.1} parent=47 // pred_region
          %p685 = scmp.lt.s32.totalorder %s38, 1
          %s686 = scalar_select %p685, %s38, 1
          %s687 = scalar_lea.vmem %s2, %s686
        $region60: #{tpu_custom_call.1} parent=47 // pred_fallthru
          _
        // Predicated region
        $region61: #{tpu_custom_call.1} parent=47 // pred_check
          %p688 = pneg %p224
        $region62: #{tpu_custom_call.1} parent=47 // pred_check_branch
          %690 = sbr.rel (%p688) target = $region64
        $region63: #{tpu_custom_call.1} parent=47 // pred_region
          %p691 = scmp.lt.s32.totalorder %s37, 1
          %s692 = scalar_select %p691, %s37, 1
          %s693 = smul.addr %s692, 4
          %s694 = smul.addr %s693, 8
          %s695 = scalar_lea.vmem %s7, %s694
        $region64: #{tpu_custom_call.1} parent=47 // pred_fallthru
          _
        // Predicated region
        $region65: #{tpu_custom_call.1} parent=47 // pred_check
          %p696 = pneg %p250
        $region66: #{tpu_custom_call.1} parent=47 // pred_check_branch
          %698 = sbr.rel (%p696) target = $region68
        $region67: #{tpu_custom_call.1} parent=47 // pred_region
          %p699 = scmp.lt.s32.totalorder %s37, 1
          %s700 = scalar_select %p699, %s37, 1
          %s701 = smul.addr %s700, 4
          %s702 = smul.addr %s701, 8
          %s703 = scalar_lea.vmem %s8, %s702
        $region68: #{tpu_custom_call.1} parent=47 // pred_fallthru
          _
        // Predicated region
        $region69: #{tpu_custom_call.1} parent=47 // pred_check
          %p704 = pneg %p276
        $region70: #{tpu_custom_call.1} parent=47 // pred_check_branch
          %706 = sbr.rel (%p704) target = $region72
        $region71: #{tpu_custom_call.1} parent=47 // pred_region
          %p707 = scmp.lt.s32.totalorder %s37, 1
          %s708 = scalar_select %p707, %s37, 1
          %s709 = scalar_lea.vmem %s9, %s708
        $region72: #{tpu_custom_call.1} parent=47 // pred_fallthru
          _
        // Predicated region
        $region73: #{tpu_custom_call.1} parent=47 // pred_check
          %p710 = pneg %p302
        $region74: #{tpu_custom_call.1} parent=47 // pred_check_branch
          %712 = sbr.rel (%p710) target = $region76
        $region75: #{tpu_custom_call.1} parent=47 // pred_region
          %p713 = scmp.lt.s32.totalorder %s37, 1
          %s714 = scalar_select %p713, %s37, 1
          %s715 = smul.addr %s714, 8
          %s716 = smul.addr %s715, 8
          %s717 = scalar_lea.vmem %s10, %s716
        $region76: #{tpu_custom_call.1} parent=47 // pred_fallthru
          _
        // Predicated region
        $region77: #{tpu_custom_call.1} parent=47 // pred_check
          %p718 = pneg %p328
        $region78: #{tpu_custom_call.1} parent=47 // pred_check_branch
          %720 = sbr.rel (%p718) target = $region80
        $region79: #{tpu_custom_call.1} parent=47 // pred_region
          %p721 = scmp.lt.s32.totalorder %s37, 1
          %s722 = scalar_select %p721, %s37, 1
          %s723 = scalar_lea.vmem %s11, %s722
        $region80: #{tpu_custom_call.1} parent=47 // pred_fallthru
          _
        // Predicated region
        $region81: #{tpu_custom_call.1} parent=47 // pred_check
          %p724 = pneg %p354
        $region82: #{tpu_custom_call.1} parent=47 // pred_check_branch
          %726 = sbr.rel (%p724) target = $region84
        $region83: #{tpu_custom_call.1} parent=47 // pred_region
          %p727 = scmp.lt.s32.totalorder %s37, 1
          %s728 = scalar_select %p727, %s37, 1
          %s729 = smul.addr %s728, 8
          %s730 = smul.addr %s729, 8
          %s731 = scalar_lea.vmem %s12, %s730
        $region84: #{tpu_custom_call.1} parent=47 // pred_fallthru
          _
        // Predicated region
        $region85: #{tpu_custom_call.1} parent=47 // pred_check
          %p732 = pneg %p380
        $region86: #{tpu_custom_call.1} parent=47 // pred_check_branch
          %734 = sbr.rel (%p732) target = $region88
        $region87: #{tpu_custom_call.1} parent=47 // pred_region
          %p735 = scmp.lt.s32.totalorder %s37, 1
          %s736 = scalar_select %p735, %s37, 1
          %s737 = scalar_lea.vmem %s13, %s736
        $region88: #{tpu_custom_call.1} parent=47 // pred_fallthru
          _
        // Predicated region
        $region89: #{tpu_custom_call.1} parent=47 // pred_check
          %p738 = pneg %p406
        $region90: #{tpu_custom_call.1} parent=47 // pred_check_branch
          %740 = sbr.rel (%p738) target = $region92
        $region91: #{tpu_custom_call.1} parent=47 // pred_region
          %p741 = scmp.lt.s32.totalorder %s37, 1
          %s742 = scalar_select %p741, %s37, 1
          %s743 = smul.addr %s742, 8
          %s744 = smul.addr %s743, 8
          %s745 = scalar_lea.vmem %s14, %s744
        $region92: #{tpu_custom_call.1} parent=47 // pred_fallthru
          _
        // Predicated region
        $region93: #{tpu_custom_call.1} parent=47 // pred_check
          %p746 = pneg %p432
        $region94: #{tpu_custom_call.1} parent=47 // pred_check_branch
          %748 = sbr.rel (%p746) target = $region96
        $region95: #{tpu_custom_call.1} parent=47 // pred_region
          %p749 = scmp.lt.s32.totalorder %s37, 1
          %s750 = scalar_select %p749, %s37, 1
          %s751 = scalar_lea.vmem %s15, %s750
        $region96: #{tpu_custom_call.1} parent=47 // pred_fallthru
          _
        // Predicated region
        $region97: #{tpu_custom_call.1} parent=47 // pred_check
          %p752 = pneg %p458
        $region98: #{tpu_custom_call.1} parent=47 // pred_check_branch
          %754 = sbr.rel (%p752) target = $region100
        $region99: #{tpu_custom_call.1} parent=47 // pred_region
          %p755 = scmp.lt.s32.totalorder %s37, 1
          %s756 = scalar_select %p755, %s37, 1
          %s757 = smul.addr %s756, 4
          %s758 = smul.addr %s757, 8
          %s759 = scalar_lea.vmem %s16, %s758
        $region100: #{tpu_custom_call.1} parent=47 // pred_fallthru
          _
        // Predicated region
        $region101: #{tpu_custom_call.1} parent=47 // pred_check
          %p760 = pneg %p484
        $region102: #{tpu_custom_call.1} parent=47 // pred_check_branch
          %762 = sbr.rel (%p760) target = $region104
        $region103: #{tpu_custom_call.1} parent=47 // pred_region
          %p763 = scmp.lt.s32.totalorder %s37, 1
          %s764 = scalar_select %p763, %s37, 1
          %s765 = smul.addr %s764, 8
          %s766 = smul.addr %s765, 8
          %s767 = scalar_lea.vmem %s17, %s766
        $region104: #{tpu_custom_call.1} parent=47 // pred_fallthru
          _
        // Predicated region
        $region105: #{tpu_custom_call.1} parent=47 // pred_check
          %p768 = pneg %p510
        $region106: #{tpu_custom_call.1} parent=47 // pred_check_branch
          %770 = sbr.rel (%p768) target = $region108
        $region107: #{tpu_custom_call.1} parent=47 // pred_region
          %p771 = scmp.lt.s32.totalorder %s37, 1
          %s772 = scalar_select %p771, %s37, 1
          %s773 = scalar_lea.vmem %s18, %s772
        $region108: #{tpu_custom_call.1} parent=47 // pred_fallthru
          _
      $region48: #{tpu_custom_call.1} parent=5 // pred_fallthru
        _
      %p774 = scmp.le.s32.totalorder 1, %s30
      %p775 = scmp.lt.s32.totalorder %s30, 5
      %p776 = pnand %p774, %p775
      %p777 = pneg %p776
      // Predicated region
      $region109: #{tpu_custom_call.1} parent=5 // pred_check
        _
      $region110: #{tpu_custom_call.1} parent=5 // pred_check_branch
        %779 = sbr.rel (%p776) target = $region112
      $region111: #{tpu_custom_call.1} parent=5 // pred_region
        %s780 = ssub.s32 %s30, 1
        %s781 = smul.u32 16, %s40
        %p782 = scmp.lt.s32.totalorder %s781, 31
        %s783 = scalar_select %p782, %s781, 31
        %s784 = smul.addr %s783, 8
        %s785 = scalar_lea.vmem %s0, %s784
        %p786 = pneg %p68
        %p787 = pneg %p65
        %s788 = smul.u32 16, %s40
        %p789 = scmp.lt.s32.totalorder %s788, 31
        %s790 = scalar_select %p789, %s788, 31
        %s791 = smul.addr %s790, 8
        %s792 = scalar_lea.vmem %s1, %s791
        %p793 = pneg %p94
        %p794 = pneg %p91
        %p795 = scmp.lt.s32.totalorder %s40, 1
        %s796 = scalar_select %p795, %s40, 1
        %s797 = scalar_lea.vmem %s2, %s796
        %p798 = pneg %p120
        %p799 = pneg %p117
        %p800 = pneg %p141
        %p801 = pneg %p138
        %p802 = pneg %p162
        %p803 = pneg %p159
        %p804 = pneg %p183
        %p805 = pneg %p180
        %p806 = pneg %p204
        %p807 = pneg %p201
        %p808 = scmp.lt.s32.totalorder %s39, 1
        %s809 = scalar_select %p808, %s39, 1
        %s810 = smul.addr %s809, 4
        %s811 = smul.addr %s810, 8
        %s812 = scalar_lea.vmem %s7, %s811
        %p813 = pneg %p230
        %p814 = pneg %p227
        %p815 = scmp.lt.s32.totalorder %s39, 1
        %s816 = scalar_select %p815, %s39, 1
        %s817 = smul.addr %s816, 4
        %s818 = smul.addr %s817, 8
        %s819 = scalar_lea.vmem %s8, %s818
        %p820 = pneg %p256
        %p821 = pneg %p253
        %p822 = scmp.lt.s32.totalorder %s39, 1
        %s823 = scalar_select %p822, %s39, 1
        %s824 = scalar_lea.vmem %s9, %s823
        %p825 = pneg %p282
        %p826 = pneg %p279
        %p827 = scmp.lt.s32.totalorder %s39, 1
        %s828 = scalar_select %p827, %s39, 1
        %s829 = smul.addr %s828, 8
        %s830 = smul.addr %s829, 8
        %s831 = scalar_lea.vmem %s10, %s830
        %p832 = pneg %p308
        %p833 = pneg %p305
        %p834 = scmp.lt.s32.totalorder %s39, 1
        %s835 = scalar_select %p834, %s39, 1
        %s836 = scalar_lea.vmem %s11, %s835
        %p837 = pneg %p334
        %p838 = pneg %p331
        %p839 = scmp.lt.s32.totalorder %s39, 1
        %s840 = scalar_select %p839, %s39, 1
        %s841 = smul.addr %s840, 8
        %s842 = smul.addr %s841, 8
        %s843 = scalar_lea.vmem %s12, %s842
        %p844 = pneg %p360
        %p845 = pneg %p357
        %p846 = scmp.lt.s32.totalorder %s39, 1
        %s847 = scalar_select %p846, %s39, 1
        %s848 = scalar_lea.vmem %s13, %s847
        %p849 = pneg %p386
        %p850 = pneg %p383
        %p851 = scmp.lt.s32.totalorder %s39, 1
        %s852 = scalar_select %p851, %s39, 1
        %s853 = smul.addr %s852, 8
        %s854 = smul.addr %s853, 8
        %s855 = scalar_lea.vmem %s14, %s854
        %p856 = pneg %p412
        %p857 = pneg %p409
        %p858 = scmp.lt.s32.totalorder %s39, 1
        %s859 = scalar_select %p858, %s39, 1
        %s860 = scalar_lea.vmem %s15, %s859
        %p861 = pneg %p438
        %p862 = pneg %p435
        %p863 = scmp.lt.s32.totalorder %s39, 1
        %s864 = scalar_select %p863, %s39, 1
        %s865 = smul.addr %s864, 4
        %s866 = smul.addr %s865, 8
        %s867 = scalar_lea.vmem %s16, %s866
        %p868 = pneg %p464
        %p869 = pneg %p461
        %p870 = scmp.lt.s32.totalorder %s39, 1
        %s871 = scalar_select %p870, %s39, 1
        %s872 = smul.addr %s871, 8
        %s873 = smul.addr %s872, 8
        %s874 = scalar_lea.vmem %s17, %s873
        %p875 = pneg %p490
        %p876 = pneg %p487
        %p877 = scmp.lt.s32.totalorder %s39, 1
        %s878 = scalar_select %p877, %s39, 1
        %s879 = scalar_lea.vmem %s18, %s878
        %p880 = pneg %p516
        %p881 = pneg %p513
        %p882 = pneg %p537
        %p883 = pneg %p534
        %p884 = pneg %p558
        %p885 = pneg %p555
        %p886 = pneg %p579
        %p887 = pneg %p576
        %p888 = pneg %p600
        %p889 = pneg %p597
        %p890 = pneg %p621
        %p891 = pneg %p618
        %s892 = smul.u32 16, %s40
        %p893 = scmp.lt.s32.totalorder %s892, 31
        %s894 = scalar_select %p893, %s892, 31
        %s895 = smul.addr %s894, 8
        %s896 = scalar_lea.vmem %s0, %s895
        %s897 = smul.u32 16, %s40
        %s898 = smul.u32 16, %s40
        %p899 = scmp.lt.s32.totalorder %s898, 31
        %s900 = scalar_select %p899, %s898, 31
        %s901 = smul.addr %s900, 8
        %s902 = scalar_lea.vmem %s1, %s901
        %s903 = smul.u32 16, %s40
        %p904 = scmp.lt.s32.totalorder %s40, 1
        %s905 = scalar_select %p904, %s40, 1
        %s906 = scalar_lea.vmem %s2, %s905
        %p907 = scmp.lt.s32.totalorder %s39, 1
        %s908 = scalar_select %p907, %s39, 1
        %s909 = smul.addr %s908, 4
        %s910 = smul.addr %s909, 8
        %s911 = scalar_lea.vmem %s7, %s910
        %p912 = scmp.lt.s32.totalorder %s39, 1
        %s913 = scalar_select %p912, %s39, 1
        %s914 = smul.addr %s913, 4
        %s915 = smul.addr %s914, 8
        %s916 = scalar_lea.vmem %s8, %s915
        %p917 = scmp.lt.s32.totalorder %s39, 1
        %s918 = scalar_select %p917, %s39, 1
        %s919 = scalar_lea.vmem %s9, %s918
        %p920 = scmp.lt.s32.totalorder %s39, 1
        %s921 = scalar_select %p920, %s39, 1
        %s922 = smul.addr %s921, 8
        %s923 = smul.addr %s922, 8
        %s924 = scalar_lea.vmem %s10, %s923
        %p925 = scmp.lt.s32.totalorder %s39, 1
        %s926 = scalar_select %p925, %s39, 1
        %s927 = scalar_lea.vmem %s11, %s926
        %p928 = scmp.lt.s32.totalorder %s39, 1
        %s929 = scalar_select %p928, %s39, 1
        %s930 = smul.addr %s929, 8
        %s931 = smul.addr %s930, 8
        %s932 = scalar_lea.vmem %s12, %s931
        %p933 = scmp.lt.s32.totalorder %s39, 1
        %s934 = scalar_select %p933, %s39, 1
        %s935 = scalar_lea.vmem %s13, %s934
        %p936 = scmp.lt.s32.totalorder %s39, 1
        %s937 = scalar_select %p936, %s39, 1
        %s938 = smul.addr %s937, 8
        %s939 = smul.addr %s938, 8
        %s940 = scalar_lea.vmem %s14, %s939
        %p941 = scmp.lt.s32.totalorder %s39, 1
        %s942 = scalar_select %p941, %s39, 1
        %s943 = scalar_lea.vmem %s15, %s942
        %p944 = scmp.lt.s32.totalorder %s39, 1
        %s945 = scalar_select %p944, %s39, 1
        %s946 = smul.addr %s945, 4
        %s947 = smul.addr %s946, 8
        %s948 = scalar_lea.vmem %s16, %s947
        %p949 = scmp.lt.s32.totalorder %s39, 1
        %s950 = scalar_select %p949, %s39, 1
        %s951 = smul.addr %s950, 8
        %s952 = smul.addr %s951, 8
        %s953 = scalar_lea.vmem %s17, %s952
        %p954 = scmp.lt.s32.totalorder %s39, 1
        %s955 = scalar_select %p954, %s39, 1
        %s956 = scalar_lea.vmem %s18, %s955
        %p958 = scmp.eq.s32.totalorder %s39, 0
        %p959 = scmp.eq.s32.totalorder %s40, 0
        %p960 = pnand %p958, %p959
        %p961 = pneg %p960
        // Predicated region
        $region113: #{tpu_custom_call.1} parent=111 // pred_check
          _
        $region114: #{tpu_custom_call.1} parent=111 // pred_check_branch
          %963 = sbr.rel (%p960) target = $region116
        $region115: #{tpu_custom_call.1} parent=111 // pred_region
          %v964 = vld [vmem:[%s6] sm:$0xff]
          %v965 = vld [vmem:[%s6 + $0x8] sm:$0xff]
          %v966 = vld [vmem:[%s6 + $0x10] sm:$0xff]
          %v967 = vld [vmem:[%s6 + $0x18] sm:$0xff]
          %vm968 = vcmask 261120
          %969 = vst.msk [vmem:[#allocation2] sm:$0xff] %vm968, %v964
          %970 = vst.msk [vmem:[#allocation2 + $0x8] sm:$0xff] %vm968, %v965
          %971 = vst.msk [vmem:[#allocation2 + $0x10] sm:$0xff] %vm968, %v966
          %972 = vst.msk [vmem:[#allocation2 + $0x18] sm:$0xff] %vm968, %v967
        $region116: #{tpu_custom_call.1} parent=111 // pred_fallthru
          _
        // Predicated region
        $region117: #{tpu_custom_call.1} parent=111 // pred_check
          %p973 = pneg %p959
        $region118: #{tpu_custom_call.1} parent=111 // pred_check_branch
          %975 = sbr.rel (%p973) target = $region120
        $region119: #{tpu_custom_call.1} parent=111 // pred_region
          %v976 = vld [vmem:[#allocation2] sm:$0xff]
          %v977 = vld [vmem:[#allocation2 + $0x8] sm:$0xff]
          %v978 = vld [vmem:[#allocation2 + $0x10] sm:$0xff]
          %v979 = vld [vmem:[#allocation2 + $0x18] sm:$0xff]
          %v980 = vld [vmem:[%s911] sm:$0xff]
          %v981 = vld [vmem:[%s911 + $0x8] sm:$0xff]
          %v982 = vld [vmem:[%s911 + $0x10] sm:$0xff]
          %v983 = vld [vmem:[%s911 + $0x18] sm:$0xff]
          %vm984 = vcmask 261120
          %v986 = vsel %vm984, %v976, 0
          %v989 = vsel %vm984, %v977, 0
          %v992 = vsel %vm984, %v978, 0
          %v995 = vsel %vm984, %v979, 0
          %997 = vmatpush.msra.mxu0 0.0
          %998 = vmatpush.msra.mxu0 0.0
          %999 = vmatpush.msra.mxu0 0.0
          %1000 = vmatpush.msra.mxu0 0.0
          %1001 = vmatpush.msra.mxu0 0.0
          %1002 = vmatpush.msra.mxu0 0.0
          %1003 = vmatpush.msra.mxu0 0.0
          %1004 = vmatpush.msra.mxu0 0.0
          %1005 = vmatpush.msra.mxu0 0.0
          %1006 = vmatpush.msra.mxu0 0.0
          %1007 = vmatpush.msra.mxu0 0.0
          %1008 = vmatpush.msra.mxu0 0.0
          %1009 = vmatpush.msra.mxu0 %v983
          %1010 = vmatpush.msra.mxu0 %v982
          %1011 = vmatpush.msra.mxu0 %v981
          %1012 = vmatpush.msra.mxu0 %v980
          %1013 = vmatmul.f32.gmra.mxu0 %v986
          %v1014 = vpop.f32.mrf.mxu0
          %v1015 = vadd.f32 0.0, %v1014
          %1016 = vmatmul.f32.gmra.mxu0 %v989
          %v1017 = vpop.f32.mrf.mxu0
          %v1018 = vadd.f32 0.0, %v1017
          %1019 = vmatmul.f32.gmra.mxu0 %v992
          %v1020 = vpop.f32.mrf.mxu0
          %v1021 = vadd.f32 0.0, %v1020
          %1022 = vmatmul.f32.gmra.mxu0 %v995
          %v1023 = vpop.f32.mrf.mxu0
          %v1024 = vadd.f32 0.0, %v1023
          %1025 = vdwg.mxu0
          %v1026 = vpack.c.bf16 %v1015, %v1015
          %v1027 = vpack.c.bf16 %v1018, %v1018
          %v1028 = vpack.c.bf16 %v1021, %v1021
          %v1029 = vpack.c.bf16 %v1024, %v1024
          %vm1030 = vcmask 519168
          %1031 = vst.msk [vmem:[#allocation3] sm:$0xf] %vm1030, %v1026
          %1032 = vst.msk [vmem:[#allocation3 + $0x4] sm:$0xf] %vm1030, %v1027
          %1033 = vst.msk [vmem:[#allocation3 + $0x8] sm:$0xf] %vm1030, %v1028
          %1034 = vst.msk [vmem:[#allocation3 + $0xc] sm:$0xf] %vm1030, %v1029
          %vm1035 = vcmask 523264
          %1036 = vst.msk [vmem:[#allocation4] sm:$0xff] %vm1035, 0.0
          %1037 = vst.msk [vmem:[#allocation4 + $0x8] sm:$0xff] %vm1035, 0.0
          %1038 = vst.msk [vmem:[#allocation4 + $0x10] sm:$0xff] %vm1035, 0.0
          %1039 = vst.msk [vmem:[#allocation4 + $0x18] sm:$0xff] %vm1035, 0.0
        $region120: #{tpu_custom_call.1} parent=111 // pred_fallthru
          _
        %v1040 = vld [vmem:[%s896] sm:$0xff]
        %v1041 = vld [vmem:[%s896 + $0x8] sm:$0xff]
        %v1042 = vld [vmem:[%s896 + $0x10] sm:$0xff]
        %v1043 = vld [vmem:[%s896 + $0x18] sm:$0xff]
        %v1044 = vld [vmem:[%s896 + $0x20] sm:$0xff]
        %v1045 = vld [vmem:[%s896 + $0x28] sm:$0xff]
        %v1046 = vld [vmem:[%s896 + $0x30] sm:$0xff]
        %v1047 = vld [vmem:[%s896 + $0x38] sm:$0xff]
        %v1048 = vld [vmem:[%s896 + $0x40] sm:$0xff]
        %v1049 = vld [vmem:[%s896 + $0x48] sm:$0xff]
        %v1050 = vld [vmem:[%s896 + $0x50] sm:$0xff]
        %v1051 = vld [vmem:[%s896 + $0x58] sm:$0xff]
        %v1052 = vld [vmem:[%s896 + $0x60] sm:$0xff]
        %v1053 = vld [vmem:[%s896 + $0x68] sm:$0xff]
        %v1054 = vld [vmem:[%s896 + $0x70] sm:$0xff]
        %v1055 = vld [vmem:[%s896 + $0x78] sm:$0xff]
        %v1056 = vld [vmem:[%s3] sm:$0x1]
        %v1057 = vld [vmem:[%s3 + $0x1] sm:$0x1]
        %v1058 = vld [vmem:[%s3 + $0x2] sm:$0x1]
        %1060 = vset.pattern.permute.xlu0 0
        %1061 = vperm.xlu0 %1060, %v1040
        %v1062 = vpop.permute.xlu0 %1061
        %1065 = vset.pattern.permute.xlu0 0
        %1066 = vperm.xlu0 %1065, %v1041
        %v1067 = vpop.permute.xlu0 %1066
        %1070 = vset.pattern.permute.xlu0 0
        %1071 = vperm.xlu0 %1070, %v1042
        %v1072 = vpop.permute.xlu0 %1071
        %1075 = vset.pattern.permute.xlu0 0
        %1076 = vperm.xlu0 %1075, %v1043
        %v1077 = vpop.permute.xlu0 %1076
        %1080 = vset.pattern.permute.xlu0 0
        %1081 = vperm.xlu0 %1080, %v1044
        %v1082 = vpop.permute.xlu0 %1081
        %1085 = vset.pattern.permute.xlu0 0
        %1086 = vperm.xlu0 %1085, %v1045
        %v1087 = vpop.permute.xlu0 %1086
        %1090 = vset.pattern.permute.xlu0 0
        %1091 = vperm.xlu0 %1090, %v1046
        %v1092 = vpop.permute.xlu0 %1091
        %1095 = vset.pattern.permute.xlu0 0
        %1096 = vperm.xlu0 %1095, %v1047
        %v1097 = vpop.permute.xlu0 %1096
        %1100 = vset.pattern.permute.xlu0 0
        %1101 = vperm.xlu0 %1100, %v1048
        %v1102 = vpop.permute.xlu0 %1101
        %1105 = vset.pattern.permute.xlu0 0
        %1106 = vperm.xlu0 %1105, %v1049
        %v1107 = vpop.permute.xlu0 %1106
        %1110 = vset.pattern.permute.xlu0 0
        %1111 = vperm.xlu0 %1110, %v1050
        %v1112 = vpop.permute.xlu0 %1111
        %1115 = vset.pattern.permute.xlu0 0
        %1116 = vperm.xlu0 %1115, %v1051
        %v1117 = vpop.permute.xlu0 %1116
        %1120 = vset.pattern.permute.xlu0 0
        %1121 = vperm.xlu0 %1120, %v1052
        %v1122 = vpop.permute.xlu0 %1121
        %1125 = vset.pattern.permute.xlu0 0
        %1126 = vperm.xlu0 %1125, %v1053
        %v1127 = vpop.permute.xlu0 %1126
        %1130 = vset.pattern.permute.xlu0 0
        %1131 = vperm.xlu0 %1130, %v1054
        %v1132 = vpop.permute.xlu0 %1131
        %1135 = vset.pattern.permute.xlu0 0
        %1136 = vperm.xlu0 %1135, %v1055
        %v1137 = vpop.permute.xlu0 %1136
        %v1139 = vperm.slane %v1057, 0
        %v1140 = vmul.f32 %v1062, %v1139
        %v1141 = vmul.f32 %v1067, %v1139
        %v1142 = vmul.f32 %v1072, %v1139
        %v1143 = vmul.f32 %v1077, %v1139
        %v1144 = vmul.f32 %v1082, %v1139
        %v1145 = vmul.f32 %v1087, %v1139
        %v1146 = vmul.f32 %v1092, %v1139
        %v1147 = vmul.f32 %v1097, %v1139
        %v1148 = vmul.f32 %v1102, %v1139
        %v1149 = vmul.f32 %v1107, %v1139
        %v1150 = vmul.f32 %v1112, %v1139
        %v1151 = vmul.f32 %v1117, %v1139
        %v1152 = vmul.f32 %v1122, %v1139
        %v1153 = vmul.f32 %v1127, %v1139
        %v1154 = vmul.f32 %v1132, %v1139
        %v1155 = vmul.f32 %v1137, %v1139
        %1156 = vset.pattern.permute.xlu0 1
        %1157 = vperm.xlu0 %1156, %v1040
        %v1158 = vpop.permute.xlu0 %1157
        %1160 = vset.pattern.permute.xlu0 1
        %1161 = vperm.xlu0 %1160, %v1041
        %v1162 = vpop.permute.xlu0 %1161
        %1164 = vset.pattern.permute.xlu0 1
        %1165 = vperm.xlu0 %1164, %v1042
        %v1166 = vpop.permute.xlu0 %1165
        %1168 = vset.pattern.permute.xlu0 1
        %1169 = vperm.xlu0 %1168, %v1043
        %v1170 = vpop.permute.xlu0 %1169
        %1172 = vset.pattern.permute.xlu0 1
        %1173 = vperm.xlu0 %1172, %v1044
        %v1174 = vpop.permute.xlu0 %1173
        %1176 = vset.pattern.permute.xlu0 1
        %1177 = vperm.xlu0 %1176, %v1045
        %v1178 = vpop.permute.xlu0 %1177
        %1180 = vset.pattern.permute.xlu0 1
        %1181 = vperm.xlu0 %1180, %v1046
        %v1182 = vpop.permute.xlu0 %1181
        %1184 = vset.pattern.permute.xlu0 1
        %1185 = vperm.xlu0 %1184, %v1047
        %v1186 = vpop.permute.xlu0 %1185
        %1188 = vset.pattern.permute.xlu0 1
        %1189 = vperm.xlu0 %1188, %v1048
        %v1190 = vpop.permute.xlu0 %1189
        %1192 = vset.pattern.permute.xlu0 1
        %1193 = vperm.xlu0 %1192, %v1049
        %v1194 = vpop.permute.xlu0 %1193
        %1196 = vset.pattern.permute.xlu0 1
        %1197 = vperm.xlu0 %1196, %v1050
        %v1198 = vpop.permute.xlu0 %1197
        %1200 = vset.pattern.permute.xlu0 1
        %1201 = vperm.xlu0 %1200, %v1051
        %v1202 = vpop.permute.xlu0 %1201
        %1204 = vset.pattern.permute.xlu0 1
        %1205 = vperm.xlu0 %1204, %v1052
        %v1206 = vpop.permute.xlu0 %1205
        %1208 = vset.pattern.permute.xlu0 1
        %1209 = vperm.xlu0 %1208, %v1053
        %v1210 = vpop.permute.xlu0 %1209
        %1212 = vset.pattern.permute.xlu0 1
        %1213 = vperm.xlu0 %1212, %v1054
        %v1214 = vpop.permute.xlu0 %1213
        %1216 = vset.pattern.permute.xlu0 1
        %1217 = vperm.xlu0 %1216, %v1055
        %v1218 = vpop.permute.xlu0 %1217
        %v1220 = vperm.slane %v1058, 0
        %v1221 = vmul.f32 %v1158, %v1220
        %v1222 = vmul.f32 %v1162, %v1220
        %v1223 = vmul.f32 %v1166, %v1220
        %v1224 = vmul.f32 %v1170, %v1220
        %v1225 = vmul.f32 %v1174, %v1220
        %v1226 = vmul.f32 %v1178, %v1220
        %v1227 = vmul.f32 %v1182, %v1220
        %v1228 = vmul.f32 %v1186, %v1220
        %v1229 = vmul.f32 %v1190, %v1220
        %v1230 = vmul.f32 %v1194, %v1220
        %v1231 = vmul.f32 %v1198, %v1220
        %v1232 = vmul.f32 %v1202, %v1220
        %v1233 = vmul.f32 %v1206, %v1220
        %v1234 = vmul.f32 %v1210, %v1220
        %v1235 = vmul.f32 %v1214, %v1220
        %v1236 = vmul.f32 %v1218, %v1220
        %v1237 = vadd.f32 %v1140, %v1221
        %v1238 = vadd.f32 %v1141, %v1222
        %v1239 = vadd.f32 %v1142, %v1223
        %v1240 = vadd.f32 %v1143, %v1224
        %v1241 = vadd.f32 %v1144, %v1225
        %v1242 = vadd.f32 %v1145, %v1226
        %v1243 = vadd.f32 %v1146, %v1227
        %v1244 = vadd.f32 %v1147, %v1228
        %v1245 = vadd.f32 %v1148, %v1229
        %v1246 = vadd.f32 %v1149, %v1230
        %v1247 = vadd.f32 %v1150, %v1231
        %v1248 = vadd.f32 %v1151, %v1232
        %v1249 = vadd.f32 %v1152, %v1233
        %v1250 = vadd.f32 %v1153, %v1234
        %v1251 = vadd.f32 %v1154, %v1235
        %v1252 = vadd.f32 %v1155, %v1236
        %v1253 = vperm.slane %v1056, 0
        %v1254 = vsub.f32 %v1237, %v1253
        %v1255 = vsub.f32 %v1238, %v1253
        %v1256 = vsub.f32 %v1239, %v1253
        %v1257 = vsub.f32 %v1240, %v1253
        %v1258 = vsub.f32 %v1241, %v1253
        %v1259 = vsub.f32 %v1242, %v1253
        %v1260 = vsub.f32 %v1243, %v1253
        %v1261 = vsub.f32 %v1244, %v1253
        %v1262 = vsub.f32 %v1245, %v1253
        %v1263 = vsub.f32 %v1246, %v1253
        %v1264 = vsub.f32 %v1247, %v1253
        %v1265 = vsub.f32 %v1248, %v1253
        %v1266 = vsub.f32 %v1249, %v1253
        %v1267 = vsub.f32 %v1250, %v1253
        %v1268 = vsub.f32 %v1251, %v1253
        %v1269 = vsub.f32 %v1252, %v1253
        %v1270 = vmul.f32 %v1254, -4.5
        %v1271 = vmul.f32 %v1255, -4.5
        %v1272 = vmul.f32 %v1256, -4.5
        %v1273 = vmul.f32 %v1257, -4.5
        %v1274 = vmul.f32 %v1258, -4.5
        %v1275 = vmul.f32 %v1259, -4.5
        %v1276 = vmul.f32 %v1260, -4.5
        %v1277 = vmul.f32 %v1261, -4.5
        %v1278 = vmul.f32 %v1262, -4.5
        %v1279 = vmul.f32 %v1263, -4.5
        %v1280 = vmul.f32 %v1264, -4.5
        %v1281 = vmul.f32 %v1265, -4.5
        %v1282 = vmul.f32 %v1266, -4.5
        %v1283 = vmul.f32 %v1267, -4.5
        %v1284 = vmul.f32 %v1268, -4.5
        %v1285 = vmul.f32 %v1269, -4.5
        %v1286 = vmul.f32 %v1270, %v1254
        %v1287 = vmul.f32 %v1271, %v1255
        %v1288 = vmul.f32 %v1272, %v1256
        %v1289 = vmul.f32 %v1273, %v1257
        %v1290 = vmul.f32 %v1274, %v1258
        %v1291 = vmul.f32 %v1275, %v1259
        %v1292 = vmul.f32 %v1276, %v1260
        %v1293 = vmul.f32 %v1277, %v1261
        %v1294 = vmul.f32 %v1278, %v1262
        %v1295 = vmul.f32 %v1279, %v1263
        %v1296 = vmul.f32 %v1280, %v1264
        %v1297 = vmul.f32 %v1281, %v1265
        %v1298 = vmul.f32 %v1282, %v1266
        %v1299 = vmul.f32 %v1283, %v1267
        %v1300 = vmul.f32 %v1284, %v1268
        %v1301 = vmul.f32 %v1285, %v1269
        %v1302 = vmul.f32 %v1286, 1.442695
        %v1303 = vpow.pop %v1302
        %v1304 = vmul.f32 %v1287, 1.442695
        %v1305 = vpow.pop %v1304
        %v1306 = vmul.f32 %v1288, 1.442695
        %v1307 = vpow.pop %v1306
        %v1308 = vmul.f32 %v1289, 1.442695
        %v1309 = vpow.pop %v1308
        %v1310 = vmul.f32 %v1290, 1.442695
        %v1311 = vpow.pop %v1310
        %v1312 = vmul.f32 %v1291, 1.442695
        %v1313 = vpow.pop %v1312
        %v1314 = vmul.f32 %v1292, 1.442695
        %v1315 = vpow.pop %v1314
        %v1316 = vmul.f32 %v1293, 1.442695
        %v1317 = vpow.pop %v1316
        %v1318 = vmul.f32 %v1294, 1.442695
        %v1319 = vpow.pop %v1318
        %v1320 = vmul.f32 %v1295, 1.442695
        %v1321 = vpow.pop %v1320
        %v1322 = vmul.f32 %v1296, 1.442695
        %v1323 = vpow.pop %v1322
        %v1324 = vmul.f32 %v1297, 1.442695
        %v1325 = vpow.pop %v1324
        %v1326 = vmul.f32 %v1298, 1.442695
        %v1327 = vpow.pop %v1326
        %v1328 = vmul.f32 %v1299, 1.442695
        %v1329 = vpow.pop %v1328
        %v1330 = vmul.f32 %v1300, 1.442695
        %v1331 = vpow.pop %v1330
        %v1332 = vmul.f32 %v1301, 1.442695
        %v1333 = vpow.pop %v1332
        %v1334 = vld [vmem:[%s916] sm:$0xff]
        %v1335 = vld [vmem:[%s916 + $0x8] sm:$0xff]
        %v1336 = vld [vmem:[%s916 + $0x10] sm:$0xff]
        %v1337 = vld [vmem:[%s916 + $0x18] sm:$0xff]
        %v1338 = vld [vmem:[%s919] sm:$0x1]
        %v1340 = vperm.slane %v1338, 0
        %vm1342 = vcmask 261120
        %v1344 = vsel %vm1342, %v1303, 0
        %v1347 = vsel %vm1342, %v1305, 0
        %v1350 = vsel %vm1342, %v1307, 0
        %v1353 = vsel %vm1342, %v1309, 0
        %v1356 = vsel %vm1342, %v1311, 0
        %v1359 = vsel %vm1342, %v1313, 0
        %v1362 = vsel %vm1342, %v1315, 0
        %v1365 = vsel %vm1342, %v1317, 0
        %v1368 = vsel %vm1342, %v1319, 0
        %v1371 = vsel %vm1342, %v1321, 0
        %v1374 = vsel %vm1342, %v1323, 0
        %v1377 = vsel %vm1342, %v1325, 0
        %v1380 = vsel %vm1342, %v1327, 0
        %v1383 = vsel %vm1342, %v1329, 0
        %v1386 = vsel %vm1342, %v1331, 0
        %v1389 = vsel %vm1342, %v1333, 0
        %1391 = vmatpush.msra.mxu0 0.0
        %1392 = vmatpush.msra.mxu0 0.0
        %1393 = vmatpush.msra.mxu0 0.0
        %1394 = vmatpush.msra.mxu0 0.0
        %1395 = vmatpush.msra.mxu0 0.0
        %1396 = vmatpush.msra.mxu0 0.0
        %1397 = vmatpush.msra.mxu0 0.0
        %1398 = vmatpush.msra.mxu0 0.0
        %1399 = vmatpush.msra.mxu0 0.0
        %1400 = vmatpush.msra.mxu0 0.0
        %1401 = vmatpush.msra.mxu0 0.0
        %1402 = vmatpush.msra.mxu0 0.0
        %1403 = vmatpush.msra.mxu0 %v1337
        %1404 = vmatpush.msra.mxu0 %v1336
        %1405 = vmatpush.msra.mxu0 %v1335
        %1406 = vmatpush.msra.mxu0 %v1334
        %1407 = vmatmul.f32.gmra.mxu0 %v1344
        %v1408 = vpop.f32.mrf.mxu0
        %v1409 = vadd.f32 %v1340, %v1408
        %1410 = vmatmul.f32.gmra.mxu0 %v1347
        %v1411 = vpop.f32.mrf.mxu0
        %v1412 = vadd.f32 %v1340, %v1411
        %1413 = vmatmul.f32.gmra.mxu0 %v1350
        %v1414 = vpop.f32.mrf.mxu0
        %v1415 = vadd.f32 %v1340, %v1414
        %1416 = vmatmul.f32.gmra.mxu0 %v1353
        %v1417 = vpop.f32.mrf.mxu0
        %v1418 = vadd.f32 %v1340, %v1417
        %1419 = vmatmul.f32.gmra.mxu0 %v1356
        %v1420 = vpop.f32.mrf.mxu0
        %v1421 = vadd.f32 %v1340, %v1420
        %1422 = vmatmul.f32.gmra.mxu0 %v1359
        %v1423 = vpop.f32.mrf.mxu0
        %v1424 = vadd.f32 %v1340, %v1423
        %1425 = vmatmul.f32.gmra.mxu0 %v1362
        %v1426 = vpop.f32.mrf.mxu0
        %v1427 = vadd.f32 %v1340, %v1426
        %1428 = vmatmul.f32.gmra.mxu0 %v1365
        %v1429 = vpop.f32.mrf.mxu0
        %v1430 = vadd.f32 %v1340, %v1429
        %1431 = vmatmul.f32.gmra.mxu0 %v1368
        %v1432 = vpop.f32.mrf.mxu0
        %v1433 = vadd.f32 %v1340, %v1432
        %1434 = vmatmul.f32.gmra.mxu0 %v1371
        %v1435 = vpop.f32.mrf.mxu0
        %v1436 = vadd.f32 %v1340, %v1435
        %1437 = vmatmul.f32.gmra.mxu0 %v1374
        %v1438 = vpop.f32.mrf.mxu0
        %v1439 = vadd.f32 %v1340, %v1438
        %1440 = vmatmul.f32.gmra.mxu0 %v1377
        %v1441 = vpop.f32.mrf.mxu0
        %v1442 = vadd.f32 %v1340, %v1441
        %1443 = vmatmul.f32.gmra.mxu0 %v1380
        %v1444 = vpop.f32.mrf.mxu0
        %v1445 = vadd.f32 %v1340, %v1444
        %1446 = vmatmul.f32.gmra.mxu0 %v1383
        %v1447 = vpop.f32.mrf.mxu0
        %v1448 = vadd.f32 %v1340, %v1447
        %1449 = vmatmul.f32.gmra.mxu0 %v1386
        %v1450 = vpop.f32.mrf.mxu0
        %v1451 = vadd.f32 %v1340, %v1450
        %1452 = vmatmul.f32.gmra.mxu0 %v1389
        %v1453 = vpop.f32.mrf.mxu0
        %v1454 = vadd.f32 %v1340, %v1453
        %1455 = vdwg.mxu0
        %v1456 = vmax.f32 %v1409, 0.0
        %v1457 = vmax.f32 %v1412, 0.0
        %v1458 = vmax.f32 %v1415, 0.0
        %v1459 = vmax.f32 %v1418, 0.0
        %v1460 = vmax.f32 %v1421, 0.0
        %v1461 = vmax.f32 %v1424, 0.0
        %v1462 = vmax.f32 %v1427, 0.0
        %v1463 = vmax.f32 %v1430, 0.0
        %v1464 = vmax.f32 %v1433, 0.0
        %v1465 = vmax.f32 %v1436, 0.0
        %v1466 = vmax.f32 %v1439, 0.0
        %v1467 = vmax.f32 %v1442, 0.0
        %v1468 = vmax.f32 %v1445, 0.0
        %v1469 = vmax.f32 %v1448, 0.0
        %v1470 = vmax.f32 %v1451, 0.0
        %v1471 = vmax.f32 %v1454, 0.0
        %v1472 = vand.u32 2147483647, %v1409
        %v1473 = vand.u32 2147483647, %v1412
        %v1474 = vand.u32 2147483647, %v1415
        %v1475 = vand.u32 2147483647, %v1418
        %v1476 = vand.u32 2147483647, %v1421
        %v1477 = vand.u32 2147483647, %v1424
        %v1478 = vand.u32 2147483647, %v1427
        %v1479 = vand.u32 2147483647, %v1430
        %v1480 = vand.u32 2147483647, %v1433
        %v1481 = vand.u32 2147483647, %v1436
        %v1482 = vand.u32 2147483647, %v1439
        %v1483 = vand.u32 2147483647, %v1442
        %v1484 = vand.u32 2147483647, %v1445
        %v1485 = vand.u32 2147483647, %v1448
        %v1486 = vand.u32 2147483647, %v1451
        %v1487 = vand.u32 2147483647, %v1454
        %v1488 = vsub.f32 0.0, %v1472
        %v1489 = vsub.f32 0.0, %v1473
        %v1490 = vsub.f32 0.0, %v1474
        %v1491 = vsub.f32 0.0, %v1475
        %v1492 = vsub.f32 0.0, %v1476
        %v1493 = vsub.f32 0.0, %v1477
        %v1494 = vsub.f32 0.0, %v1478
        %v1495 = vsub.f32 0.0, %v1479
        %v1496 = vsub.f32 0.0, %v1480
        %v1497 = vsub.f32 0.0, %v1481
        %v1498 = vsub.f32 0.0, %v1482
        %v1499 = vsub.f32 0.0, %v1483
        %v1500 = vsub.f32 0.0, %v1484
        %v1501 = vsub.f32 0.0, %v1485
        %v1502 = vsub.f32 0.0, %v1486
        %v1503 = vsub.f32 0.0, %v1487
        %v1504 = vmul.f32 %v1488, 1.442695
        %v1505 = vpow.pop %v1504
        %v1506 = vmul.f32 %v1489, 1.442695
        %v1507 = vpow.pop %v1506
        %v1508 = vmul.f32 %v1490, 1.442695
        %v1509 = vpow.pop %v1508
        %v1510 = vmul.f32 %v1491, 1.442695
        %v1511 = vpow.pop %v1510
        %v1512 = vmul.f32 %v1492, 1.442695
        %v1513 = vpow.pop %v1512
        %v1514 = vmul.f32 %v1493, 1.442695
        %v1515 = vpow.pop %v1514
        %v1516 = vmul.f32 %v1494, 1.442695
        %v1517 = vpow.pop %v1516
        %v1518 = vmul.f32 %v1495, 1.442695
        %v1519 = vpow.pop %v1518
        %v1520 = vmul.f32 %v1496, 1.442695
        %v1521 = vpow.pop %v1520
        %v1522 = vmul.f32 %v1497, 1.442695
        %v1523 = vpow.pop %v1522
        %v1524 = vmul.f32 %v1498, 1.442695
        %v1525 = vpow.pop %v1524
        %v1526 = vmul.f32 %v1499, 1.442695
        %v1527 = vpow.pop %v1526
        %v1528 = vmul.f32 %v1500, 1.442695
        %v1529 = vpow.pop %v1528
        %v1530 = vmul.f32 %v1501, 1.442695
        %v1531 = vpow.pop %v1530
        %v1532 = vmul.f32 %v1502, 1.442695
        %v1533 = vpow.pop %v1532
        %v1534 = vmul.f32 %v1503, 1.442695
        %v1535 = vpow.pop %v1534
        %v1536 = vadd.f32 %v1505, 1.0
        %v1537 = vlog2.pop %v1536
        %v1538 = vmul.f32 %v1537, 0.6931472
        %v1539 = vmul.f32 -0.5, %v1505
        %v1540 = vadd.f32 %v1539, 1.0
        %v1541 = vmul.f32 %v1540, %v1505
        %v1542 = vand.u32 2147483647, %v1505
        %vm1543 = vcmp.lt.f32.partialorder %v1542, 0.0004427343
        %v1544 = vsel %vm1543, %v1541, %v1538
        %v1545 = vadd.f32 %v1507, 1.0
        %v1546 = vlog2.pop %v1545
        %v1547 = vmul.f32 %v1546, 0.6931472
        %v1548 = vmul.f32 -0.5, %v1507
        %v1549 = vadd.f32 %v1548, 1.0
        %v1550 = vmul.f32 %v1549, %v1507
        %v1551 = vand.u32 2147483647, %v1507
        %vm1552 = vcmp.lt.f32.partialorder %v1551, 0.0004427343
        %v1553 = vsel %vm1552, %v1550, %v1547
        %v1554 = vadd.f32 %v1509, 1.0
        %v1555 = vlog2.pop %v1554
        %v1556 = vmul.f32 %v1555, 0.6931472
        %v1557 = vmul.f32 -0.5, %v1509
        %v1558 = vadd.f32 %v1557, 1.0
        %v1559 = vmul.f32 %v1558, %v1509
        %v1560 = vand.u32 2147483647, %v1509
        %vm1561 = vcmp.lt.f32.partialorder %v1560, 0.0004427343
        %v1562 = vsel %vm1561, %v1559, %v1556
        %v1563 = vadd.f32 %v1511, 1.0
        %v1564 = vlog2.pop %v1563
        %v1565 = vmul.f32 %v1564, 0.6931472
        %v1566 = vmul.f32 -0.5, %v1511
        %v1567 = vadd.f32 %v1566, 1.0
        %v1568 = vmul.f32 %v1567, %v1511
        %v1569 = vand.u32 2147483647, %v1511
        %vm1570 = vcmp.lt.f32.partialorder %v1569, 0.0004427343
        %v1571 = vsel %vm1570, %v1568, %v1565
        %v1572 = vadd.f32 %v1513, 1.0
        %v1573 = vlog2.pop %v1572
        %v1574 = vmul.f32 %v1573, 0.6931472
        %v1575 = vmul.f32 -0.5, %v1513
        %v1576 = vadd.f32 %v1575, 1.0
        %v1577 = vmul.f32 %v1576, %v1513
        %v1578 = vand.u32 2147483647, %v1513
        %vm1579 = vcmp.lt.f32.partialorder %v1578, 0.0004427343
        %v1580 = vsel %vm1579, %v1577, %v1574
        %v1581 = vadd.f32 %v1515, 1.0
        %v1582 = vlog2.pop %v1581
        %v1583 = vmul.f32 %v1582, 0.6931472
        %v1584 = vmul.f32 -0.5, %v1515
        %v1585 = vadd.f32 %v1584, 1.0
        %v1586 = vmul.f32 %v1585, %v1515
        %v1587 = vand.u32 2147483647, %v1515
        %vm1588 = vcmp.lt.f32.partialorder %v1587, 0.0004427343
        %v1589 = vsel %vm1588, %v1586, %v1583
        %v1590 = vadd.f32 %v1517, 1.0
        %v1591 = vlog2.pop %v1590
        %v1592 = vmul.f32 %v1591, 0.6931472
        %v1593 = vmul.f32 -0.5, %v1517
        %v1594 = vadd.f32 %v1593, 1.0
        %v1595 = vmul.f32 %v1594, %v1517
        %v1596 = vand.u32 2147483647, %v1517
        %vm1597 = vcmp.lt.f32.partialorder %v1596, 0.0004427343
        %v1598 = vsel %vm1597, %v1595, %v1592
        %v1599 = vadd.f32 %v1519, 1.0
        %v1600 = vlog2.pop %v1599
        %v1601 = vmul.f32 %v1600, 0.6931472
        %v1602 = vmul.f32 -0.5, %v1519
        %v1603 = vadd.f32 %v1602, 1.0
        %v1604 = vmul.f32 %v1603, %v1519
        %v1605 = vand.u32 2147483647, %v1519
        %vm1606 = vcmp.lt.f32.partialorder %v1605, 0.0004427343
        %v1607 = vsel %vm1606, %v1604, %v1601
        %v1608 = vadd.f32 %v1521, 1.0
        %v1609 = vlog2.pop %v1608
        %v1610 = vmul.f32 %v1609, 0.6931472
        %v1611 = vmul.f32 -0.5, %v1521
        %v1612 = vadd.f32 %v1611, 1.0
        %v1613 = vmul.f32 %v1612, %v1521
        %v1614 = vand.u32 2147483647, %v1521
        %vm1615 = vcmp.lt.f32.partialorder %v1614, 0.0004427343
        %v1616 = vsel %vm1615, %v1613, %v1610
        %v1617 = vadd.f32 %v1523, 1.0
        %v1618 = vlog2.pop %v1617
        %v1619 = vmul.f32 %v1618, 0.6931472
        %v1620 = vmul.f32 -0.5, %v1523
        %v1621 = vadd.f32 %v1620, 1.0
        %v1622 = vmul.f32 %v1621, %v1523
        %v1623 = vand.u32 2147483647, %v1523
        %vm1624 = vcmp.lt.f32.partialorder %v1623, 0.0004427343
        %v1625 = vsel %vm1624, %v1622, %v1619
        %v1626 = vadd.f32 %v1525, 1.0
        %v1627 = vlog2.pop %v1626
        %v1628 = vmul.f32 %v1627, 0.6931472
        %v1629 = vmul.f32 -0.5, %v1525
        %v1630 = vadd.f32 %v1629, 1.0
        %v1631 = vmul.f32 %v1630, %v1525
        %v1632 = vand.u32 2147483647, %v1525
        %vm1633 = vcmp.lt.f32.partialorder %v1632, 0.0004427343
        %v1634 = vsel %vm1633, %v1631, %v1628
        %v1635 = vadd.f32 %v1527, 1.0
        %v1636 = vlog2.pop %v1635
        %v1637 = vmul.f32 %v1636, 0.6931472
        %v1638 = vmul.f32 -0.5, %v1527
        %v1639 = vadd.f32 %v1638, 1.0
        %v1640 = vmul.f32 %v1639, %v1527
        %v1641 = vand.u32 2147483647, %v1527
        %vm1642 = vcmp.lt.f32.partialorder %v1641, 0.0004427343
        %v1643 = vsel %vm1642, %v1640, %v1637
        %v1644 = vadd.f32 %v1529, 1.0
        %v1645 = vlog2.pop %v1644
        %v1646 = vmul.f32 %v1645, 0.6931472
        %v1647 = vmul.f32 -0.5, %v1529
        %v1648 = vadd.f32 %v1647, 1.0
        %v1649 = vmul.f32 %v1648, %v1529
        %v1650 = vand.u32 2147483647, %v1529
        %vm1651 = vcmp.lt.f32.partialorder %v1650, 0.0004427343
        %v1652 = vsel %vm1651, %v1649, %v1646
        %v1653 = vadd.f32 %v1531, 1.0
        %v1654 = vlog2.pop %v1653
        %v1655 = vmul.f32 %v1654, 0.6931472
        %v1656 = vmul.f32 -0.5, %v1531
        %v1657 = vadd.f32 %v1656, 1.0
        %v1658 = vmul.f32 %v1657, %v1531
        %v1659 = vand.u32 2147483647, %v1531
        %vm1660 = vcmp.lt.f32.partialorder %v1659, 0.0004427343
        %v1661 = vsel %vm1660, %v1658, %v1655
        %v1662 = vadd.f32 %v1533, 1.0
        %v1663 = vlog2.pop %v1662
        %v1664 = vmul.f32 %v1663, 0.6931472
        %v1665 = vmul.f32 -0.5, %v1533
        %v1666 = vadd.f32 %v1665, 1.0
        %v1667 = vmul.f32 %v1666, %v1533
        %v1668 = vand.u32 2147483647, %v1533
        %vm1669 = vcmp.lt.f32.partialorder %v1668, 0.0004427343
        %v1670 = vsel %vm1669, %v1667, %v1664
        %v1671 = vadd.f32 %v1535, 1.0
        %v1672 = vlog2.pop %v1671
        %v1673 = vmul.f32 %v1672, 0.6931472
        %v1674 = vmul.f32 -0.5, %v1535
        %v1675 = vadd.f32 %v1674, 1.0
        %v1676 = vmul.f32 %v1675, %v1535
        %v1677 = vand.u32 2147483647, %v1535
        %vm1678 = vcmp.lt.f32.partialorder %v1677, 0.0004427343
        %v1679 = vsel %vm1678, %v1676, %v1673
        %v1680 = vadd.f32 %v1456, %v1544
        %v1681 = vadd.f32 %v1457, %v1553
        %v1682 = vadd.f32 %v1458, %v1562
        %v1683 = vadd.f32 %v1459, %v1571
        %v1684 = vadd.f32 %v1460, %v1580
        %v1685 = vadd.f32 %v1461, %v1589
        %v1686 = vadd.f32 %v1462, %v1598
        %v1687 = vadd.f32 %v1463, %v1607
        %v1688 = vadd.f32 %v1464, %v1616
        %v1689 = vadd.f32 %v1465, %v1625
        %v1690 = vadd.f32 %v1466, %v1634
        %v1691 = vadd.f32 %v1467, %v1643
        %v1692 = vadd.f32 %v1468, %v1652
        %v1693 = vadd.f32 %v1469, %v1661
        %v1694 = vadd.f32 %v1470, %v1670
        %v1695 = vadd.f32 %v1471, %v1679
        %v1696 = vsub.f32 %v1680, 0.6931472
        %v1697 = vsub.f32 %v1681, 0.6931472
        %v1698 = vsub.f32 %v1682, 0.6931472
        %v1699 = vsub.f32 %v1683, 0.6931472
        %v1700 = vsub.f32 %v1684, 0.6931472
        %v1701 = vsub.f32 %v1685, 0.6931472
        %v1702 = vsub.f32 %v1686, 0.6931472
        %v1703 = vsub.f32 %v1687, 0.6931472
        %v1704 = vsub.f32 %v1688, 0.6931472
        %v1705 = vsub.f32 %v1689, 0.6931472
        %v1706 = vsub.f32 %v1690, 0.6931472
        %v1707 = vsub.f32 %v1691, 0.6931472
        %v1708 = vsub.f32 %v1692, 0.6931472
        %v1709 = vsub.f32 %v1693, 0.6931472
        %v1710 = vsub.f32 %v1694, 0.6931472
        %v1711 = vsub.f32 %v1695, 0.6931472
        %v1712 = vld [vmem:[%s924] sm:$0xff]
        %v1713 = vld [vmem:[%s924 + $0x8] sm:$0xff]
        %v1714 = vld [vmem:[%s924 + $0x10] sm:$0xff]
        %v1715 = vld [vmem:[%s924 + $0x18] sm:$0xff]
        %v1716 = vld [vmem:[%s924 + $0x20] sm:$0xff]
        %v1717 = vld [vmem:[%s924 + $0x28] sm:$0xff]
        %v1718 = vld [vmem:[%s924 + $0x30] sm:$0xff]
        %v1719 = vld [vmem:[%s924 + $0x38] sm:$0xff]
        %v1720 = vld [vmem:[%s927] sm:$0x1]
        %v1722 = vperm.slane %v1720, 0
        %vm1724 = vcmask 523264
        %v1726 = vsel %vm1724, %v1696, 0
        %v1729 = vsel %vm1724, %v1697, 0
        %v1732 = vsel %vm1724, %v1698, 0
        %v1735 = vsel %vm1724, %v1699, 0
        %v1738 = vsel %vm1724, %v1700, 0
        %v1741 = vsel %vm1724, %v1701, 0
        %v1744 = vsel %vm1724, %v1702, 0
        %v1747 = vsel %vm1724, %v1703, 0
        %v1750 = vsel %vm1724, %v1704, 0
        %v1753 = vsel %vm1724, %v1705, 0
        %v1756 = vsel %vm1724, %v1706, 0
        %v1759 = vsel %vm1724, %v1707, 0
        %v1762 = vsel %vm1724, %v1708, 0
        %v1765 = vsel %vm1724, %v1709, 0
        %v1768 = vsel %vm1724, %v1710, 0
        %v1771 = vsel %vm1724, %v1711, 0
        %1773 = vmatpush.msra.mxu0 0.0
        %1774 = vmatpush.msra.mxu0 0.0
        %1775 = vmatpush.msra.mxu0 0.0
        %1776 = vmatpush.msra.mxu0 0.0
        %1777 = vmatpush.msra.mxu0 0.0
        %1778 = vmatpush.msra.mxu0 0.0
        %1779 = vmatpush.msra.mxu0 0.0
        %1780 = vmatpush.msra.mxu0 0.0
        %1781 = vmatpush.msra.mxu0 %v1719
        %1782 = vmatpush.msra.mxu0 %v1718
        %1783 = vmatpush.msra.mxu0 %v1717
        %1784 = vmatpush.msra.mxu0 %v1716
        %1785 = vmatpush.msra.mxu0 %v1715
        %1786 = vmatpush.msra.mxu0 %v1714
        %1787 = vmatpush.msra.mxu0 %v1713
        %1788 = vmatpush.msra.mxu0 %v1712
        %1789 = vmatmul.f32.gmra.mxu0 %v1726
        %v1790 = vpop.f32.mrf.mxu0
        %v1791 = vadd.f32 %v1722, %v1790
        %1792 = vmatmul.f32.gmra.mxu0 %v1729
        %v1793 = vpop.f32.mrf.mxu0
        %v1794 = vadd.f32 %v1722, %v1793
        %1795 = vmatmul.f32.gmra.mxu0 %v1732
        %v1796 = vpop.f32.mrf.mxu0
        %v1797 = vadd.f32 %v1722, %v1796
        %1798 = vmatmul.f32.gmra.mxu0 %v1735
        %v1799 = vpop.f32.mrf.mxu0
        %v1800 = vadd.f32 %v1722, %v1799
        %1801 = vmatmul.f32.gmra.mxu0 %v1738
        %v1802 = vpop.f32.mrf.mxu0
        %v1803 = vadd.f32 %v1722, %v1802
        %1804 = vmatmul.f32.gmra.mxu0 %v1741
        %v1805 = vpop.f32.mrf.mxu0
        %v1806 = vadd.f32 %v1722, %v1805
        %1807 = vmatmul.f32.gmra.mxu0 %v1744
        %v1808 = vpop.f32.mrf.mxu0
        %v1809 = vadd.f32 %v1722, %v1808
        %1810 = vmatmul.f32.gmra.mxu0 %v1747
        %v1811 = vpop.f32.mrf.mxu0
        %v1812 = vadd.f32 %v1722, %v1811
        %1813 = vmatmul.f32.gmra.mxu0 %v1750
        %v1814 = vpop.f32.mrf.mxu0
        %v1815 = vadd.f32 %v1722, %v1814
        %1816 = vmatmul.f32.gmra.mxu0 %v1753
        %v1817 = vpop.f32.mrf.mxu0
        %v1818 = vadd.f32 %v1722, %v1817
        %1819 = vmatmul.f32.gmra.mxu0 %v1756
        %v1820 = vpop.f32.mrf.mxu0
        %v1821 = vadd.f32 %v1722, %v1820
        %1822 = vmatmul.f32.gmra.mxu0 %v1759
        %v1823 = vpop.f32.mrf.mxu0
        %v1824 = vadd.f32 %v1722, %v1823
        %1825 = vmatmul.f32.gmra.mxu0 %v1762
        %v1826 = vpop.f32.mrf.mxu0
        %v1827 = vadd.f32 %v1722, %v1826
        %1828 = vmatmul.f32.gmra.mxu0 %v1765
        %v1829 = vpop.f32.mrf.mxu0
        %v1830 = vadd.f32 %v1722, %v1829
        %1831 = vmatmul.f32.gmra.mxu0 %v1768
        %v1832 = vpop.f32.mrf.mxu0
        %v1833 = vadd.f32 %v1722, %v1832
        %1834 = vmatmul.f32.gmra.mxu0 %v1771
        %v1835 = vpop.f32.mrf.mxu0
        %v1836 = vadd.f32 %v1722, %v1835
        %1837 = vdwg.mxu0
        %v1838 = vld [vmem:[%s4] sm:$0x1]
        %v1839 = vld [vmem:[%s4 + $0x1] sm:$0x1]
        %1840 = vset.pattern.permute.xlu0 2
        %1841 = vperm.xlu0 %1840, %v1040
        %v1842 = vpop.permute.xlu0 %1841
        %1844 = vset.pattern.permute.xlu0 2
        %1845 = vperm.xlu0 %1844, %v1041
        %v1846 = vpop.permute.xlu0 %1845
        %1848 = vset.pattern.permute.xlu0 2
        %1849 = vperm.xlu0 %1848, %v1042
        %v1850 = vpop.permute.xlu0 %1849
        %1852 = vset.pattern.permute.xlu0 2
        %1853 = vperm.xlu0 %1852, %v1043
        %v1854 = vpop.permute.xlu0 %1853
        %1856 = vset.pattern.permute.xlu0 2
        %1857 = vperm.xlu0 %1856, %v1044
        %v1858 = vpop.permute.xlu0 %1857
        %1860 = vset.pattern.permute.xlu0 2
        %1861 = vperm.xlu0 %1860, %v1045
        %v1862 = vpop.permute.xlu0 %1861
        %1864 = vset.pattern.permute.xlu0 2
        %1865 = vperm.xlu0 %1864, %v1046
        %v1866 = vpop.permute.xlu0 %1865
        %1868 = vset.pattern.permute.xlu0 2
        %1869 = vperm.xlu0 %1868, %v1047
        %v1870 = vpop.permute.xlu0 %1869
        %1872 = vset.pattern.permute.xlu0 2
        %1873 = vperm.xlu0 %1872, %v1048
        %v1874 = vpop.permute.xlu0 %1873
        %1876 = vset.pattern.permute.xlu0 2
        %1877 = vperm.xlu0 %1876, %v1049
        %v1878 = vpop.permute.xlu0 %1877
        %1880 = vset.pattern.permute.xlu0 2
        %1881 = vperm.xlu0 %1880, %v1050
        %v1882 = vpop.permute.xlu0 %1881
        %1884 = vset.pattern.permute.xlu0 2
        %1885 = vperm.xlu0 %1884, %v1051
        %v1886 = vpop.permute.xlu0 %1885
        %1888 = vset.pattern.permute.xlu0 2
        %1889 = vperm.xlu0 %1888, %v1052
        %v1890 = vpop.permute.xlu0 %1889
        %1892 = vset.pattern.permute.xlu0 2
        %1893 = vperm.xlu0 %1892, %v1053
        %v1894 = vpop.permute.xlu0 %1893
        %1896 = vset.pattern.permute.xlu0 2
        %1897 = vperm.xlu0 %1896, %v1054
        %v1898 = vpop.permute.xlu0 %1897
        %1900 = vset.pattern.permute.xlu0 2
        %1901 = vperm.xlu0 %1900, %v1055
        %v1902 = vpop.permute.xlu0 %1901
        %v1904 = vperm.slane %v1838, 0
        %v1905 = vmul.f32 %v1842, %v1904
        %v1906 = vmul.f32 %v1846, %v1904
        %v1907 = vmul.f32 %v1850, %v1904
        %v1908 = vmul.f32 %v1854, %v1904
        %v1909 = vmul.f32 %v1858, %v1904
        %v1910 = vmul.f32 %v1862, %v1904
        %v1911 = vmul.f32 %v1866, %v1904
        %v1912 = vmul.f32 %v1870, %v1904
        %v1913 = vmul.f32 %v1874, %v1904
        %v1914 = vmul.f32 %v1878, %v1904
        %v1915 = vmul.f32 %v1882, %v1904
        %v1916 = vmul.f32 %v1886, %v1904
        %v1917 = vmul.f32 %v1890, %v1904
        %v1918 = vmul.f32 %v1894, %v1904
        %v1919 = vmul.f32 %v1898, %v1904
        %v1920 = vmul.f32 %v1902, %v1904
        %1921 = vset.pattern.permute.xlu0 3
        %1922 = vperm.xlu0 %1921, %v1040
        %v1923 = vpop.permute.xlu0 %1922
        %1925 = vset.pattern.permute.xlu0 3
        %1926 = vperm.xlu0 %1925, %v1041
        %v1927 = vpop.permute.xlu0 %1926
        %1929 = vset.pattern.permute.xlu0 3
        %1930 = vperm.xlu0 %1929, %v1042
        %v1931 = vpop.permute.xlu0 %1930
        %1933 = vset.pattern.permute.xlu0 3
        %1934 = vperm.xlu0 %1933, %v1043
        %v1935 = vpop.permute.xlu0 %1934
        %1937 = vset.pattern.permute.xlu0 3
        %1938 = vperm.xlu0 %1937, %v1044
        %v1939 = vpop.permute.xlu0 %1938
        %1941 = vset.pattern.permute.xlu0 3
        %1942 = vperm.xlu0 %1941, %v1045
        %v1943 = vpop.permute.xlu0 %1942
        %1945 = vset.pattern.permute.xlu0 3
        %1946 = vperm.xlu0 %1945, %v1046
        %v1947 = vpop.permute.xlu0 %1946
        %1949 = vset.pattern.permute.xlu0 3
        %1950 = vperm.xlu0 %1949, %v1047
        %v1951 = vpop.permute.xlu0 %1950
        %1953 = vset.pattern.permute.xlu0 3
        %1954 = vperm.xlu0 %1953, %v1048
        %v1955 = vpop.permute.xlu0 %1954
        %1957 = vset.pattern.permute.xlu0 3
        %1958 = vperm.xlu0 %1957, %v1049
        %v1959 = vpop.permute.xlu0 %1958
        %1961 = vset.pattern.permute.xlu0 3
        %1962 = vperm.xlu0 %1961, %v1050
        %v1963 = vpop.permute.xlu0 %1962
        %1965 = vset.pattern.permute.xlu0 3
        %1966 = vperm.xlu0 %1965, %v1051
        %v1967 = vpop.permute.xlu0 %1966
        %1969 = vset.pattern.permute.xlu0 3
        %1970 = vperm.xlu0 %1969, %v1052
        %v1971 = vpop.permute.xlu0 %1970
        %1973 = vset.pattern.permute.xlu0 3
        %1974 = vperm.xlu0 %1973, %v1053
        %v1975 = vpop.permute.xlu0 %1974
        %1977 = vset.pattern.permute.xlu0 3
        %1978 = vperm.xlu0 %1977, %v1054
        %v1979 = vpop.permute.xlu0 %1978
        %1981 = vset.pattern.permute.xlu0 3
        %1982 = vperm.xlu0 %1981, %v1055
        %v1983 = vpop.permute.xlu0 %1982
        %v1985 = vperm.slane %v1839, 0
        %v1986 = vmul.f32 %v1923, %v1985
        %v1987 = vmul.f32 %v1927, %v1985
        %v1988 = vmul.f32 %v1931, %v1985
        %v1989 = vmul.f32 %v1935, %v1985
        %v1990 = vmul.f32 %v1939, %v1985
        %v1991 = vmul.f32 %v1943, %v1985
        %v1992 = vmul.f32 %v1947, %v1985
        %v1993 = vmul.f32 %v1951, %v1985
        %v1994 = vmul.f32 %v1955, %v1985
        %v1995 = vmul.f32 %v1959, %v1985
        %v1996 = vmul.f32 %v1963, %v1985
        %v1997 = vmul.f32 %v1967, %v1985
        %v1998 = vmul.f32 %v1971, %v1985
        %v1999 = vmul.f32 %v1975, %v1985
        %v2000 = vmul.f32 %v1979, %v1985
        %v2001 = vmul.f32 %v1983, %v1985
        %v2002 = vadd.f32 %v1905, %v1986
        %v2003 = vadd.f32 %v1906, %v1987
        %v2004 = vadd.f32 %v1907, %v1988
        %v2005 = vadd.f32 %v1908, %v1989
        %v2006 = vadd.f32 %v1909, %v1990
        %v2007 = vadd.f32 %v1910, %v1991
        %v2008 = vadd.f32 %v1911, %v1992
        %v2009 = vadd.f32 %v1912, %v1993
        %v2010 = vadd.f32 %v1913, %v1994
        %v2011 = vadd.f32 %v1914, %v1995
        %v2012 = vadd.f32 %v1915, %v1996
        %v2013 = vadd.f32 %v1916, %v1997
        %v2014 = vadd.f32 %v1917, %v1998
        %v2015 = vadd.f32 %v1918, %v1999
        %v2016 = vadd.f32 %v1919, %v2000
        %v2017 = vadd.f32 %v1920, %v2001
        %v2018 = vmul.f32 %v1791, %v2002
        %v2019 = vmul.f32 %v1794, %v2003
        %v2020 = vmul.f32 %v1797, %v2004
        %v2021 = vmul.f32 %v1800, %v2005
        %v2022 = vmul.f32 %v1803, %v2006
        %v2023 = vmul.f32 %v1806, %v2007
        %v2024 = vmul.f32 %v1809, %v2008
        %v2025 = vmul.f32 %v1812, %v2009
        %v2026 = vmul.f32 %v1815, %v2010
        %v2027 = vmul.f32 %v1818, %v2011
        %v2028 = vmul.f32 %v1821, %v2012
        %v2029 = vmul.f32 %v1824, %v2013
        %v2030 = vmul.f32 %v1827, %v2014
        %v2031 = vmul.f32 %v1830, %v2015
        %v2032 = vmul.f32 %v1833, %v2016
        %v2033 = vmul.f32 %v1836, %v2017
        %v2034 = vlaneseq
        %v2035 = vand.u32 %v2034, 127
        %v2036 = vld [vmem:[%s902] sm:$0xff]
        %v2037 = vld [vmem:[%s902 + $0x8] sm:$0xff]
        %v2038 = vld [vmem:[%s902 + $0x10] sm:$0xff]
        %v2039 = vld [vmem:[%s902 + $0x18] sm:$0xff]
        %v2040 = vld [vmem:[%s902 + $0x20] sm:$0xff]
        %v2041 = vld [vmem:[%s902 + $0x28] sm:$0xff]
        %v2042 = vld [vmem:[%s902 + $0x30] sm:$0xff]
        %v2043 = vld [vmem:[%s902 + $0x38] sm:$0xff]
        %v2044 = vld [vmem:[%s902 + $0x40] sm:$0xff]
        %v2045 = vld [vmem:[%s902 + $0x48] sm:$0xff]
        %v2046 = vld [vmem:[%s902 + $0x50] sm:$0xff]
        %v2047 = vld [vmem:[%s902 + $0x58] sm:$0xff]
        %v2048 = vld [vmem:[%s902 + $0x60] sm:$0xff]
        %v2049 = vld [vmem:[%s902 + $0x68] sm:$0xff]
        %v2050 = vld [vmem:[%s902 + $0x70] sm:$0xff]
        %v2051 = vld [vmem:[%s902 + $0x78] sm:$0xff]
        %2052 = vset.pattern.permute.xlu0 0
        %2053 = vperm.xlu0 %2052, %v2036
        %v2054 = vpop.permute.xlu0 %2053
        %2055 = vset.pattern.permute.xlu0 0
        %2056 = vperm.xlu0 %2055, %v2037
        %v2057 = vpop.permute.xlu0 %2056
        %2058 = vset.pattern.permute.xlu0 0
        %2059 = vperm.xlu0 %2058, %v2038
        %v2060 = vpop.permute.xlu0 %2059
        %2061 = vset.pattern.permute.xlu0 0
        %2062 = vperm.xlu0 %2061, %v2039
        %v2063 = vpop.permute.xlu0 %2062
        %2064 = vset.pattern.permute.xlu0 0
        %2065 = vperm.xlu0 %2064, %v2040
        %v2066 = vpop.permute.xlu0 %2065
        %2067 = vset.pattern.permute.xlu0 0
        %2068 = vperm.xlu0 %2067, %v2041
        %v2069 = vpop.permute.xlu0 %2068
        %2070 = vset.pattern.permute.xlu0 0
        %2071 = vperm.xlu0 %2070, %v2042
        %v2072 = vpop.permute.xlu0 %2071
        %2073 = vset.pattern.permute.xlu0 0
        %2074 = vperm.xlu0 %2073, %v2043
        %v2075 = vpop.permute.xlu0 %2074
        %2076 = vset.pattern.permute.xlu0 0
        %2077 = vperm.xlu0 %2076, %v2044
        %v2078 = vpop.permute.xlu0 %2077
        %2079 = vset.pattern.permute.xlu0 0
        %2080 = vperm.xlu0 %2079, %v2045
        %v2081 = vpop.permute.xlu0 %2080
        %2082 = vset.pattern.permute.xlu0 0
        %2083 = vperm.xlu0 %2082, %v2046
        %v2084 = vpop.permute.xlu0 %2083
        %2085 = vset.pattern.permute.xlu0 0
        %2086 = vperm.xlu0 %2085, %v2047
        %v2087 = vpop.permute.xlu0 %2086
        %2088 = vset.pattern.permute.xlu0 0
        %2089 = vperm.xlu0 %2088, %v2048
        %v2090 = vpop.permute.xlu0 %2089
        %2091 = vset.pattern.permute.xlu0 0
        %2092 = vperm.xlu0 %2091, %v2049
        %v2093 = vpop.permute.xlu0 %2092
        %2094 = vset.pattern.permute.xlu0 0
        %2095 = vperm.xlu0 %2094, %v2050
        %v2096 = vpop.permute.xlu0 %2095
        %2097 = vset.pattern.permute.xlu0 0
        %2098 = vperm.xlu0 %2097, %v2051
        %v2099 = vpop.permute.xlu0 %2098
        %vm2100 = vcmp.eq.s32.totalorder %v2054, %v2035
        %vm2101 = vcmp.eq.s32.totalorder %v2057, %v2035
        %vm2102 = vcmp.eq.s32.totalorder %v2060, %v2035
        %vm2103 = vcmp.eq.s32.totalorder %v2063, %v2035
        %vm2104 = vcmp.eq.s32.totalorder %v2066, %v2035
        %vm2105 = vcmp.eq.s32.totalorder %v2069, %v2035
        %vm2106 = vcmp.eq.s32.totalorder %v2072, %v2035
        %vm2107 = vcmp.eq.s32.totalorder %v2075, %v2035
        %vm2108 = vcmp.eq.s32.totalorder %v2078, %v2035
        %vm2109 = vcmp.eq.s32.totalorder %v2081, %v2035
        %vm2110 = vcmp.eq.s32.totalorder %v2084, %v2035
        %vm2111 = vcmp.eq.s32.totalorder %v2087, %v2035
        %vm2112 = vcmp.eq.s32.totalorder %v2090, %v2035
        %vm2113 = vcmp.eq.s32.totalorder %v2093, %v2035
        %vm2114 = vcmp.eq.s32.totalorder %v2096, %v2035
        %vm2115 = vcmp.eq.s32.totalorder %v2099, %v2035
        %v2116 = vsel %vm2100, 1, 0
        %v2117 = vsel %vm2101, 1, 0
        %v2118 = vsel %vm2102, 1, 0
        %v2119 = vsel %vm2103, 1, 0
        %v2120 = vsel %vm2104, 1, 0
        %v2121 = vsel %vm2105, 1, 0
        %v2122 = vsel %vm2106, 1, 0
        %v2123 = vsel %vm2107, 1, 0
        %v2124 = vsel %vm2108, 1, 0
        %v2125 = vsel %vm2109, 1, 0
        %v2126 = vsel %vm2110, 1, 0
        %v2127 = vsel %vm2111, 1, 0
        %v2128 = vsel %vm2112, 1, 0
        %v2129 = vsel %vm2113, 1, 0
        %v2130 = vsel %vm2114, 1, 0
        %v2131 = vsel %vm2115, 1, 0
        %v2132 = vcvt.s32.f32 %v2116
        %v2133 = vcvt.s32.f32 %v2117
        %v2134 = vcvt.s32.f32 %v2118
        %v2135 = vcvt.s32.f32 %v2119
        %v2136 = vcvt.s32.f32 %v2120
        %v2137 = vcvt.s32.f32 %v2121
        %v2138 = vcvt.s32.f32 %v2122
        %v2139 = vcvt.s32.f32 %v2123
        %v2140 = vcvt.s32.f32 %v2124
        %v2141 = vcvt.s32.f32 %v2125
        %v2142 = vcvt.s32.f32 %v2126
        %v2143 = vcvt.s32.f32 %v2127
        %v2144 = vcvt.s32.f32 %v2128
        %v2145 = vcvt.s32.f32 %v2129
        %v2146 = vcvt.s32.f32 %v2130
        %v2147 = vcvt.s32.f32 %v2131
        %v2148 = vpack.c.bf16 %v2133, %v2132
        %v2149 = vpack.c.bf16 %v2135, %v2134
        %v2150 = vpack.c.bf16 %v2137, %v2136
        %v2151 = vpack.c.bf16 %v2139, %v2138
        %v2152 = vpack.c.bf16 %v2141, %v2140
        %v2153 = vpack.c.bf16 %v2143, %v2142
        %v2154 = vpack.c.bf16 %v2145, %v2144
        %v2155 = vpack.c.bf16 %v2147, %v2146
        %v2156 = vld [vmem:[#allocation3] sm:$0xf]
        %v2157 = vld [vmem:[#allocation3 + $0x4] sm:$0xf]
        %v2158 = vld [vmem:[#allocation3 + $0x8] sm:$0xf]
        %v2159 = vld [vmem:[#allocation3 + $0xc] sm:$0xf]
        %v2164 = vunpack.c.l.b16 %v2156
        %v2165 = vunpack.c.l.b16 %v2157
        %v2166 = vunpack.c.l.b16 %v2158
        %v2167 = vunpack.c.l.b16 %v2159
        %v2168 = vpack.c.b16 %v2165, %v2164
        %v2169 = vpack.c.b16 %v2167, %v2166
        %v2173 = vsel %vm1342, %v2148, 0
        %v2176 = vsel %vm1342, %v2149, 0
        %v2179 = vsel %vm1342, %v2150, 0
        %v2182 = vsel %vm1342, %v2151, 0
        %v2185 = vsel %vm1342, %v2152, 0
        %v2188 = vsel %vm1342, %v2153, 0
        %v2191 = vsel %vm1342, %v2154, 0
        %v2194 = vsel %vm1342, %v2155, 0
        %2196 = vmatpush.bf16.msra.mxu0 0
        %2197 = vmatpush.bf16.msra.mxu0 0
        %2198 = vmatpush.bf16.msra.mxu0 0
        %2199 = vmatpush.bf16.msra.mxu0 0
        %2200 = vmatpush.bf16.msra.mxu0 0
        %2201 = vmatpush.bf16.msra.mxu0 0
        %2202 = vmatpush.bf16.msra.mxu0 %v2169
        %2203 = vmatpush.bf16.msra.mxu0 %v2168
        %2204 = vmatmul.bf16.gmra.mxu0 %v2173
        %v2205 = vpop.f32.mrf.mxu0
        %v2206 = vadd.f32 0.0, %v2205
        %v2207 = vpop.f32.mrf.mxu0
        %v2208 = vadd.f32 0.0, %v2207
        %2209 = vmatmul.bf16.gmra.mxu0 %v2176
        %v2210 = vpop.f32.mrf.mxu0
        %v2211 = vadd.f32 0.0, %v2210
        %v2212 = vpop.f32.mrf.mxu0
        %v2213 = vadd.f32 0.0, %v2212
        %2214 = vmatmul.bf16.gmra.mxu0 %v2179
        %v2215 = vpop.f32.mrf.mxu0
        %v2216 = vadd.f32 0.0, %v2215
        %v2217 = vpop.f32.mrf.mxu0
        %v2218 = vadd.f32 0.0, %v2217
        %2219 = vmatmul.bf16.gmra.mxu0 %v2182
        %v2220 = vpop.f32.mrf.mxu0
        %v2221 = vadd.f32 0.0, %v2220
        %v2222 = vpop.f32.mrf.mxu0
        %v2223 = vadd.f32 0.0, %v2222
        %2224 = vmatmul.bf16.gmra.mxu0 %v2185
        %v2225 = vpop.f32.mrf.mxu0
        %v2226 = vadd.f32 0.0, %v2225
        %v2227 = vpop.f32.mrf.mxu0
        %v2228 = vadd.f32 0.0, %v2227
        %2229 = vmatmul.bf16.gmra.mxu0 %v2188
        %v2230 = vpop.f32.mrf.mxu0
        %v2231 = vadd.f32 0.0, %v2230
        %v2232 = vpop.f32.mrf.mxu0
        %v2233 = vadd.f32 0.0, %v2232
        %2234 = vmatmul.bf16.gmra.mxu0 %v2191
        %v2235 = vpop.f32.mrf.mxu0
        %v2236 = vadd.f32 0.0, %v2235
        %v2237 = vpop.f32.mrf.mxu0
        %v2238 = vadd.f32 0.0, %v2237
        %2239 = vmatmul.bf16.gmra.mxu0 %v2194
        %v2240 = vpop.f32.mrf.mxu0
        %v2241 = vadd.f32 0.0, %v2240
        %v2242 = vpop.f32.mrf.mxu0
        %v2243 = vadd.f32 0.0, %v2242
        %2244 = vdwg.mxu0
        %v2245 = vmul.f32 %v2206, %v2018
        %v2246 = vmul.f32 %v2208, %v2019
        %v2247 = vmul.f32 %v2211, %v2020
        %v2248 = vmul.f32 %v2213, %v2021
        %v2249 = vmul.f32 %v2216, %v2022
        %v2250 = vmul.f32 %v2218, %v2023
        %v2251 = vmul.f32 %v2221, %v2024
        %v2252 = vmul.f32 %v2223, %v2025
        %v2253 = vmul.f32 %v2226, %v2026
        %v2254 = vmul.f32 %v2228, %v2027
        %v2255 = vmul.f32 %v2231, %v2028
        %v2256 = vmul.f32 %v2233, %v2029
        %v2257 = vmul.f32 %v2236, %v2030
        %v2258 = vmul.f32 %v2238, %v2031
        %v2259 = vmul.f32 %v2241, %v2032
        %v2260 = vmul.f32 %v2243, %v2033
        %v2261 = vpack.c.bf16 %v2246, %v2245
        %v2262 = vpack.c.bf16 %v2248, %v2247
        %v2263 = vpack.c.bf16 %v2250, %v2249
        %v2264 = vpack.c.bf16 %v2252, %v2251
        %v2265 = vpack.c.bf16 %v2254, %v2253
        %v2266 = vpack.c.bf16 %v2256, %v2255
        %v2267 = vpack.c.bf16 %v2258, %v2257
        %v2268 = vpack.c.bf16 %v2260, %v2259
        %v2269 = vlaneseq
        %v2270 = vshrl.u32 %v2269, 7
        %v2271 = vadd.s32 %v2270, 8
        %v2272 = vadd.s32 %v2270, 16
        %v2273 = vadd.s32 %v2270, 24
        %v2274 = vld [vmem:[%s906] sm:$0x1]
        %v2275 = vperm.slane %v2274, 0
        %vm2276 = vcmp.eq.s32.totalorder %v2270, %v2275
        %vm2277 = vcmp.eq.s32.totalorder %v2271, %v2275
        %vm2278 = vcmp.eq.s32.totalorder %v2272, %v2275
        %vm2279 = vcmp.eq.s32.totalorder %v2273, %v2275
        %v2280 = vsel %vm2276, 1, 0
        %v2281 = vsel %vm2277, 1, 0
        %v2282 = vsel %vm2278, 1, 0
        %v2283 = vsel %vm2279, 1, 0
        %v2284 = vcvt.s32.f32 %v2280
        %v2285 = vcvt.s32.f32 %v2281
        %v2286 = vcvt.s32.f32 %v2282
        %v2287 = vcvt.s32.f32 %v2283
        %v2288 = vpack.c.bf16 %v2285, %v2284
        %v2289 = vpack.c.bf16 %v2287, %v2286
        %v2290 = vld [vmem:[#allocation4] sm:$0xff]
        %v2291 = vld [vmem:[#allocation4 + $0x8] sm:$0xff]
        %v2292 = vld [vmem:[#allocation4 + $0x10] sm:$0xff]
        %v2293 = vld [vmem:[#allocation4 + $0x18] sm:$0xff]
        %2294 = vmatpush.bf16.msra.mxu0 %v2268
        %2295 = vmatpush.bf16.msra.mxu0 %v2267
        %2296 = vmatpush.bf16.msra.mxu0 %v2266
        %2297 = vmatpush.bf16.msra.mxu0 %v2265
        %2298 = vmatpush.bf16.msra.mxu0 %v2264
        %2299 = vmatpush.bf16.msra.mxu0 %v2263
        %2300 = vmatpush.bf16.msra.mxu0 %v2262
        %2301 = vmatpush.bf16.msra.mxu0 %v2261
        %2302 = vmatmul.bf16.gmra.mxu0 %v2288
        %v2303 = vpop.f32.mrf.mxu0
        %v2304 = vadd.f32 0.0, %v2303
        %v2305 = vpop.f32.mrf.mxu0
        %v2306 = vadd.f32 0.0, %v2305
        %2307 = vmatmul.bf16.gmra.mxu0 %v2289
        %v2308 = vpop.f32.mrf.mxu0
        %v2309 = vadd.f32 0.0, %v2308
        %v2310 = vpop.f32.mrf.mxu0
        %v2311 = vadd.f32 0.0, %v2310
        %2312 = vdwg.mxu0
        %v2313 = vadd.f32 %v2290, %v2304
        %v2314 = vadd.f32 %v2291, %v2306
        %v2315 = vadd.f32 %v2292, %v2309
        %v2316 = vadd.f32 %v2293, %v2311
        %2317 = vst.msk [vmem:[#allocation4] sm:$0xff] %vm1724, %v2313
        %2318 = vst.msk [vmem:[#allocation4 + $0x8] sm:$0xff] %vm1724, %v2314
        %2319 = vst.msk [vmem:[#allocation4 + $0x10] sm:$0xff] %vm1724, %v2315
        %2320 = vst.msk [vmem:[#allocation4 + $0x18] sm:$0xff] %vm1724, %v2316
        %p2321 = scmp.eq.s32.totalorder %s40, 1
        // Predicated region
        $region121: #{tpu_custom_call.1} parent=111 // pred_check
          %p2322 = pneg %p2321
        $region122: #{tpu_custom_call.1} parent=111 // pred_check_branch
          %2324 = sbr.rel (%p2322) target = $region124
        $region123: #{tpu_custom_call.1} parent=111 // pred_region
          %v2325 = vld [vmem:[#allocation4] sm:$0xff]
          %v2326 = vld [vmem:[#allocation4 + $0x8] sm:$0xff]
          %v2327 = vld [vmem:[#allocation4 + $0x10] sm:$0xff]
          %v2328 = vld [vmem:[#allocation4 + $0x18] sm:$0xff]
          %v2329 = vld [vmem:[%s932] sm:$0xff]
          %v2330 = vld [vmem:[%s932 + $0x8] sm:$0xff]
          %v2331 = vld [vmem:[%s932 + $0x10] sm:$0xff]
          %v2332 = vld [vmem:[%s932 + $0x18] sm:$0xff]
          %v2333 = vld [vmem:[%s932 + $0x20] sm:$0xff]
          %v2334 = vld [vmem:[%s932 + $0x28] sm:$0xff]
          %v2335 = vld [vmem:[%s932 + $0x30] sm:$0xff]
          %v2336 = vld [vmem:[%s932 + $0x38] sm:$0xff]
          %v2337 = vld [vmem:[%s935] sm:$0x1]
          %v2339 = vperm.slane %v2337, 0
          %v2342 = vsel %vm1724, %v2325, 0
          %v2345 = vsel %vm1724, %v2326, 0
          %v2348 = vsel %vm1724, %v2327, 0
          %v2351 = vsel %vm1724, %v2328, 0
          %2353 = vmatpush.msra.mxu0 0.0
          %2354 = vmatpush.msra.mxu0 0.0
          %2355 = vmatpush.msra.mxu0 0.0
          %2356 = vmatpush.msra.mxu0 0.0
          %2357 = vmatpush.msra.mxu0 0.0
          %2358 = vmatpush.msra.mxu0 0.0
          %2359 = vmatpush.msra.mxu0 0.0
          %2360 = vmatpush.msra.mxu0 0.0
          %2361 = vmatpush.msra.mxu0 %v2336
          %2362 = vmatpush.msra.mxu0 %v2335
          %2363 = vmatpush.msra.mxu0 %v2334
          %2364 = vmatpush.msra.mxu0 %v2333
          %2365 = vmatpush.msra.mxu0 %v2332
          %2366 = vmatpush.msra.mxu0 %v2331
          %2367 = vmatpush.msra.mxu0 %v2330
          %2368 = vmatpush.msra.mxu0 %v2329
          %2369 = vmatmul.f32.gmra.mxu0 %v2342
          %v2370 = vpop.f32.mrf.mxu0
          %v2371 = vadd.f32 %v2339, %v2370
          %2372 = vmatmul.f32.gmra.mxu0 %v2345
          %v2373 = vpop.f32.mrf.mxu0
          %v2374 = vadd.f32 %v2339, %v2373
          %2375 = vmatmul.f32.gmra.mxu0 %v2348
          %v2376 = vpop.f32.mrf.mxu0
          %v2377 = vadd.f32 %v2339, %v2376
          %2378 = vmatmul.f32.gmra.mxu0 %v2351
          %v2379 = vpop.f32.mrf.mxu0
          %v2380 = vadd.f32 %v2339, %v2379
          %2381 = vdwg.mxu0
          %v2382 = vmax.f32 %v2371, 0.0
          %v2383 = vmax.f32 %v2374, 0.0
          %v2384 = vmax.f32 %v2377, 0.0
          %v2385 = vmax.f32 %v2380, 0.0
          %v2386 = vand.u32 2147483647, %v2371
          %v2387 = vand.u32 2147483647, %v2374
          %v2388 = vand.u32 2147483647, %v2377
          %v2389 = vand.u32 2147483647, %v2380
          %v2390 = vsub.f32 0.0, %v2386
          %v2391 = vsub.f32 0.0, %v2387
          %v2392 = vsub.f32 0.0, %v2388
          %v2393 = vsub.f32 0.0, %v2389
          %v2394 = vmul.f32 %v2390, 1.442695
          %v2395 = vpow.pop %v2394
          %v2396 = vmul.f32 %v2391, 1.442695
          %v2397 = vpow.pop %v2396
          %v2398 = vmul.f32 %v2392, 1.442695
          %v2399 = vpow.pop %v2398
          %v2400 = vmul.f32 %v2393, 1.442695
          %v2401 = vpow.pop %v2400
          %v2402 = vadd.f32 %v2395, 1.0
          %v2403 = vlog2.pop %v2402
          %v2404 = vmul.f32 %v2403, 0.6931472
          %v2405 = vmul.f32 -0.5, %v2395
          %v2406 = vadd.f32 %v2405, 1.0
          %v2407 = vmul.f32 %v2406, %v2395
          %v2408 = vand.u32 2147483647, %v2395
          %vm2409 = vcmp.lt.f32.partialorder %v2408, 0.0004427343
          %v2410 = vsel %vm2409, %v2407, %v2404
          %v2411 = vadd.f32 %v2397, 1.0
          %v2412 = vlog2.pop %v2411
          %v2413 = vmul.f32 %v2412, 0.6931472
          %v2414 = vmul.f32 -0.5, %v2397
          %v2415 = vadd.f32 %v2414, 1.0
          %v2416 = vmul.f32 %v2415, %v2397
          %v2417 = vand.u32 2147483647, %v2397
          %vm2418 = vcmp.lt.f32.partialorder %v2417, 0.0004427343
          %v2419 = vsel %vm2418, %v2416, %v2413
          %v2420 = vadd.f32 %v2399, 1.0
          %v2421 = vlog2.pop %v2420
          %v2422 = vmul.f32 %v2421, 0.6931472
          %v2423 = vmul.f32 -0.5, %v2399
          %v2424 = vadd.f32 %v2423, 1.0
          %v2425 = vmul.f32 %v2424, %v2399
          %v2426 = vand.u32 2147483647, %v2399
          %vm2427 = vcmp.lt.f32.partialorder %v2426, 0.0004427343
          %v2428 = vsel %vm2427, %v2425, %v2422
          %v2429 = vadd.f32 %v2401, 1.0
          %v2430 = vlog2.pop %v2429
          %v2431 = vmul.f32 %v2430, 0.6931472
          %v2432 = vmul.f32 -0.5, %v2401
          %v2433 = vadd.f32 %v2432, 1.0
          %v2434 = vmul.f32 %v2433, %v2401
          %v2435 = vand.u32 2147483647, %v2401
          %vm2436 = vcmp.lt.f32.partialorder %v2435, 0.0004427343
          %v2437 = vsel %vm2436, %v2434, %v2431
          %v2438 = vadd.f32 %v2382, %v2410
          %v2439 = vadd.f32 %v2383, %v2419
          %v2440 = vadd.f32 %v2384, %v2428
          %v2441 = vadd.f32 %v2385, %v2437
          %v2442 = vsub.f32 %v2438, 0.6931472
          %v2443 = vsub.f32 %v2439, 0.6931472
          %v2444 = vsub.f32 %v2440, 0.6931472
          %v2445 = vsub.f32 %v2441, 0.6931472
          %v2446 = vld [vmem:[%s940] sm:$0xff]
          %v2447 = vld [vmem:[%s940 + $0x8] sm:$0xff]
          %v2448 = vld [vmem:[%s940 + $0x10] sm:$0xff]
          %v2449 = vld [vmem:[%s940 + $0x18] sm:$0xff]
          %v2450 = vld [vmem:[%s940 + $0x20] sm:$0xff]
          %v2451 = vld [vmem:[%s940 + $0x28] sm:$0xff]
          %v2452 = vld [vmem:[%s940 + $0x30] sm:$0xff]
          %v2453 = vld [vmem:[%s940 + $0x38] sm:$0xff]
          %v2454 = vld [vmem:[%s943] sm:$0x1]
          %v2456 = vperm.slane %v2454, 0
          %v2459 = vsel %vm1724, %v2442, 0
          %v2462 = vsel %vm1724, %v2443, 0
          %v2465 = vsel %vm1724, %v2444, 0
          %v2468 = vsel %vm1724, %v2445, 0
          %2470 = vmatpush.msra.mxu0 0.0
          %2471 = vmatpush.msra.mxu0 0.0
          %2472 = vmatpush.msra.mxu0 0.0
          %2473 = vmatpush.msra.mxu0 0.0
          %2474 = vmatpush.msra.mxu0 0.0
          %2475 = vmatpush.msra.mxu0 0.0
          %2476 = vmatpush.msra.mxu0 0.0
          %2477 = vmatpush.msra.mxu0 0.0
          %2478 = vmatpush.msra.mxu0 %v2453
          %2479 = vmatpush.msra.mxu0 %v2452
          %2480 = vmatpush.msra.mxu0 %v2451
          %2481 = vmatpush.msra.mxu0 %v2450
          %2482 = vmatpush.msra.mxu0 %v2449
          %2483 = vmatpush.msra.mxu0 %v2448
          %2484 = vmatpush.msra.mxu0 %v2447
          %2485 = vmatpush.msra.mxu0 %v2446
          %2486 = vmatmul.f32.gmra.mxu0 %v2459
          %v2487 = vpop.f32.mrf.mxu0
          %v2488 = vadd.f32 %v2456, %v2487
          %2489 = vmatmul.f32.gmra.mxu0 %v2462
          %v2490 = vpop.f32.mrf.mxu0
          %v2491 = vadd.f32 %v2456, %v2490
          %2492 = vmatmul.f32.gmra.mxu0 %v2465
          %v2493 = vpop.f32.mrf.mxu0
          %v2494 = vadd.f32 %v2456, %v2493
          %2495 = vmatmul.f32.gmra.mxu0 %v2468
          %v2496 = vpop.f32.mrf.mxu0
          %v2497 = vadd.f32 %v2456, %v2496
          %2498 = vdwg.mxu0
          %v2499 = vld [vmem:[#allocation2] sm:$0xff]
          %v2500 = vld [vmem:[#allocation2 + $0x8] sm:$0xff]
          %v2501 = vld [vmem:[#allocation2 + $0x10] sm:$0xff]
          %v2502 = vld [vmem:[#allocation2 + $0x18] sm:$0xff]
          %v2503 = vld [vmem:[%s948] sm:$0xff]
          %v2504 = vld [vmem:[%s948 + $0x8] sm:$0xff]
          %v2505 = vld [vmem:[%s948 + $0x10] sm:$0xff]
          %v2506 = vld [vmem:[%s948 + $0x18] sm:$0xff]
          %v2507 = vld [vmem:[%s953] sm:$0xff]
          %v2508 = vld [vmem:[%s953 + $0x8] sm:$0xff]
          %v2509 = vld [vmem:[%s953 + $0x10] sm:$0xff]
          %v2510 = vld [vmem:[%s953 + $0x18] sm:$0xff]
          %v2511 = vld [vmem:[%s953 + $0x20] sm:$0xff]
          %v2512 = vld [vmem:[%s953 + $0x28] sm:$0xff]
          %v2513 = vld [vmem:[%s953 + $0x30] sm:$0xff]
          %v2514 = vld [vmem:[%s953 + $0x38] sm:$0xff]
          %v2516 = vsel %vm1724, %v2488, 0
          %v2519 = vsel %vm1724, %v2491, 0
          %v2522 = vsel %vm1724, %v2494, 0
          %v2525 = vsel %vm1724, %v2497, 0
          %2527 = vmatpush.msra.mxu0 0.0
          %2528 = vmatpush.msra.mxu0 0.0
          %2529 = vmatpush.msra.mxu0 0.0
          %2530 = vmatpush.msra.mxu0 0.0
          %2531 = vmatpush.msra.mxu0 0.0
          %2532 = vmatpush.msra.mxu0 0.0
          %2533 = vmatpush.msra.mxu0 0.0
          %2534 = vmatpush.msra.mxu0 0.0
          %2535 = vmatpush.msra.mxu0 %v2514
          %2536 = vmatpush.msra.mxu0 %v2513
          %2537 = vmatpush.msra.mxu0 %v2512
          %2538 = vmatpush.msra.mxu0 %v2511
          %2539 = vmatpush.msra.mxu0 %v2510
          %2540 = vmatpush.msra.mxu0 %v2509
          %2541 = vmatpush.msra.mxu0 %v2508
          %2542 = vmatpush.msra.mxu0 %v2507
          %2543 = vmatmul.f32.gmra.mxu0 %v2516
          %v2544 = vpop.f32.mrf.mxu0
          %v2545 = vadd.f32 0.0, %v2544
          %2546 = vmatmul.f32.gmra.mxu0 %v2519
          %v2547 = vpop.f32.mrf.mxu0
          %v2548 = vadd.f32 0.0, %v2547
          %2549 = vmatmul.f32.gmra.mxu0 %v2522
          %v2550 = vpop.f32.mrf.mxu0
          %v2551 = vadd.f32 0.0, %v2550
          %2552 = vmatmul.f32.gmra.mxu0 %v2525
          %v2553 = vpop.f32.mrf.mxu0
          %v2554 = vadd.f32 0.0, %v2553
          %2555 = vdwg.mxu0
          %v2557 = vsel %vm1342, %v2499, 0
          %v2560 = vsel %vm1342, %v2500, 0
          %v2563 = vsel %vm1342, %v2501, 0
          %v2566 = vsel %vm1342, %v2502, 0
          %2568 = vmatpush.msra.mxu0 0.0
          %2569 = vmatpush.msra.mxu0 0.0
          %2570 = vmatpush.msra.mxu0 0.0
          %2571 = vmatpush.msra.mxu0 0.0
          %2572 = vmatpush.msra.mxu0 0.0
          %2573 = vmatpush.msra.mxu0 0.0
          %2574 = vmatpush.msra.mxu0 0.0
          %2575 = vmatpush.msra.mxu0 0.0
          %2576 = vmatpush.msra.mxu0 0.0
          %2577 = vmatpush.msra.mxu0 0.0
          %2578 = vmatpush.msra.mxu0 0.0
          %2579 = vmatpush.msra.mxu0 0.0
          %2580 = vmatpush.msra.mxu0 %v2506
          %2581 = vmatpush.msra.mxu0 %v2505
          %2582 = vmatpush.msra.mxu0 %v2504
          %2583 = vmatpush.msra.mxu0 %v2503
          %2584 = vmatmul.f32.gmra.mxu0 %v2557
          %v2585 = vpop.f32.mrf.mxu0
          %v2586 = vadd.f32 %v2545, %v2585
          %2587 = vmatmul.f32.gmra.mxu0 %v2560
          %v2588 = vpop.f32.mrf.mxu0
          %v2589 = vadd.f32 %v2548, %v2588
          %2590 = vmatmul.f32.gmra.mxu0 %v2563
          %v2591 = vpop.f32.mrf.mxu0
          %v2592 = vadd.f32 %v2551, %v2591
          %2593 = vmatmul.f32.gmra.mxu0 %v2566
          %v2594 = vpop.f32.mrf.mxu0
          %v2595 = vadd.f32 %v2554, %v2594
          %2596 = vdwg.mxu0
          %v2597 = vld [vmem:[%s956] sm:$0x1]
          %v2599 = vperm.slane %v2597, 0
          %v2601 = vadd.f32 %v2586, %v2599
          %v2602 = vadd.f32 %v2589, %v2599
          %v2603 = vadd.f32 %v2592, %v2599
          %v2604 = vadd.f32 %v2595, %v2599
          %v2605 = vmax.f32 %v2601, 0.0
          %v2606 = vmax.f32 %v2602, 0.0
          %v2607 = vmax.f32 %v2603, 0.0
          %v2608 = vmax.f32 %v2604, 0.0
          %2609 = vst.msk [vmem:[#allocation2] sm:$0xff] %vm1342, %v2605
          %2610 = vst.msk [vmem:[#allocation2 + $0x8] sm:$0xff] %vm1342, %v2606
          %2611 = vst.msk [vmem:[#allocation2 + $0x10] sm:$0xff] %vm1342, %v2607
          %2612 = vst.msk [vmem:[#allocation2 + $0x18] sm:$0xff] %vm1342, %v2608
          %p2613 = scmp.eq.s32.totalorder %s39, 1
          // Predicated region
          $region125: #{tpu_custom_call.1} parent=123 // pred_check
            %p2614 = pneg %p2613
          $region126: #{tpu_custom_call.1} parent=123 // pred_check_branch
            %2616 = sbr.rel (%p2614) target = $region128
          $region127: #{tpu_custom_call.1} parent=123 // pred_region
            %v2617 = vld [vmem:[%s19] sm:$0xff]
            %v2618 = vld [vmem:[%s19 + $0x8] sm:$0xff]
            %v2619 = vld [vmem:[%s19 + $0x10] sm:$0xff]
            %v2620 = vld [vmem:[%s19 + $0x18] sm:$0xff]
            %v2621 = vld [vmem:[%s20] sm:$0x1]
            %v2623 = vperm.slane %v2621, 0
            %v2626 = vsel %vm1342, %v2605, 0
            %v2629 = vsel %vm1342, %v2606, 0
            %v2632 = vsel %vm1342, %v2607, 0
            %v2635 = vsel %vm1342, %v2608, 0
            %2637 = vmatpush.msra.mxu0 0.0
            %2638 = vmatpush.msra.mxu0 0.0
            %2639 = vmatpush.msra.mxu0 0.0
            %2640 = vmatpush.msra.mxu0 0.0
            %2641 = vmatpush.msra.mxu0 0.0
            %2642 = vmatpush.msra.mxu0 0.0
            %2643 = vmatpush.msra.mxu0 0.0
            %2644 = vmatpush.msra.mxu0 0.0
            %2645 = vmatpush.msra.mxu0 0.0
            %2646 = vmatpush.msra.mxu0 0.0
            %2647 = vmatpush.msra.mxu0 0.0
            %2648 = vmatpush.msra.mxu0 0.0
            %2649 = vmatpush.msra.mxu0 %v2620
            %2650 = vmatpush.msra.mxu0 %v2619
            %2651 = vmatpush.msra.mxu0 %v2618
            %2652 = vmatpush.msra.mxu0 %v2617
            %2653 = vmatmul.f32.gmra.mxu0 %v2626
            %v2654 = vpop.f32.mrf.mxu0
            %v2655 = vadd.f32 %v2623, %v2654
            %2656 = vmatmul.f32.gmra.mxu0 %v2629
            %v2657 = vpop.f32.mrf.mxu0
            %v2658 = vadd.f32 %v2623, %v2657
            %2659 = vmatmul.f32.gmra.mxu0 %v2632
            %v2660 = vpop.f32.mrf.mxu0
            %v2661 = vadd.f32 %v2623, %v2660
            %2662 = vmatmul.f32.gmra.mxu0 %v2635
            %v2663 = vpop.f32.mrf.mxu0
            %v2664 = vadd.f32 %v2623, %v2663
            %2665 = vdwg.mxu0
            %v2666 = vmax.f32 %v2655, 0.0
            %v2667 = vmax.f32 %v2658, 0.0
            %v2668 = vmax.f32 %v2661, 0.0
            %v2669 = vmax.f32 %v2664, 0.0
            %v2670 = vand.u32 2147483647, %v2655
            %v2671 = vand.u32 2147483647, %v2658
            %v2672 = vand.u32 2147483647, %v2661
            %v2673 = vand.u32 2147483647, %v2664
            %v2674 = vsub.f32 0.0, %v2670
            %v2675 = vsub.f32 0.0, %v2671
            %v2676 = vsub.f32 0.0, %v2672
            %v2677 = vsub.f32 0.0, %v2673
            %v2678 = vmul.f32 %v2674, 1.442695
            %v2679 = vpow.pop %v2678
            %v2680 = vmul.f32 %v2675, 1.442695
            %v2681 = vpow.pop %v2680
            %v2682 = vmul.f32 %v2676, 1.442695
            %v2683 = vpow.pop %v2682
            %v2684 = vmul.f32 %v2677, 1.442695
            %v2685 = vpow.pop %v2684
            %v2686 = vadd.f32 %v2679, 1.0
            %v2687 = vlog2.pop %v2686
            %v2688 = vmul.f32 %v2687, 0.6931472
            %v2689 = vmul.f32 -0.5, %v2679
            %v2690 = vadd.f32 %v2689, 1.0
            %v2691 = vmul.f32 %v2690, %v2679
            %v2692 = vand.u32 2147483647, %v2679
            %vm2693 = vcmp.lt.f32.partialorder %v2692, 0.0004427343
            %v2694 = vsel %vm2693, %v2691, %v2688
            %v2695 = vadd.f32 %v2681, 1.0
            %v2696 = vlog2.pop %v2695
            %v2697 = vmul.f32 %v2696, 0.6931472
            %v2698 = vmul.f32 -0.5, %v2681
            %v2699 = vadd.f32 %v2698, 1.0
            %v2700 = vmul.f32 %v2699, %v2681
            %v2701 = vand.u32 2147483647, %v2681
            %vm2702 = vcmp.lt.f32.partialorder %v2701, 0.0004427343
            %v2703 = vsel %vm2702, %v2700, %v2697
            %v2704 = vadd.f32 %v2683, 1.0
            %v2705 = vlog2.pop %v2704
            %v2706 = vmul.f32 %v2705, 0.6931472
            %v2707 = vmul.f32 -0.5, %v2683
            %v2708 = vadd.f32 %v2707, 1.0
            %v2709 = vmul.f32 %v2708, %v2683
            %v2710 = vand.u32 2147483647, %v2683
            %vm2711 = vcmp.lt.f32.partialorder %v2710, 0.0004427343
            %v2712 = vsel %vm2711, %v2709, %v2706
            %v2713 = vadd.f32 %v2685, 1.0
            %v2714 = vlog2.pop %v2713
            %v2715 = vmul.f32 %v2714, 0.6931472
            %v2716 = vmul.f32 -0.5, %v2685
            %v2717 = vadd.f32 %v2716, 1.0
            %v2718 = vmul.f32 %v2717, %v2685
            %v2719 = vand.u32 2147483647, %v2685
            %vm2720 = vcmp.lt.f32.partialorder %v2719, 0.0004427343
            %v2721 = vsel %vm2720, %v2718, %v2715
            %v2722 = vadd.f32 %v2666, %v2694
            %v2723 = vadd.f32 %v2667, %v2703
            %v2724 = vadd.f32 %v2668, %v2712
            %v2725 = vadd.f32 %v2669, %v2721
            %v2726 = vsub.f32 %v2722, 0.6931472
            %v2727 = vsub.f32 %v2723, 0.6931472
            %v2728 = vsub.f32 %v2724, 0.6931472
            %v2729 = vsub.f32 %v2725, 0.6931472
            %v2730 = vld [vmem:[%s21] sm:$0xff]
            %v2731 = vld [vmem:[%s21 + $0x8] sm:$0xff]
            %v2732 = vld [vmem:[%s22] sm:$0x1]
            %v2734 = vperm.slane %v2732, 0
            %vm2736 = vcmask 130048
            %v2738 = vsel %vm2736, %v2726, 0
            %v2741 = vsel %vm2736, %v2727, 0
            %v2744 = vsel %vm2736, %v2728, 0
            %v2747 = vsel %vm2736, %v2729, 0
            %2749 = vmatpush.msra.mxu0 0.0
            %2750 = vmatpush.msra.mxu0 0.0
            %2751 = vmatpush.msra.mxu0 0.0
            %2752 = vmatpush.msra.mxu0 0.0
            %2753 = vmatpush.msra.mxu0 0.0
            %2754 = vmatpush.msra.mxu0 0.0
            %2755 = vmatpush.msra.mxu0 0.0
            %2756 = vmatpush.msra.mxu0 0.0
            %2757 = vmatpush.msra.mxu0 0.0
            %2758 = vmatpush.msra.mxu0 0.0
            %2759 = vmatpush.msra.mxu0 0.0
            %2760 = vmatpush.msra.mxu0 0.0
            %2761 = vmatpush.msra.mxu0 0.0
            %2762 = vmatpush.msra.mxu0 0.0
            %2763 = vmatpush.msra.mxu0 %v2731
            %2764 = vmatpush.msra.mxu0 %v2730
            %2765 = vmatmul.f32.gmra.mxu0 %v2738
            %v2766 = vpop.f32.mrf.mxu0
            %v2767 = vadd.f32 %v2734, %v2766
            %2768 = vmatmul.f32.gmra.mxu0 %v2741
            %v2769 = vpop.f32.mrf.mxu0
            %v2770 = vadd.f32 %v2734, %v2769
            %2771 = vmatmul.f32.gmra.mxu0 %v2744
            %v2772 = vpop.f32.mrf.mxu0
            %v2773 = vadd.f32 %v2734, %v2772
            %2774 = vmatmul.f32.gmra.mxu0 %v2747
            %v2775 = vpop.f32.mrf.mxu0
            %v2776 = vadd.f32 %v2734, %v2775
            %2777 = vdwg.mxu0
            %v2778 = vld [vmem:[%s5] sm:$0x7]
            %v2780 = vsel %vm1342, %v2778, 0
            %2782 = vmatpush.msra.mxu0 0.0
            %2783 = vmatpush.msra.mxu0 0.0
            %2784 = vmatpush.msra.mxu0 0.0
            %2785 = vmatpush.msra.mxu0 0.0
            %2786 = vmatpush.msra.mxu0 0.0
            %2787 = vmatpush.msra.mxu0 0.0
            %2788 = vmatpush.msra.mxu0 0.0
            %2789 = vmatpush.msra.mxu0 0.0
            %2790 = vmatpush.msra.mxu0 0.0
            %2791 = vmatpush.msra.mxu0 0.0
            %2792 = vmatpush.msra.mxu0 0.0
            %2793 = vmatpush.msra.mxu0 0.0
            %2794 = vmatpush.msra.mxu0 %v2776
            %2795 = vmatpush.msra.mxu0 %v2773
            %2796 = vmatpush.msra.mxu0 %v2770
            %2797 = vmatpush.msra.mxu0 %v2767
            %2798 = vmatmul.f32.gmra.mxu0 %v2780
            %v2799 = vpop.f32.mrf.mxu0
            %v2800 = vadd.f32 0.0, %v2799
            %2801 = vdwg.mxu0
            %vm2802 = vcmask 59392
            %2803 = vst.msk [vmem:[#allocation5] sm:$0x7] %vm2802, %v2800
          $region128: #{tpu_custom_call.1} parent=123 // pred_fallthru
            _
        $region124: #{tpu_custom_call.1} parent=111 // pred_fallthru
          _
        // Predicated region
        $region129: #{tpu_custom_call.1} parent=111 // pred_check
          %p2804 = pneg %p618
        $region130: #{tpu_custom_call.1} parent=111 // pred_check_branch
          %2806 = sbr.rel (%p2804) target = $region132
        $region131: #{tpu_custom_call.1} parent=111 // pred_region
          %2808 = vsyncadd [#allocation6], 0
          %s2810 = sshll.u32 [#allocation5], 4
          %s2811 = int_to_ptr.vmem [resolvable:$true] %s2810
          %s2812 = sshll.u32 %s23, 4
          %s2813 = int_to_ptr.hbm [resolvable:$true] %s2812
          %2815 = dma.vmem_to_hbm [thread:$0]  %s2811, 64, %s2813, [#allocation6]
        $region132: #{tpu_custom_call.1} parent=111 // pred_fallthru
          _
        // Predicated region
        $region133: #{tpu_custom_call.1} parent=111 // pred_check
          %p2816 = pneg %p618
        $region134: #{tpu_custom_call.1} parent=111 // pred_check_branch
          %2818 = sbr.rel (%p2816) target = $region136
        $region135: #{tpu_custom_call.1} parent=111 // pred_region
          %2820 = dma.done [#allocation6], 64
        $region136: #{tpu_custom_call.1} parent=111 // pred_fallthru
          _
      $region112: #{tpu_custom_call.1} parent=5 // pred_fallthru
        _
      %p2821 = scmp.le.s32.totalorder 2, %s30
      // Predicated region
      $region137: #{tpu_custom_call.1} parent=5 // pred_check
        %p2822 = pneg %p2821
      $region138: #{tpu_custom_call.1} parent=5 // pred_check_branch
        %2824 = sbr.rel (%p2822) target = $region140
      $region139: #{tpu_custom_call.1} parent=5 // pred_region
        %s2825 = ssub.s32 %s30, 2
      $region140: #{tpu_custom_call.1} parent=5 // pred_fallthru
        _
    $region6: #{tpu_custom_call.1} parent=1 // loop_footer
      %s34 = sadd.s32 1, %s30
    $region7: #{tpu_custom_call.1} parent=1 // loop_footer_branch
      %29 = sbr.rel target = $region3
    $region8: #{tpu_custom_call.1} parent=1 // loop_exit
      _
    %2826 = vsyncpa [#allocation6], 1
    %s2827 = scalar_lea.sflag [#allocation6], 1
    %2828 = vsyncpa %s2827, 1

</llo_original>
